<compile_context>
chip_gen: v7x
topology: tpu7x:2x2x1
jax: 0.10.0
libtpu: 0.0.40
codegen_flags: <defaults>
</compile_context>

<pallas_src>
import jax
import jax.numpy as jnp
from jax.experimental import pallas as pl
from jax.experimental.pallas import tpu as pltpu


_FEAT = 1024   # backbone feature width 1000, padded to a lane multiple
_HID = 128     # hidden width 100, padded to a lane multiple
_OUT = 128     # output width 5, padded to a lane multiple


def _round_up(n, m):
    return (n + m - 1) // m * m


def _reward_kernel(x_ref, wb_ref, bb_ref, w1_ref, b1_ref, w2_ref, b2_ref, o_ref):
    """One batch tile:
         (GAP-folded) Linear(C*HW, 1000) -> Linear(1000, 100) -> ReLU
         -> Linear(100, 5) -> Sigmoid,   all widths padded to lane multiples.

    x_ref : (TILE_B, K_pad)  bf16   flattened C*H*W (GAP folded into wb)
    wb_ref: (K_pad, 1024)    bf16   bb_ref: (1, 1024) f32
    w1_ref: (1024, 128)      bf16   b1_ref: (1, 128)  f32
    w2_ref: (128, 128)       bf16   b2_ref: (1, 128)  f32
    o_ref : (TILE_B, 128)    f32    (columns 5: are padding)
    """
    # Stand-in backbone: GAP + Linear(C, 1000), fused into one MXU matmul.
    feats = jnp.dot(x_ref[...], wb_ref[...],
                    preferred_element_type=jnp.float32) + bb_ref[...]

    # Linear(1000 -> 100) + ReLU (padded to 128 lanes; padded columns stay 0).
    h = jnp.dot(feats.astype(jnp.bfloat16), w1_ref[...],
                preferred_element_type=jnp.float32) + b1_ref[...]
    h = jnp.maximum(h, 0.0)

    # Linear(100 -> 5) (padded to 128 lanes).
    logits = jnp.dot(h.astype(jnp.bfloat16), w2_ref[...],
                     preferred_element_type=jnp.float32) + b2_ref[...]

    # Numerically-stable sigmoid; reciprocal goes to the EUP (approx=True).
    z = jnp.exp(-jnp.abs(logits))
    sig_abs = pl.reciprocal(1.0 + z, approx=True)           # sigmoid(|logits|)
    o_ref[...] = jnp.where(logits >= 0.0, sig_abs, 1.0 - sig_abs)


def _prepare_padded_params(params, C, HW):
    """Fold the GAP into the backbone weight, pad to lane multiples, cast bf16."""
    K = C * HW
    K_pad = _round_up(K, 128)

    wb, bb, w1, b1, w2, b2 = (params[k] for k in ("wb", "bb", "w1", "b1", "w2", "b2"))

    # GAP fold: row (c*HW + s) of the expanded weight is wb[c, :] / HW, so
    #   x_flat @ wb_expanded == mean_spatial(x) @ wb   (everything on the MXU).
    wb_x = jnp.broadcast_to(wb[:, None, :] / HW, (C, HW, wb.shape[1])).reshape(K, -1)

    wb_p = jnp.zeros((K_pad, _FEAT), jnp.float32).at[:K, :1000].set(wb_x)
    bb_p = jnp.zeros((1, _FEAT), jnp.float32).at[0, :1000].set(bb)
    w1_p = jnp.zeros((_FEAT, _HID), jnp.float32).at[:1000, :100].set(w1)
    b1_p = jnp.zeros((1, _HID), jnp.float32).at[0, :100].set(b1)
    w2_p = jnp.zeros((_HID, _OUT), jnp.float32).at[:100, :5].set(w2)
    b2_p = jnp.zeros((1, _OUT), jnp.float32).at[0, :5].set(b2)

    return (wb_p.astype(jnp.bfloat16), bb_p,
            w1_p.astype(jnp.bfloat16), b1_p,
            w2_p.astype(jnp.bfloat16), b2_p)


@jax.jit
def my_resnext50_forward(x, params):
    """x: (B, C, H, W) float32 (NCHW, as in PyTorch).  Returns (B, 5) float32."""
    B, C, H, W = x.shape
    HW = H * W
    K = C * HW
    K_pad = _round_up(K, 128)

    # Batch tiling: stream x in TILE_B-row tiles while weights stay resident.
    if _round_up(B, 8) >= 128:
        tile_b = 128                       # fills the MXU M dim on real batches
        b_pad = _round_up(B, tile_b)
    else:
        tile_b = _round_up(B, 8)           # small-batch path (sublane aligned)
        b_pad = tile_b

    x2 = x.reshape(B, K).astype(jnp.bfloat16)
    x2 = jnp.zeros((b_pad, K_pad), jnp.bfloat16).at[:B, :K].set(x2)

    wb_p, bb_p, w1_p, b1_p, w2_p, b2_p = _prepare_padded_params(params, C, HW)

    const = lambda i: (0, 0)               # resident weight / bias blocks
    out_padded = pl.pallas_call(
        _reward_kernel,
        out_shape=jax.ShapeDtypeStruct((b_pad, _OUT), jnp.float32),
        grid=(b_pad // tile_b,),
        in_specs=[
            pl.BlockSpec((tile_b, K_pad), lambda i: (i, 0)),   # x: streamed per tile
            pl.BlockSpec((K_pad, _FEAT), const),               # backbone weight
            pl.BlockSpec((1, _FEAT), const),
            pl.BlockSpec((_FEAT, _HID), const),                # fc1
            pl.BlockSpec((1, _HID), const),
            pl.BlockSpec((_HID, _OUT), const),                 # fc2
            pl.BlockSpec((1, _OUT), const),
        ],
        out_specs=pl.BlockSpec((tile_b, _OUT), lambda i: (i, 0)),
        compiler_params=pltpu.CompilerParams(
            dimension_semantics=("parallel",)),
    )(x2, wb_p, bb_p, w1_p, b1_p, w2_p, b2_p)

    return out_padded[:B, :5]


def init_params(key, in_channels):
    """Deterministic parameter init matching the module's layer shapes."""
    k0, k1, k2 = jax.random.split(key, 3)
    scale = 0.02
    return {
        # Stand-in backbone projection: (C -> 1000)
        "wb": scale * jax.random.normal(k0, (in_channels, 1000), jnp.float32),
        "bb": jnp.zeros((1000,), jnp.float32),
        # nn.Linear(1000, 100)
        "w1": scale * jax.random.normal(k1, (1000, 100), jnp.float32),
        "b1": jnp.zeros((100,), jnp.float32),
        # nn.Linear(100, 5)
        "w2": scale * jax.random.normal(k2, (100, 5), jnp.float32),
        "b2": jnp.zeros((5,), jnp.float32),
    }


if __name__ == "__main__":
    key = jax.random.PRNGKey(0)
    k_x, k_p = jax.random.split(key)

    B, C, H, W = 2, 4, 16, 16           # small NCHW input
    x = jax.random.normal(k_x, (B, C, H, W), jnp.float32)
    params = init_params(k_p, C)

    out = my_resnext50_forward(x, params)
    out = jax.block_until_ready(out)

    assert out.shape == (B, 5)
    assert out.dtype == jnp.float32
    # Sigmoid output must lie in (0, 1).
    assert bool(jnp.all((out > 0.0) & (out < 1.0)))

    # Pure-JAX f32 reference of the same stand-in backbone + head.
    feat = jnp.mean(x.reshape(B, C, H * W), axis=-1)
    backbone = feat @ params["wb"] + params["bb"]
    h_ref = jnp.maximum(backbone @ params["w1"] + params["b1"], 0.0)
    ref = jax.nn.sigmoid(h_ref @ params["w2"] + params["b2"])
    assert bool(jnp.allclose(out, ref, atol=5e-2)), (out, ref)

    print("KERNEL_OK")
</pallas_src>

<mosaic_0001>
module attributes {stable_mosaic.version = 11 : i64} {
  func.func @_reward_kernel(%arg0: i32, %arg1: memref<8x1024xbf16, #tpu.memory_space<vmem>>, %arg2: memref<1024x1024xbf16, #tpu.memory_space<vmem>>, %arg3: memref<1x1024xf32, #tpu.memory_space<vmem>>, %arg4: memref<1024x128xbf16, #tpu.memory_space<vmem>>, %arg5: memref<1x128xf32, #tpu.memory_space<vmem>>, %arg6: memref<128x128xbf16, #tpu.memory_space<vmem>>, %arg7: memref<1x128xf32, #tpu.memory_space<vmem>>, %arg8: memref<8x128xf32, #tpu.memory_space<vmem>>) attributes {dimension_semantics = [#tpu.dimension_semantics<parallel>], iteration_bounds = array<i64: 1>, scalar_prefetch = 0 : i64, scratch_operands = 0 : i64, tpu.core_type = #tpu.core_type<tc>, window_params = [{transform_indices = @transform_0, window_bounds = array<i64: 8, 1024>}, {pipeline_mode = #tpu.pipeline_mode<synchronous>, transform_indices = @transform_1, window_bounds = array<i64: 1024, 1024>}, {pipeline_mode = #tpu.pipeline_mode<synchronous>, transform_indices = @transform_2, window_bounds = array<i64: 1, 1024>}, {pipeline_mode = #tpu.pipeline_mode<synchronous>, transform_indices = @transform_3, window_bounds = array<i64: 1024, 128>}, {pipeline_mode = #tpu.pipeline_mode<synchronous>, transform_indices = @transform_4, window_bounds = array<i64: 1, 128>}, {pipeline_mode = #tpu.pipeline_mode<synchronous>, transform_indices = @transform_5, window_bounds = array<i64: 128, 128>}, {pipeline_mode = #tpu.pipeline_mode<synchronous>, transform_indices = @transform_6, window_bounds = array<i64: 1, 128>}, {transform_indices = @transform_7, window_bounds = array<i64: 8, 128>}]} {
    %c0 = arith.constant 0 : index
    %c0_0 = arith.constant 0 : index
    %0 = vector.load %arg1[%c0, %c0_0] : memref<8x1024xbf16, #tpu.memory_space<vmem>>, vector<8x1024xbf16>
    %c0_1 = arith.constant 0 : index
    %c0_2 = arith.constant 0 : index
    %1 = vector.load %arg2[%c0_1, %c0_2] : memref<1024x1024xbf16, #tpu.memory_space<vmem>>, vector<1024x1024xbf16>
    %cst = arith.constant dense<0.000000e+00> : vector<8x1024xf32>
    %2 = tpu.matmul %0, %1, %cst {dimension_numbers = #tpu.dot_dimension_numbers<[1], [0], [0], [1], [0, 0, 1, 1], [], []>} : vector<8x1024xbf16>, vector<1024x1024xbf16>, vector<8x1024xf32> -> vector<8x1024xf32>
    %c0_3 = arith.constant 0 : index
    %c0_4 = arith.constant 0 : index
    %3 = vector.load %arg3[%c0_3, %c0_4] : memref<1x1024xf32, #tpu.memory_space<vmem>>, vector<1x1024xf32>
    %4 = vector.broadcast %3 : vector<1x1024xf32> to vector<8x1024xf32>
    %5 = arith.addf %2, %4 : vector<8x1024xf32>
    %6 = arith.truncf %5 : vector<8x1024xf32> to vector<8x1024xbf16>
    %c0_5 = arith.constant 0 : index
    %c0_6 = arith.constant 0 : index
    %7 = vector.load %arg4[%c0_5, %c0_6] : memref<1024x128xbf16, #tpu.memory_space<vmem>>, vector<1024x128xbf16>
    %cst_7 = arith.constant dense<0.000000e+00> : vector<8x128xf32>
    %8 = tpu.matmul %6, %7, %cst_7 {dimension_numbers = #tpu.dot_dimension_numbers<[1], [0], [0], [1], [0, 0, 1, 1], [], []>} : vector<8x1024xbf16>, vector<1024x128xbf16>, vector<8x128xf32> -> vector<8x128xf32>
    %c0_8 = arith.constant 0 : index
    %c0_9 = arith.constant 0 : index
    %9 = vector.load %arg5[%c0_8, %c0_9] : memref<1x128xf32, #tpu.memory_space<vmem>>, vector<1x128xf32>
    %10 = vector.broadcast %9 : vector<1x128xf32> to vector<8x128xf32>
    %11 = arith.addf %8, %10 : vector<8x128xf32>
    %cst_10 = arith.constant 0.000000e+00 : f32
    %12 = vector.broadcast %cst_10 : f32 to vector<8x128xf32>
    %13 = arith.maximumf %11, %12 : vector<8x128xf32>
    %14 = arith.truncf %13 : vector<8x128xf32> to vector<8x128xbf16>
    %c0_11 = arith.constant 0 : index
    %c0_12 = arith.constant 0 : index
    %15 = vector.load %arg6[%c0_11, %c0_12] : memref<128x128xbf16, #tpu.memory_space<vmem>>, vector<128x128xbf16>
    %cst_13 = arith.constant dense<0.000000e+00> : vector<8x128xf32>
    %16 = tpu.matmul %14, %15, %cst_13 {dimension_numbers = #tpu.dot_dimension_numbers<[1], [0], [0], [1], [0, 0, 1, 1], [], []>} : vector<8x128xbf16>, vector<128x128xbf16>, vector<8x128xf32> -> vector<8x128xf32>
    %c0_14 = arith.constant 0 : index
    %c0_15 = arith.constant 0 : index
    %17 = vector.load %arg7[%c0_14, %c0_15] : memref<1x128xf32, #tpu.memory_space<vmem>>, vector<1x128xf32>
    %18 = vector.broadcast %17 : vector<1x128xf32> to vector<8x128xf32>
    %19 = arith.addf %16, %18 : vector<8x128xf32>
    %20 = math.absf %19 : vector<8x128xf32>
    %cst_16 = arith.constant 0.000000e+00 : f32
    %21 = vector.broadcast %cst_16 : f32 to vector<8x128xf32>
    %22 = arith.subf %21, %20 : vector<8x128xf32>
    %23 = math.exp %22 : vector<8x128xf32>
    %cst_17 = arith.constant 1.000000e+00 : f32
    %24 = vector.broadcast %cst_17 : f32 to vector<8x128xf32>
    %25 = arith.addf %24, %23 : vector<8x128xf32>
    %26 = tpu.reciprocal %25 {approx = true} : vector<8x128xf32> -> vector<8x128xf32>
    %cst_18 = arith.constant 0.000000e+00 : f32
    %27 = vector.broadcast %cst_18 : f32 to vector<8x128xf32>
    %28 = arith.cmpf oge, %19, %27 : vector<8x128xf32>
    %cst_19 = arith.constant 1.000000e+00 : f32
    %29 = vector.broadcast %cst_19 : f32 to vector<8x128xf32>
    %30 = arith.subf %29, %26 : vector<8x128xf32>
    %31 = arith.select %28, %26, %30 : vector<8x128xi1>, vector<8x128xf32>
    %c0_20 = arith.constant 0 : index
    %c0_21 = arith.constant 0 : index
    %32 = vector.load %arg8[%c0_20, %c0_21] : memref<8x128xf32, #tpu.memory_space<vmem>>, vector<8x128xf32>
    tpu.vector_store %arg8[%c0_20, %c0_21], %31 {strides = array<i32>} : memref<8x128xf32, #tpu.memory_space<vmem>>, vector<8x128xf32>,
    return
  }
  func.func @transform_0(%arg0: i32) -> (i32, i32) {
    %c0_i32 = arith.constant 0 : i32
    %c0_i32_0 = arith.constant 0 : i32
    return %arg0, %c0_i32 : i32, i32
  }
  func.func @transform_1(%arg0: i32) -> (i32, i32) {
    %c0_i32 = arith.constant 0 : i32
    %c0_i32_0 = arith.constant 0 : i32
    %c0_i32_1 = arith.constant 0 : i32
    return %c0_i32, %c0_i32_0 : i32, i32
  }
  func.func @transform_2(%arg0: i32) -> (i32, i32) {
    %c0_i32 = arith.constant 0 : i32
    %c0_i32_0 = arith.constant 0 : i32
    %c0_i32_1 = arith.constant 0 : i32
    return %c0_i32, %c0_i32_0 : i32, i32
  }
  func.func @transform_3(%arg0: i32) -> (i32, i32) {
    %c0_i32 = arith.constant 0 : i32
    %c0_i32_0 = arith.constant 0 : i32
    %c0_i32_1 = arith.constant 0 : i32
    return %c0_i32, %c0_i32_0 : i32, i32
  }
  func.func @transform_4(%arg0: i32) -> (i32, i32) {
    %c0_i32 = arith.constant 0 : i32
    %c0_i32_0 = arith.constant 0 : i32
    %c0_i32_1 = arith.constant 0 : i32
    return %c0_i32, %c0_i32_0 : i32, i32
  }
  func.func @transform_5(%arg0: i32) -> (i32, i32) {
    %c0_i32 = arith.constant 0 : i32
    %c0_i32_0 = arith.constant 0 : i32
    %c0_i32_1 = arith.constant 0 : i32
    return %c0_i32, %c0_i32_0 : i32, i32
  }
  func.func @transform_6(%arg0: i32) -> (i32, i32) {
    %c0_i32 = arith.constant 0 : i32
    %c0_i32_0 = arith.constant 0 : i32
    %c0_i32_1 = arith.constant 0 : i32
    return %c0_i32, %c0_i32_0 : i32, i32
  }
  func.func @transform_7(%arg0: i32) -> (i32, i32) {
    %c0_i32 = arith.constant 0 : i32
    %c0_i32_0 = arith.constant 0 : i32
    return %arg0, %c0_i32 : i32, i32
  }
}

</mosaic_0001>

<llo_original>
// kernel: my_resnext50_forward.1
$region0: #{my_resnext50_forward.1}
  #allocation0 [shape = 'u32[]', space=smem, size = 0x4, offset = 0x4, fixed_abs, tag = 'smem constant byte address 0x4 - core index']
  #allocation1 [shape = 'u32[144,128]{1,0:T(1,128)}', space=vmem, size = 0x12000, scoped, tag = 'internal scratch']
  %s0 = inlined_call_operand.vmem [shape: bf16[8,1024], index: 0, kind: input, shape index: {}]
  %s1 = inlined_call_operand.vmem [shape: bf16[1024,1024], index: 1, kind: input, shape index: {}]
  %s2 = inlined_call_operand.vmem [shape: f32[1,1024], index: 2, kind: input, shape index: {}]
  %s3 = inlined_call_operand.vmem [shape: bf16[1024,128], index: 3, kind: input, shape index: {}]
  %s4 = inlined_call_operand.vmem [shape: f32[1,128], index: 4, kind: input, shape index: {}]
  %s5 = inlined_call_operand.vmem [shape: bf16[128,128], index: 5, kind: input, shape index: {}]
  %s6 = inlined_call_operand.vmem [shape: f32[1,128], index: 6, kind: input, shape index: {}]
  %s7 = inlined_call_operand.vmem [shape: f32[8,128], index: 7, kind: output, shape index: {}]
  %s8 = sld [smem:[#allocation0]]
  $region38: #{my_resnext50_forward.1} parent=0
    _
  %s10 = ssub.s32 1, %s8
  %s11 = scalar_select 0, %s10, %s8
  // Predicated region
  $region2: #{my_resnext50_forward.1} parent=0 // pred_check
    _
  $region3: #{my_resnext50_forward.1} parent=0 // pred_check_branch
    %13 = sbr.rel (0) target = $region5
  $region4: #{my_resnext50_forward.1} parent=0 // pred_region
    _
  $region5: #{my_resnext50_forward.1} parent=0 // pred_fallthru
    _
  // Predicated region
  $region6: #{my_resnext50_forward.1} parent=0 // pred_check
    _
  $region7: #{my_resnext50_forward.1} parent=0 // pred_check_branch
    %15 = sbr.rel (0) target = $region9
  $region8: #{my_resnext50_forward.1} parent=0 // pred_region
    _
  $region9: #{my_resnext50_forward.1} parent=0 // pred_fallthru
    _
  // Predicated region
  $region10: #{my_resnext50_forward.1} parent=0 // pred_check
    _
  $region11: #{my_resnext50_forward.1} parent=0 // pred_check_branch
    %17 = sbr.rel (0) target = $region13
  $region12: #{my_resnext50_forward.1} parent=0 // pred_region
    _
  $region13: #{my_resnext50_forward.1} parent=0 // pred_fallthru
    _
  // Predicated region
  $region14: #{my_resnext50_forward.1} parent=0 // pred_check
    _
  $region15: #{my_resnext50_forward.1} parent=0 // pred_check_branch
    %19 = sbr.rel (0) target = $region17
  $region16: #{my_resnext50_forward.1} parent=0 // pred_region
    _
  $region17: #{my_resnext50_forward.1} parent=0 // pred_fallthru
    _
  // Predicated region
  $region18: #{my_resnext50_forward.1} parent=0 // pred_check
    _
  $region19: #{my_resnext50_forward.1} parent=0 // pred_check_branch
    %21 = sbr.rel (0) target = $region21
  $region20: #{my_resnext50_forward.1} parent=0 // pred_region
    _
  $region21: #{my_resnext50_forward.1} parent=0 // pred_fallthru
    _
  // Predicated region
  $region22: #{my_resnext50_forward.1} parent=0 // pred_check
    _
  $region23: #{my_resnext50_forward.1} parent=0 // pred_check_branch
    %23 = sbr.rel (0) target = $region25
  $region24: #{my_resnext50_forward.1} parent=0 // pred_region
    _
  $region25: #{my_resnext50_forward.1} parent=0 // pred_fallthru
    _
  // Predicated region
  $region26: #{my_resnext50_forward.1} parent=0 // pred_check
    _
  $region27: #{my_resnext50_forward.1} parent=0 // pred_check_branch
    %25 = sbr.rel (0) target = $region29
  $region28: #{my_resnext50_forward.1} parent=0 // pred_region
    _
  $region29: #{my_resnext50_forward.1} parent=0 // pred_fallthru
    _
  %v27 = vld [vmem:[%s0] sm:$0xff]
  %v28 = vld [vmem:[%s0 + $0x8] sm:$0xff]
  %v29 = vld [vmem:[%s0 + $0x10] sm:$0xff]
  %v30 = vld [vmem:[%s0 + $0x18] sm:$0xff]
  %v31 = vld [vmem:[%s1] sm:$0xff]
  %v32 = vld [vmem:[%s1 + $0x8] sm:$0xff]
  %v33 = vld [vmem:[%s1 + $0x10] sm:$0xff]
  %v34 = vld [vmem:[%s1 + $0x18] sm:$0xff]
  %v35 = vld [vmem:[%s1 + $0x20] sm:$0xff]
  %v36 = vld [vmem:[%s1 + $0x28] sm:$0xff]
  %v37 = vld [vmem:[%s1 + $0x30] sm:$0xff]
  %v38 = vld [vmem:[%s1 + $0x38] sm:$0xff]
  %v39 = vld [vmem:[%s1 + $0x40] sm:$0xff]
  %v40 = vld [vmem:[%s1 + $0x48] sm:$0xff]
  %v41 = vld [vmem:[%s1 + $0x50] sm:$0xff]
  %v42 = vld [vmem:[%s1 + $0x58] sm:$0xff]
  %v43 = vld [vmem:[%s1 + $0x60] sm:$0xff]
  %v44 = vld [vmem:[%s1 + $0x68] sm:$0xff]
  %v45 = vld [vmem:[%s1 + $0x70] sm:$0xff]
  %v46 = vld [vmem:[%s1 + $0x78] sm:$0xff]
  %v47 = vld [vmem:[%s1 + $0x80] sm:$0xff]
  %v48 = vld [vmem:[%s1 + $0x88] sm:$0xff]
  %v49 = vld [vmem:[%s1 + $0x90] sm:$0xff]
  %v50 = vld [vmem:[%s1 + $0x98] sm:$0xff]
  %v51 = vld [vmem:[%s1 + $0xa0] sm:$0xff]
  %v52 = vld [vmem:[%s1 + $0xa8] sm:$0xff]
  %v53 = vld [vmem:[%s1 + $0xb0] sm:$0xff]
  %v54 = vld [vmem:[%s1 + $0xb8] sm:$0xff]
  %v55 = vld [vmem:[%s1 + $0xc0] sm:$0xff]
  %v56 = vld [vmem:[%s1 + $0xc8] sm:$0xff]
  %v57 = vld [vmem:[%s1 + $0xd0] sm:$0xff]
  %v58 = vld [vmem:[%s1 + $0xd8] sm:$0xff]
  %v59 = vld [vmem:[%s1 + $0xe0] sm:$0xff]
  %v60 = vld [vmem:[%s1 + $0xe8] sm:$0xff]
  %v61 = vld [vmem:[%s1 + $0xf0] sm:$0xff]
  %v62 = vld [vmem:[%s1 + $0xf8] sm:$0xff]
  %v63 = vld [vmem:[%s1 + $0x100] sm:$0xff]
  %v64 = vld [vmem:[%s1 + $0x108] sm:$0xff]
  %v65 = vld [vmem:[%s1 + $0x110] sm:$0xff]
  %v66 = vld [vmem:[%s1 + $0x118] sm:$0xff]
  %v67 = vld [vmem:[%s1 + $0x120] sm:$0xff]
  %v68 = vld [vmem:[%s1 + $0x128] sm:$0xff]
  %v69 = vld [vmem:[%s1 + $0x130] sm:$0xff]
  %v70 = vld [vmem:[%s1 + $0x138] sm:$0xff]
  %v71 = vld [vmem:[%s1 + $0x140] sm:$0xff]
  %v72 = vld [vmem:[%s1 + $0x148] sm:$0xff]
  %v73 = vld [vmem:[%s1 + $0x150] sm:$0xff]
  %v74 = vld [vmem:[%s1 + $0x158] sm:$0xff]
  %v75 = vld [vmem:[%s1 + $0x160] sm:$0xff]
  %v76 = vld [vmem:[%s1 + $0x168] sm:$0xff]
  %v77 = vld [vmem:[%s1 + $0x170] sm:$0xff]
  %v78 = vld [vmem:[%s1 + $0x178] sm:$0xff]
  %v79 = vld [vmem:[%s1 + $0x180] sm:$0xff]
  %v80 = vld [vmem:[%s1 + $0x188] sm:$0xff]
  %v81 = vld [vmem:[%s1 + $0x190] sm:$0xff]
  %v82 = vld [vmem:[%s1 + $0x198] sm:$0xff]
  %v83 = vld [vmem:[%s1 + $0x1a0] sm:$0xff]
  %v84 = vld [vmem:[%s1 + $0x1a8] sm:$0xff]
  %v85 = vld [vmem:[%s1 + $0x1b0] sm:$0xff]
  %v86 = vld [vmem:[%s1 + $0x1b8] sm:$0xff]
  %v87 = vld [vmem:[%s1 + $0x1c0] sm:$0xff]
  %v88 = vld [vmem:[%s1 + $0x1c8] sm:$0xff]
  %v89 = vld [vmem:[%s1 + $0x1d0] sm:$0xff]
  %v90 = vld [vmem:[%s1 + $0x1d8] sm:$0xff]
  %v91 = vld [vmem:[%s1 + $0x1e0] sm:$0xff]
  %v92 = vld [vmem:[%s1 + $0x1e8] sm:$0xff]
  %v93 = vld [vmem:[%s1 + $0x1f0] sm:$0xff]
  %v94 = vld [vmem:[%s1 + $0x1f8] sm:$0xff]
  %v95 = vld [vmem:[%s1 + $0x200] sm:$0xff]
  %v96 = vld [vmem:[%s1 + $0x208] sm:$0xff]
  %v97 = vld [vmem:[%s1 + $0x210] sm:$0xff]
  %v98 = vld [vmem:[%s1 + $0x218] sm:$0xff]
  %v99 = vld [vmem:[%s1 + $0x220] sm:$0xff]
  %v100 = vld [vmem:[%s1 + $0x228] sm:$0xff]
  %v101 = vld [vmem:[%s1 + $0x230] sm:$0xff]
  %v102 = vld [vmem:[%s1 + $0x238] sm:$0xff]
  %v103 = vld [vmem:[%s1 + $0x240] sm:$0xff]
  %v104 = vld [vmem:[%s1 + $0x248] sm:$0xff]
  %v105 = vld [vmem:[%s1 + $0x250] sm:$0xff]
  %v106 = vld [vmem:[%s1 + $0x258] sm:$0xff]
  %v107 = vld [vmem:[%s1 + $0x260] sm:$0xff]
  %v108 = vld [vmem:[%s1 + $0x268] sm:$0xff]
  %v109 = vld [vmem:[%s1 + $0x270] sm:$0xff]
  %v110 = vld [vmem:[%s1 + $0x278] sm:$0xff]
  %v111 = vld [vmem:[%s1 + $0x280] sm:$0xff]
  %v112 = vld [vmem:[%s1 + $0x288] sm:$0xff]
  %v113 = vld [vmem:[%s1 + $0x290] sm:$0xff]
  %v114 = vld [vmem:[%s1 + $0x298] sm:$0xff]
  %v115 = vld [vmem:[%s1 + $0x2a0] sm:$0xff]
  %v116 = vld [vmem:[%s1 + $0x2a8] sm:$0xff]
  %v117 = vld [vmem:[%s1 + $0x2b0] sm:$0xff]
  %v118 = vld [vmem:[%s1 + $0x2b8] sm:$0xff]
  %v119 = vld [vmem:[%s1 + $0x2c0] sm:$0xff]
  %v120 = vld [vmem:[%s1 + $0x2c8] sm:$0xff]
  %v121 = vld [vmem:[%s1 + $0x2d0] sm:$0xff]
  %v122 = vld [vmem:[%s1 + $0x2d8] sm:$0xff]
  %v123 = vld [vmem:[%s1 + $0x2e0] sm:$0xff]
  %v124 = vld [vmem:[%s1 + $0x2e8] sm:$0xff]
  %v125 = vld [vmem:[%s1 + $0x2f0] sm:$0xff]
  %v126 = vld [vmem:[%s1 + $0x2f8] sm:$0xff]
  %v127 = vld [vmem:[%s1 + $0x300] sm:$0xff]
  %v128 = vld [vmem:[%s1 + $0x308] sm:$0xff]
  %v129 = vld [vmem:[%s1 + $0x310] sm:$0xff]
  %v130 = vld [vmem:[%s1 + $0x318] sm:$0xff]
  %v131 = vld [vmem:[%s1 + $0x320] sm:$0xff]
  %v132 = vld [vmem:[%s1 + $0x328] sm:$0xff]
  %v133 = vld [vmem:[%s1 + $0x330] sm:$0xff]
  %v134 = vld [vmem:[%s1 + $0x338] sm:$0xff]
  %v135 = vld [vmem:[%s1 + $0x340] sm:$0xff]
  %v136 = vld [vmem:[%s1 + $0x348] sm:$0xff]
  %v137 = vld [vmem:[%s1 + $0x350] sm:$0xff]
  %v138 = vld [vmem:[%s1 + $0x358] sm:$0xff]
  %v139 = vld [vmem:[%s1 + $0x360] sm:$0xff]
  %v140 = vld [vmem:[%s1 + $0x368] sm:$0xff]
  %v141 = vld [vmem:[%s1 + $0x370] sm:$0xff]
  %v142 = vld [vmem:[%s1 + $0x378] sm:$0xff]
  %v143 = vld [vmem:[%s1 + $0x380] sm:$0xff]
  %v144 = vld [vmem:[%s1 + $0x388] sm:$0xff]
  %v145 = vld [vmem:[%s1 + $0x390] sm:$0xff]
  %v146 = vld [vmem:[%s1 + $0x398] sm:$0xff]
  %v147 = vld [vmem:[%s1 + $0x3a0] sm:$0xff]
  %v148 = vld [vmem:[%s1 + $0x3a8] sm:$0xff]
  %v149 = vld [vmem:[%s1 + $0x3b0] sm:$0xff]
  %v150 = vld [vmem:[%s1 + $0x3b8] sm:$0xff]
  %v151 = vld [vmem:[%s1 + $0x3c0] sm:$0xff]
  %v152 = vld [vmem:[%s1 + $0x3c8] sm:$0xff]
  %v153 = vld [vmem:[%s1 + $0x3d0] sm:$0xff]
  %v154 = vld [vmem:[%s1 + $0x3d8] sm:$0xff]
  %v155 = vld [vmem:[%s1 + $0x3e0] sm:$0xff]
  %v156 = vld [vmem:[%s1 + $0x3e8] sm:$0xff]
  %v157 = vld [vmem:[%s1 + $0x3f0] sm:$0xff]
  %v158 = vld [vmem:[%s1 + $0x3f8] sm:$0xff]
  %v159 = vld [vmem:[%s1 + $0x400] sm:$0xff]
  %v160 = vld [vmem:[%s1 + $0x408] sm:$0xff]
  %v161 = vld [vmem:[%s1 + $0x410] sm:$0xff]
  %v162 = vld [vmem:[%s1 + $0x418] sm:$0xff]
  %v163 = vld [vmem:[%s1 + $0x420] sm:$0xff]
  %v164 = vld [vmem:[%s1 + $0x428] sm:$0xff]
  %v165 = vld [vmem:[%s1 + $0x430] sm:$0xff]
  %v166 = vld [vmem:[%s1 + $0x438] sm:$0xff]
  %v167 = vld [vmem:[%s1 + $0x440] sm:$0xff]
  %v168 = vld [vmem:[%s1 + $0x448] sm:$0xff]
  %v169 = vld [vmem:[%s1 + $0x450] sm:$0xff]
  %v170 = vld [vmem:[%s1 + $0x458] sm:$0xff]
  %v171 = vld [vmem:[%s1 + $0x460] sm:$0xff]
  %v172 = vld [vmem:[%s1 + $0x468] sm:$0xff]
  %v173 = vld [vmem:[%s1 + $0x470] sm:$0xff]
  %v174 = vld [vmem:[%s1 + $0x478] sm:$0xff]
  %v175 = vld [vmem:[%s1 + $0x480] sm:$0xff]
  %v176 = vld [vmem:[%s1 + $0x488] sm:$0xff]
  %v177 = vld [vmem:[%s1 + $0x490] sm:$0xff]
  %v178 = vld [vmem:[%s1 + $0x498] sm:$0xff]
  %v179 = vld [vmem:[%s1 + $0x4a0] sm:$0xff]
  %v180 = vld [vmem:[%s1 + $0x4a8] sm:$0xff]
  %v181 = vld [vmem:[%s1 + $0x4b0] sm:$0xff]
  %v182 = vld [vmem:[%s1 + $0x4b8] sm:$0xff]
  %v183 = vld [vmem:[%s1 + $0x4c0] sm:$0xff]
  %v184 = vld [vmem:[%s1 + $0x4c8] sm:$0xff]
  %v185 = vld [vmem:[%s1 + $0x4d0] sm:$0xff]
  %v186 = vld [vmem:[%s1 + $0x4d8] sm:$0xff]
  %v187 = vld [vmem:[%s1 + $0x4e0] sm:$0xff]
  %v188 = vld [vmem:[%s1 + $0x4e8] sm:$0xff]
  %v189 = vld [vmem:[%s1 + $0x4f0] sm:$0xff]
  %v190 = vld [vmem:[%s1 + $0x4f8] sm:$0xff]
  %v191 = vld [vmem:[%s1 + $0x500] sm:$0xff]
  %v192 = vld [vmem:[%s1 + $0x508] sm:$0xff]
  %v193 = vld [vmem:[%s1 + $0x510] sm:$0xff]
  %v194 = vld [vmem:[%s1 + $0x518] sm:$0xff]
  %v195 = vld [vmem:[%s1 + $0x520] sm:$0xff]
  %v196 = vld [vmem:[%s1 + $0x528] sm:$0xff]
  %v197 = vld [vmem:[%s1 + $0x530] sm:$0xff]
  %v198 = vld [vmem:[%s1 + $0x538] sm:$0xff]
  %v199 = vld [vmem:[%s1 + $0x540] sm:$0xff]
  %v200 = vld [vmem:[%s1 + $0x548] sm:$0xff]
  %v201 = vld [vmem:[%s1 + $0x550] sm:$0xff]
  %v202 = vld [vmem:[%s1 + $0x558] sm:$0xff]
  %v203 = vld [vmem:[%s1 + $0x560] sm:$0xff]
  %v204 = vld [vmem:[%s1 + $0x568] sm:$0xff]
  %v205 = vld [vmem:[%s1 + $0x570] sm:$0xff]
  %v206 = vld [vmem:[%s1 + $0x578] sm:$0xff]
  %v207 = vld [vmem:[%s1 + $0x580] sm:$0xff]
  %v208 = vld [vmem:[%s1 + $0x588] sm:$0xff]
  %v209 = vld [vmem:[%s1 + $0x590] sm:$0xff]
  %v210 = vld [vmem:[%s1 + $0x598] sm:$0xff]
  %v211 = vld [vmem:[%s1 + $0x5a0] sm:$0xff]
  %v212 = vld [vmem:[%s1 + $0x5a8] sm:$0xff]
  %v213 = vld [vmem:[%s1 + $0x5b0] sm:$0xff]
  %v214 = vld [vmem:[%s1 + $0x5b8] sm:$0xff]
  %v215 = vld [vmem:[%s1 + $0x5c0] sm:$0xff]
  %v216 = vld [vmem:[%s1 + $0x5c8] sm:$0xff]
  %v217 = vld [vmem:[%s1 + $0x5d0] sm:$0xff]
  %v218 = vld [vmem:[%s1 + $0x5d8] sm:$0xff]
  %v219 = vld [vmem:[%s1 + $0x5e0] sm:$0xff]
  %v220 = vld [vmem:[%s1 + $0x5e8] sm:$0xff]
  %v221 = vld [vmem:[%s1 + $0x5f0] sm:$0xff]
  %v222 = vld [vmem:[%s1 + $0x5f8] sm:$0xff]
  %v223 = vld [vmem:[%s1 + $0x600] sm:$0xff]
  %v224 = vld [vmem:[%s1 + $0x608] sm:$0xff]
  %v225 = vld [vmem:[%s1 + $0x610] sm:$0xff]
  %v226 = vld [vmem:[%s1 + $0x618] sm:$0xff]
  %v227 = vld [vmem:[%s1 + $0x620] sm:$0xff]
  %v228 = vld [vmem:[%s1 + $0x628] sm:$0xff]
  %v229 = vld [vmem:[%s1 + $0x630] sm:$0xff]
  %v230 = vld [vmem:[%s1 + $0x638] sm:$0xff]
  %v231 = vld [vmem:[%s1 + $0x640] sm:$0xff]
  %v232 = vld [vmem:[%s1 + $0x648] sm:$0xff]
  %v233 = vld [vmem:[%s1 + $0x650] sm:$0xff]
  %v234 = vld [vmem:[%s1 + $0x658] sm:$0xff]
  %v235 = vld [vmem:[%s1 + $0x660] sm:$0xff]
  %v236 = vld [vmem:[%s1 + $0x668] sm:$0xff]
  %v237 = vld [vmem:[%s1 + $0x670] sm:$0xff]
  %v238 = vld [vmem:[%s1 + $0x678] sm:$0xff]
  %v239 = vld [vmem:[%s1 + $0x680] sm:$0xff]
  %v240 = vld [vmem:[%s1 + $0x688] sm:$0xff]
  %v241 = vld [vmem:[%s1 + $0x690] sm:$0xff]
  %v242 = vld [vmem:[%s1 + $0x698] sm:$0xff]
  %v243 = vld [vmem:[%s1 + $0x6a0] sm:$0xff]
  %v244 = vld [vmem:[%s1 + $0x6a8] sm:$0xff]
  %v245 = vld [vmem:[%s1 + $0x6b0] sm:$0xff]
  %v246 = vld [vmem:[%s1 + $0x6b8] sm:$0xff]
  %v247 = vld [vmem:[%s1 + $0x6c0] sm:$0xff]
  %v248 = vld [vmem:[%s1 + $0x6c8] sm:$0xff]
  %v249 = vld [vmem:[%s1 + $0x6d0] sm:$0xff]
  %v250 = vld [vmem:[%s1 + $0x6d8] sm:$0xff]
  %v251 = vld [vmem:[%s1 + $0x6e0] sm:$0xff]
  %v252 = vld [vmem:[%s1 + $0x6e8] sm:$0xff]
  %v253 = vld [vmem:[%s1 + $0x6f0] sm:$0xff]
  %v254 = vld [vmem:[%s1 + $0x6f8] sm:$0xff]
  %v255 = vld [vmem:[%s1 + $0x700] sm:$0xff]
  %v256 = vld [vmem:[%s1 + $0x708] sm:$0xff]
  %v257 = vld [vmem:[%s1 + $0x710] sm:$0xff]
  %v258 = vld [vmem:[%s1 + $0x718] sm:$0xff]
  %v259 = vld [vmem:[%s1 + $0x720] sm:$0xff]
  %v260 = vld [vmem:[%s1 + $0x728] sm:$0xff]
  %v261 = vld [vmem:[%s1 + $0x730] sm:$0xff]
  %v262 = vld [vmem:[%s1 + $0x738] sm:$0xff]
  %v263 = vld [vmem:[%s1 + $0x740] sm:$0xff]
  %v264 = vld [vmem:[%s1 + $0x748] sm:$0xff]
  %v265 = vld [vmem:[%s1 + $0x750] sm:$0xff]
  %v266 = vld [vmem:[%s1 + $0x758] sm:$0xff]
  %v267 = vld [vmem:[%s1 + $0x760] sm:$0xff]
  %v268 = vld [vmem:[%s1 + $0x768] sm:$0xff]
  %v269 = vld [vmem:[%s1 + $0x770] sm:$0xff]
  %v270 = vld [vmem:[%s1 + $0x778] sm:$0xff]
  %v271 = vld [vmem:[%s1 + $0x780] sm:$0xff]
  %v272 = vld [vmem:[%s1 + $0x788] sm:$0xff]
  %v273 = vld [vmem:[%s1 + $0x790] sm:$0xff]
  %v274 = vld [vmem:[%s1 + $0x798] sm:$0xff]
  %v275 = vld [vmem:[%s1 + $0x7a0] sm:$0xff]
  %v276 = vld [vmem:[%s1 + $0x7a8] sm:$0xff]
  %v277 = vld [vmem:[%s1 + $0x7b0] sm:$0xff]
  %v278 = vld [vmem:[%s1 + $0x7b8] sm:$0xff]
  %v279 = vld [vmem:[%s1 + $0x7c0] sm:$0xff]
  %v280 = vld [vmem:[%s1 + $0x7c8] sm:$0xff]
  %v281 = vld [vmem:[%s1 + $0x7d0] sm:$0xff]
  %v282 = vld [vmem:[%s1 + $0x7d8] sm:$0xff]
  %v283 = vld [vmem:[%s1 + $0x7e0] sm:$0xff]
  %v284 = vld [vmem:[%s1 + $0x7e8] sm:$0xff]
  %v285 = vld [vmem:[%s1 + $0x7f0] sm:$0xff]
  %v286 = vld [vmem:[%s1 + $0x7f8] sm:$0xff]
  %v287 = vld [vmem:[%s1 + $0x800] sm:$0xff]
  %v288 = vld [vmem:[%s1 + $0x808] sm:$0xff]
  %v289 = vld [vmem:[%s1 + $0x810] sm:$0xff]
  %v290 = vld [vmem:[%s1 + $0x818] sm:$0xff]
  %v291 = vld [vmem:[%s1 + $0x820] sm:$0xff]
  %v292 = vld [vmem:[%s1 + $0x828] sm:$0xff]
  %v293 = vld [vmem:[%s1 + $0x830] sm:$0xff]
  %v294 = vld [vmem:[%s1 + $0x838] sm:$0xff]
  %v295 = vld [vmem:[%s1 + $0x840] sm:$0xff]
  %v296 = vld [vmem:[%s1 + $0x848] sm:$0xff]
  %v297 = vld [vmem:[%s1 + $0x850] sm:$0xff]
  %v298 = vld [vmem:[%s1 + $0x858] sm:$0xff]
  %v299 = vld [vmem:[%s1 + $0x860] sm:$0xff]
  %v300 = vld [vmem:[%s1 + $0x868] sm:$0xff]
  %v301 = vld [vmem:[%s1 + $0x870] sm:$0xff]
  %v302 = vld [vmem:[%s1 + $0x878] sm:$0xff]
  %v303 = vld [vmem:[%s1 + $0x880] sm:$0xff]
  %v304 = vld [vmem:[%s1 + $0x888] sm:$0xff]
  %v305 = vld [vmem:[%s1 + $0x890] sm:$0xff]
  %v306 = vld [vmem:[%s1 + $0x898] sm:$0xff]
  %v307 = vld [vmem:[%s1 + $0x8a0] sm:$0xff]
  %v308 = vld [vmem:[%s1 + $0x8a8] sm:$0xff]
  %v309 = vld [vmem:[%s1 + $0x8b0] sm:$0xff]
  %v310 = vld [vmem:[%s1 + $0x8b8] sm:$0xff]
  %v311 = vld [vmem:[%s1 + $0x8c0] sm:$0xff]
  %v312 = vld [vmem:[%s1 + $0x8c8] sm:$0xff]
  %v313 = vld [vmem:[%s1 + $0x8d0] sm:$0xff]
  %v314 = vld [vmem:[%s1 + $0x8d8] sm:$0xff]
  %v315 = vld [vmem:[%s1 + $0x8e0] sm:$0xff]
  %v316 = vld [vmem:[%s1 + $0x8e8] sm:$0xff]
  %v317 = vld [vmem:[%s1 + $0x8f0] sm:$0xff]
  %v318 = vld [vmem:[%s1 + $0x8f8] sm:$0xff]
  %v319 = vld [vmem:[%s1 + $0x900] sm:$0xff]
  %v320 = vld [vmem:[%s1 + $0x908] sm:$0xff]
  %v321 = vld [vmem:[%s1 + $0x910] sm:$0xff]
  %v322 = vld [vmem:[%s1 + $0x918] sm:$0xff]
  %v323 = vld [vmem:[%s1 + $0x920] sm:$0xff]
  %v324 = vld [vmem:[%s1 + $0x928] sm:$0xff]
  %v325 = vld [vmem:[%s1 + $0x930] sm:$0xff]
  %v326 = vld [vmem:[%s1 + $0x938] sm:$0xff]
  %v327 = vld [vmem:[%s1 + $0x940] sm:$0xff]
  %v328 = vld [vmem:[%s1 + $0x948] sm:$0xff]
  %v329 = vld [vmem:[%s1 + $0x950] sm:$0xff]
  %v330 = vld [vmem:[%s1 + $0x958] sm:$0xff]
  %v331 = vld [vmem:[%s1 + $0x960] sm:$0xff]
  %v332 = vld [vmem:[%s1 + $0x968] sm:$0xff]
  %v333 = vld [vmem:[%s1 + $0x970] sm:$0xff]
  %v334 = vld [vmem:[%s1 + $0x978] sm:$0xff]
  %v335 = vld [vmem:[%s1 + $0x980] sm:$0xff]
  %v336 = vld [vmem:[%s1 + $0x988] sm:$0xff]
  %v337 = vld [vmem:[%s1 + $0x990] sm:$0xff]
  %v338 = vld [vmem:[%s1 + $0x998] sm:$0xff]
  %v339 = vld [vmem:[%s1 + $0x9a0] sm:$0xff]
  %v340 = vld [vmem:[%s1 + $0x9a8] sm:$0xff]
  %v341 = vld [vmem:[%s1 + $0x9b0] sm:$0xff]
  %v342 = vld [vmem:[%s1 + $0x9b8] sm:$0xff]
  %v343 = vld [vmem:[%s1 + $0x9c0] sm:$0xff]
  %v344 = vld [vmem:[%s1 + $0x9c8] sm:$0xff]
  %v345 = vld [vmem:[%s1 + $0x9d0] sm:$0xff]
  %v346 = vld [vmem:[%s1 + $0x9d8] sm:$0xff]
  %v347 = vld [vmem:[%s1 + $0x9e0] sm:$0xff]
  %v348 = vld [vmem:[%s1 + $0x9e8] sm:$0xff]
  %v349 = vld [vmem:[%s1 + $0x9f0] sm:$0xff]
  %v350 = vld [vmem:[%s1 + $0x9f8] sm:$0xff]
  %v351 = vld [vmem:[%s1 + $0xa00] sm:$0xff]
  %v352 = vld [vmem:[%s1 + $0xa08] sm:$0xff]
  %v353 = vld [vmem:[%s1 + $0xa10] sm:$0xff]
  %v354 = vld [vmem:[%s1 + $0xa18] sm:$0xff]
  %v355 = vld [vmem:[%s1 + $0xa20] sm:$0xff]
  %v356 = vld [vmem:[%s1 + $0xa28] sm:$0xff]
  %v357 = vld [vmem:[%s1 + $0xa30] sm:$0xff]
  %v358 = vld [vmem:[%s1 + $0xa38] sm:$0xff]
  %v359 = vld [vmem:[%s1 + $0xa40] sm:$0xff]
  %v360 = vld [vmem:[%s1 + $0xa48] sm:$0xff]
  %v361 = vld [vmem:[%s1 + $0xa50] sm:$0xff]
  %v362 = vld [vmem:[%s1 + $0xa58] sm:$0xff]
  %v363 = vld [vmem:[%s1 + $0xa60] sm:$0xff]
  %v364 = vld [vmem:[%s1 + $0xa68] sm:$0xff]
  %v365 = vld [vmem:[%s1 + $0xa70] sm:$0xff]
  %v366 = vld [vmem:[%s1 + $0xa78] sm:$0xff]
  %v367 = vld [vmem:[%s1 + $0xa80] sm:$0xff]
  %v368 = vld [vmem:[%s1 + $0xa88] sm:$0xff]
  %v369 = vld [vmem:[%s1 + $0xa90] sm:$0xff]
  %v370 = vld [vmem:[%s1 + $0xa98] sm:$0xff]
  %v371 = vld [vmem:[%s1 + $0xaa0] sm:$0xff]
  %v372 = vld [vmem:[%s1 + $0xaa8] sm:$0xff]
  %v373 = vld [vmem:[%s1 + $0xab0] sm:$0xff]
  %v374 = vld [vmem:[%s1 + $0xab8] sm:$0xff]
  %v375 = vld [vmem:[%s1 + $0xac0] sm:$0xff]
  %v376 = vld [vmem:[%s1 + $0xac8] sm:$0xff]
  %v377 = vld [vmem:[%s1 + $0xad0] sm:$0xff]
  %v378 = vld [vmem:[%s1 + $0xad8] sm:$0xff]
  %v379 = vld [vmem:[%s1 + $0xae0] sm:$0xff]
  %v380 = vld [vmem:[%s1 + $0xae8] sm:$0xff]
  %v381 = vld [vmem:[%s1 + $0xaf0] sm:$0xff]
  %v382 = vld [vmem:[%s1 + $0xaf8] sm:$0xff]
  %v383 = vld [vmem:[%s1 + $0xb00] sm:$0xff]
  %v384 = vld [vmem:[%s1 + $0xb08] sm:$0xff]
  %v385 = vld [vmem:[%s1 + $0xb10] sm:$0xff]
  %v386 = vld [vmem:[%s1 + $0xb18] sm:$0xff]
  %v387 = vld [vmem:[%s1 + $0xb20] sm:$0xff]
  %v388 = vld [vmem:[%s1 + $0xb28] sm:$0xff]
  %v389 = vld [vmem:[%s1 + $0xb30] sm:$0xff]
  %v390 = vld [vmem:[%s1 + $0xb38] sm:$0xff]
  %v391 = vld [vmem:[%s1 + $0xb40] sm:$0xff]
  %v392 = vld [vmem:[%s1 + $0xb48] sm:$0xff]
  %v393 = vld [vmem:[%s1 + $0xb50] sm:$0xff]
  %v394 = vld [vmem:[%s1 + $0xb58] sm:$0xff]
  %v395 = vld [vmem:[%s1 + $0xb60] sm:$0xff]
  %v396 = vld [vmem:[%s1 + $0xb68] sm:$0xff]
  %v397 = vld [vmem:[%s1 + $0xb70] sm:$0xff]
  %v398 = vld [vmem:[%s1 + $0xb78] sm:$0xff]
  %v399 = vld [vmem:[%s1 + $0xb80] sm:$0xff]
  %v400 = vld [vmem:[%s1 + $0xb88] sm:$0xff]
  %v401 = vld [vmem:[%s1 + $0xb90] sm:$0xff]
  %v402 = vld [vmem:[%s1 + $0xb98] sm:$0xff]
  %v403 = vld [vmem:[%s1 + $0xba0] sm:$0xff]
  %v404 = vld [vmem:[%s1 + $0xba8] sm:$0xff]
  %v405 = vld [vmem:[%s1 + $0xbb0] sm:$0xff]
  %v406 = vld [vmem:[%s1 + $0xbb8] sm:$0xff]
  %v407 = vld [vmem:[%s1 + $0xbc0] sm:$0xff]
  %v408 = vld [vmem:[%s1 + $0xbc8] sm:$0xff]
  %v409 = vld [vmem:[%s1 + $0xbd0] sm:$0xff]
  %v410 = vld [vmem:[%s1 + $0xbd8] sm:$0xff]
  %v411 = vld [vmem:[%s1 + $0xbe0] sm:$0xff]
  %v412 = vld [vmem:[%s1 + $0xbe8] sm:$0xff]
  %v413 = vld [vmem:[%s1 + $0xbf0] sm:$0xff]
  %v414 = vld [vmem:[%s1 + $0xbf8] sm:$0xff]
  %v415 = vld [vmem:[%s1 + $0xc00] sm:$0xff]
  %v416 = vld [vmem:[%s1 + $0xc08] sm:$0xff]
  %v417 = vld [vmem:[%s1 + $0xc10] sm:$0xff]
  %v418 = vld [vmem:[%s1 + $0xc18] sm:$0xff]
  %v419 = vld [vmem:[%s1 + $0xc20] sm:$0xff]
  %v420 = vld [vmem:[%s1 + $0xc28] sm:$0xff]
  %v421 = vld [vmem:[%s1 + $0xc30] sm:$0xff]
  %v422 = vld [vmem:[%s1 + $0xc38] sm:$0xff]
  %v423 = vld [vmem:[%s1 + $0xc40] sm:$0xff]
  %v424 = vld [vmem:[%s1 + $0xc48] sm:$0xff]
  %v425 = vld [vmem:[%s1 + $0xc50] sm:$0xff]
  %v426 = vld [vmem:[%s1 + $0xc58] sm:$0xff]
  %v427 = vld [vmem:[%s1 + $0xc60] sm:$0xff]
  %v428 = vld [vmem:[%s1 + $0xc68] sm:$0xff]
  %v429 = vld [vmem:[%s1 + $0xc70] sm:$0xff]
  %v430 = vld [vmem:[%s1 + $0xc78] sm:$0xff]
  %v431 = vld [vmem:[%s1 + $0xc80] sm:$0xff]
  %v432 = vld [vmem:[%s1 + $0xc88] sm:$0xff]
  %v433 = vld [vmem:[%s1 + $0xc90] sm:$0xff]
  %v434 = vld [vmem:[%s1 + $0xc98] sm:$0xff]
  %v435 = vld [vmem:[%s1 + $0xca0] sm:$0xff]
  %v436 = vld [vmem:[%s1 + $0xca8] sm:$0xff]
  %v437 = vld [vmem:[%s1 + $0xcb0] sm:$0xff]
  %v438 = vld [vmem:[%s1 + $0xcb8] sm:$0xff]
  %v439 = vld [vmem:[%s1 + $0xcc0] sm:$0xff]
  %v440 = vld [vmem:[%s1 + $0xcc8] sm:$0xff]
  %v441 = vld [vmem:[%s1 + $0xcd0] sm:$0xff]
  %v442 = vld [vmem:[%s1 + $0xcd8] sm:$0xff]
  %v443 = vld [vmem:[%s1 + $0xce0] sm:$0xff]
  %v444 = vld [vmem:[%s1 + $0xce8] sm:$0xff]
  %v445 = vld [vmem:[%s1 + $0xcf0] sm:$0xff]
  %v446 = vld [vmem:[%s1 + $0xcf8] sm:$0xff]
  %v447 = vld [vmem:[%s1 + $0xd00] sm:$0xff]
  %v448 = vld [vmem:[%s1 + $0xd08] sm:$0xff]
  %v449 = vld [vmem:[%s1 + $0xd10] sm:$0xff]
  %v450 = vld [vmem:[%s1 + $0xd18] sm:$0xff]
  %v451 = vld [vmem:[%s1 + $0xd20] sm:$0xff]
  %v452 = vld [vmem:[%s1 + $0xd28] sm:$0xff]
  %v453 = vld [vmem:[%s1 + $0xd30] sm:$0xff]
  %v454 = vld [vmem:[%s1 + $0xd38] sm:$0xff]
  %v455 = vld [vmem:[%s1 + $0xd40] sm:$0xff]
  %v456 = vld [vmem:[%s1 + $0xd48] sm:$0xff]
  %v457 = vld [vmem:[%s1 + $0xd50] sm:$0xff]
  %v458 = vld [vmem:[%s1 + $0xd58] sm:$0xff]
  %v459 = vld [vmem:[%s1 + $0xd60] sm:$0xff]
  %v460 = vld [vmem:[%s1 + $0xd68] sm:$0xff]
  %v461 = vld [vmem:[%s1 + $0xd70] sm:$0xff]
  %v462 = vld [vmem:[%s1 + $0xd78] sm:$0xff]
  %v463 = vld [vmem:[%s1 + $0xd80] sm:$0xff]
  %v464 = vld [vmem:[%s1 + $0xd88] sm:$0xff]
  %v465 = vld [vmem:[%s1 + $0xd90] sm:$0xff]
  %v466 = vld [vmem:[%s1 + $0xd98] sm:$0xff]
  %v467 = vld [vmem:[%s1 + $0xda0] sm:$0xff]
  %v468 = vld [vmem:[%s1 + $0xda8] sm:$0xff]
  %v469 = vld [vmem:[%s1 + $0xdb0] sm:$0xff]
  %v470 = vld [vmem:[%s1 + $0xdb8] sm:$0xff]
  %v471 = vld [vmem:[%s1 + $0xdc0] sm:$0xff]
  %v472 = vld [vmem:[%s1 + $0xdc8] sm:$0xff]
  %v473 = vld [vmem:[%s1 + $0xdd0] sm:$0xff]
  %v474 = vld [vmem:[%s1 + $0xdd8] sm:$0xff]
  %v475 = vld [vmem:[%s1 + $0xde0] sm:$0xff]
  %v476 = vld [vmem:[%s1 + $0xde8] sm:$0xff]
  %v477 = vld [vmem:[%s1 + $0xdf0] sm:$0xff]
  %v478 = vld [vmem:[%s1 + $0xdf8] sm:$0xff]
  %v479 = vld [vmem:[%s1 + $0xe00] sm:$0xff]
  %v480 = vld [vmem:[%s1 + $0xe08] sm:$0xff]
  %v481 = vld [vmem:[%s1 + $0xe10] sm:$0xff]
  %v482 = vld [vmem:[%s1 + $0xe18] sm:$0xff]
  %v483 = vld [vmem:[%s1 + $0xe20] sm:$0xff]
  %v484 = vld [vmem:[%s1 + $0xe28] sm:$0xff]
  %v485 = vld [vmem:[%s1 + $0xe30] sm:$0xff]
  %v486 = vld [vmem:[%s1 + $0xe38] sm:$0xff]
  %v487 = vld [vmem:[%s1 + $0xe40] sm:$0xff]
  %v488 = vld [vmem:[%s1 + $0xe48] sm:$0xff]
  %v489 = vld [vmem:[%s1 + $0xe50] sm:$0xff]
  %v490 = vld [vmem:[%s1 + $0xe58] sm:$0xff]
  %v491 = vld [vmem:[%s1 + $0xe60] sm:$0xff]
  %v492 = vld [vmem:[%s1 + $0xe68] sm:$0xff]
  %v493 = vld [vmem:[%s1 + $0xe70] sm:$0xff]
  %v494 = vld [vmem:[%s1 + $0xe78] sm:$0xff]
  %v495 = vld [vmem:[%s1 + $0xe80] sm:$0xff]
  %v496 = vld [vmem:[%s1 + $0xe88] sm:$0xff]
  %v497 = vld [vmem:[%s1 + $0xe90] sm:$0xff]
  %v498 = vld [vmem:[%s1 + $0xe98] sm:$0xff]
  %v499 = vld [vmem:[%s1 + $0xea0] sm:$0xff]
  %v500 = vld [vmem:[%s1 + $0xea8] sm:$0xff]
  %v501 = vld [vmem:[%s1 + $0xeb0] sm:$0xff]
  %v502 = vld [vmem:[%s1 + $0xeb8] sm:$0xff]
  %v503 = vld [vmem:[%s1 + $0xec0] sm:$0xff]
  %v504 = vld [vmem:[%s1 + $0xec8] sm:$0xff]
  %v505 = vld [vmem:[%s1 + $0xed0] sm:$0xff]
  %v506 = vld [vmem:[%s1 + $0xed8] sm:$0xff]
  %v507 = vld [vmem:[%s1 + $0xee0] sm:$0xff]
  %v508 = vld [vmem:[%s1 + $0xee8] sm:$0xff]
  %v509 = vld [vmem:[%s1 + $0xef0] sm:$0xff]
  %v510 = vld [vmem:[%s1 + $0xef8] sm:$0xff]
  %v511 = vld [vmem:[%s1 + $0xf00] sm:$0xff]
  %v512 = vld [vmem:[%s1 + $0xf08] sm:$0xff]
  %v513 = vld [vmem:[%s1 + $0xf10] sm:$0xff]
  %v514 = vld [vmem:[%s1 + $0xf18] sm:$0xff]
  %v515 = vld [vmem:[%s1 + $0xf20] sm:$0xff]
  %v516 = vld [vmem:[%s1 + $0xf28] sm:$0xff]
  %v517 = vld [vmem:[%s1 + $0xf30] sm:$0xff]
  %v518 = vld [vmem:[%s1 + $0xf38] sm:$0xff]
  %v519 = vld [vmem:[%s1 + $0xf40] sm:$0xff]
  %v520 = vld [vmem:[%s1 + $0xf48] sm:$0xff]
  %v521 = vld [vmem:[%s1 + $0xf50] sm:$0xff]
  %v522 = vld [vmem:[%s1 + $0xf58] sm:$0xff]
  %v523 = vld [vmem:[%s1 + $0xf60] sm:$0xff]
  %v524 = vld [vmem:[%s1 + $0xf68] sm:$0xff]
  %v525 = vld [vmem:[%s1 + $0xf70] sm:$0xff]
  %v526 = vld [vmem:[%s1 + $0xf78] sm:$0xff]
  %v527 = vld [vmem:[%s1 + $0xf80] sm:$0xff]
  %v528 = vld [vmem:[%s1 + $0xf88] sm:$0xff]
  %v529 = vld [vmem:[%s1 + $0xf90] sm:$0xff]
  %v530 = vld [vmem:[%s1 + $0xf98] sm:$0xff]
  %v531 = vld [vmem:[%s1 + $0xfa0] sm:$0xff]
  %v532 = vld [vmem:[%s1 + $0xfa8] sm:$0xff]
  %v533 = vld [vmem:[%s1 + $0xfb0] sm:$0xff]
  %v534 = vld [vmem:[%s1 + $0xfb8] sm:$0xff]
  %v535 = vld [vmem:[%s1 + $0xfc0] sm:$0xff]
  %v536 = vld [vmem:[%s1 + $0xfc8] sm:$0xff]
  %v537 = vld [vmem:[%s1 + $0xfd0] sm:$0xff]
  %v538 = vld [vmem:[%s1 + $0xfd8] sm:$0xff]
  %v539 = vld [vmem:[%s1 + $0xfe0] sm:$0xff]
  %v540 = vld [vmem:[%s1 + $0xfe8] sm:$0xff]
  %v541 = vld [vmem:[%s1 + $0xff0] sm:$0xff]
  %v542 = vld [vmem:[%s1 + $0xff8] sm:$0xff]
  %v543 = vld [vmem:[%s2] sm:$0xff]
  %v545 = vlaneseq
  %v546 = vshrl.u32 %v545, 7
  %v547 = vsub.s32 0, %v546
  %v548 = vrot.slane %v543, %v547
  %v549 = vlaneseq
  %v550 = vshrl.u32 %v549, 7
  %v551 = vsub.s32 1, %v550
  %v552 = vrot.slane %v543, %v551
  %v553 = vlaneseq
  %v554 = vshrl.u32 %v553, 7
  %v555 = vsub.s32 2, %v554
  %v556 = vrot.slane %v543, %v555
  %v557 = vlaneseq
  %v558 = vshrl.u32 %v557, 7
  %v559 = vsub.s32 3, %v558
  %v560 = vrot.slane %v543, %v559
  %v561 = vlaneseq
  %v562 = vshrl.u32 %v561, 7
  %v563 = vsub.s32 4, %v562
  %v564 = vrot.slane %v543, %v563
  %v565 = vlaneseq
  %v566 = vshrl.u32 %v565, 7
  %v567 = vsub.s32 5, %v566
  %v568 = vrot.slane %v543, %v567
  %v569 = vlaneseq
  %v570 = vshrl.u32 %v569, 7
  %v571 = vsub.s32 6, %v570
  %v572 = vrot.slane %v543, %v571
  %v573 = vlaneseq
  %v574 = vshrl.u32 %v573, 7
  %v575 = vsub.s32 7, %v574
  %v576 = vrot.slane %v543, %v575
  %v589 = vunpack.c.l.b16 %v27
  %v590 = vunpack.c.h.b16 %v27
  %v591 = vunpack.c.l.b16 %v28
  %v592 = vunpack.c.h.b16 %v28
  %v593 = vunpack.c.l.b16 %v29
  %v594 = vunpack.c.h.b16 %v29
  %v595 = vunpack.c.l.b16 %v30
  %v596 = vunpack.c.h.b16 %v30
  %v597 = vpack.c.b16 %v589, %v589
  %v598 = vpack.c.b16 %v590, %v590
  %v599 = vpack.c.b16 %v591, %v591
  %v600 = vpack.c.b16 %v592, %v592
  %v601 = vpack.c.b16 %v593, %v593
  %v602 = vpack.c.b16 %v594, %v594
  %v603 = vpack.c.b16 %v595, %v595
  %v604 = vpack.c.b16 %v596, %v596
  %v1125 = vunpack.c.l.b16 %v31
  %v1126 = vunpack.c.h.b16 %v31
  %v1127 = vunpack.c.l.b16 %v32
  %v1128 = vunpack.c.h.b16 %v32
  %v1129 = vunpack.c.l.b16 %v33
  %v1130 = vunpack.c.h.b16 %v33
  %v1131 = vunpack.c.l.b16 %v34
  %v1132 = vunpack.c.h.b16 %v34
  %v1133 = vunpack.c.l.b16 %v35
  %v1134 = vunpack.c.h.b16 %v35
  %v1135 = vunpack.c.l.b16 %v36
  %v1136 = vunpack.c.h.b16 %v36
  %v1137 = vunpack.c.l.b16 %v37
  %v1138 = vunpack.c.h.b16 %v37
  %v1139 = vunpack.c.l.b16 %v38
  %v1140 = vunpack.c.h.b16 %v38
  %v1141 = vunpack.c.l.b16 %v39
  %v1142 = vunpack.c.h.b16 %v39
  %v1143 = vunpack.c.l.b16 %v40
  %v1144 = vunpack.c.h.b16 %v40
  %v1145 = vunpack.c.l.b16 %v41
  %v1146 = vunpack.c.h.b16 %v41
  %v1147 = vunpack.c.l.b16 %v42
  %v1148 = vunpack.c.h.b16 %v42
  %v1149 = vunpack.c.l.b16 %v43
  %v1150 = vunpack.c.h.b16 %v43
  %v1151 = vunpack.c.l.b16 %v44
  %v1152 = vunpack.c.h.b16 %v44
  %v1153 = vunpack.c.l.b16 %v45
  %v1154 = vunpack.c.h.b16 %v45
  %v1155 = vunpack.c.l.b16 %v46
  %v1156 = vunpack.c.h.b16 %v46
  %v1157 = vunpack.c.l.b16 %v47
  %v1158 = vunpack.c.h.b16 %v47
  %v1159 = vunpack.c.l.b16 %v48
  %v1160 = vunpack.c.h.b16 %v48
  %v1161 = vunpack.c.l.b16 %v49
  %v1162 = vunpack.c.h.b16 %v49
  %v1163 = vunpack.c.l.b16 %v50
  %v1164 = vunpack.c.h.b16 %v50
  %v1165 = vunpack.c.l.b16 %v51
  %v1166 = vunpack.c.h.b16 %v51
  %v1167 = vunpack.c.l.b16 %v52
  %v1168 = vunpack.c.h.b16 %v52
  %v1169 = vunpack.c.l.b16 %v53
  %v1170 = vunpack.c.h.b16 %v53
  %v1171 = vunpack.c.l.b16 %v54
  %v1172 = vunpack.c.h.b16 %v54
  %v1173 = vunpack.c.l.b16 %v55
  %v1174 = vunpack.c.h.b16 %v55
  %v1175 = vunpack.c.l.b16 %v56
  %v1176 = vunpack.c.h.b16 %v56
  %v1177 = vunpack.c.l.b16 %v57
  %v1178 = vunpack.c.h.b16 %v57
  %v1179 = vunpack.c.l.b16 %v58
  %v1180 = vunpack.c.h.b16 %v58
  %v1181 = vunpack.c.l.b16 %v59
  %v1182 = vunpack.c.h.b16 %v59
  %v1183 = vunpack.c.l.b16 %v60
  %v1184 = vunpack.c.h.b16 %v60
  %v1185 = vunpack.c.l.b16 %v61
  %v1186 = vunpack.c.h.b16 %v61
  %v1187 = vunpack.c.l.b16 %v62
  %v1188 = vunpack.c.h.b16 %v62
  %v1189 = vunpack.c.l.b16 %v63
  %v1190 = vunpack.c.h.b16 %v63
  %v1191 = vunpack.c.l.b16 %v64
  %v1192 = vunpack.c.h.b16 %v64
  %v1193 = vunpack.c.l.b16 %v65
  %v1194 = vunpack.c.h.b16 %v65
  %v1195 = vunpack.c.l.b16 %v66
  %v1196 = vunpack.c.h.b16 %v66
  %v1197 = vunpack.c.l.b16 %v67
  %v1198 = vunpack.c.h.b16 %v67
  %v1199 = vunpack.c.l.b16 %v68
  %v1200 = vunpack.c.h.b16 %v68
  %v1201 = vunpack.c.l.b16 %v69
  %v1202 = vunpack.c.h.b16 %v69
  %v1203 = vunpack.c.l.b16 %v70
  %v1204 = vunpack.c.h.b16 %v70
  %v1205 = vunpack.c.l.b16 %v71
  %v1206 = vunpack.c.h.b16 %v71
  %v1207 = vunpack.c.l.b16 %v72
  %v1208 = vunpack.c.h.b16 %v72
  %v1209 = vunpack.c.l.b16 %v73
  %v1210 = vunpack.c.h.b16 %v73
  %v1211 = vunpack.c.l.b16 %v74
  %v1212 = vunpack.c.h.b16 %v74
  %v1213 = vunpack.c.l.b16 %v75
  %v1214 = vunpack.c.h.b16 %v75
  %v1215 = vunpack.c.l.b16 %v76
  %v1216 = vunpack.c.h.b16 %v76
  %v1217 = vunpack.c.l.b16 %v77
  %v1218 = vunpack.c.h.b16 %v77
  %v1219 = vunpack.c.l.b16 %v78
  %v1220 = vunpack.c.h.b16 %v78
  %v1221 = vunpack.c.l.b16 %v79
  %v1222 = vunpack.c.h.b16 %v79
  %v1223 = vunpack.c.l.b16 %v80
  %v1224 = vunpack.c.h.b16 %v80
  %v1225 = vunpack.c.l.b16 %v81
  %v1226 = vunpack.c.h.b16 %v81
  %v1227 = vunpack.c.l.b16 %v82
  %v1228 = vunpack.c.h.b16 %v82
  %v1229 = vunpack.c.l.b16 %v83
  %v1230 = vunpack.c.h.b16 %v83
  %v1231 = vunpack.c.l.b16 %v84
  %v1232 = vunpack.c.h.b16 %v84
  %v1233 = vunpack.c.l.b16 %v85
  %v1234 = vunpack.c.h.b16 %v85
  %v1235 = vunpack.c.l.b16 %v86
  %v1236 = vunpack.c.h.b16 %v86
  %v1237 = vunpack.c.l.b16 %v87
  %v1238 = vunpack.c.h.b16 %v87
  %v1239 = vunpack.c.l.b16 %v88
  %v1240 = vunpack.c.h.b16 %v88
  %v1241 = vunpack.c.l.b16 %v89
  %v1242 = vunpack.c.h.b16 %v89
  %v1243 = vunpack.c.l.b16 %v90
  %v1244 = vunpack.c.h.b16 %v90
  %v1245 = vunpack.c.l.b16 %v91
  %v1246 = vunpack.c.h.b16 %v91
  %v1247 = vunpack.c.l.b16 %v92
  %v1248 = vunpack.c.h.b16 %v92
  %v1249 = vunpack.c.l.b16 %v93
  %v1250 = vunpack.c.h.b16 %v93
  %v1251 = vunpack.c.l.b16 %v94
  %v1252 = vunpack.c.h.b16 %v94
  %v1253 = vunpack.c.l.b16 %v95
  %v1254 = vunpack.c.h.b16 %v95
  %v1255 = vunpack.c.l.b16 %v96
  %v1256 = vunpack.c.h.b16 %v96
  %v1257 = vunpack.c.l.b16 %v97
  %v1258 = vunpack.c.h.b16 %v97
  %v1259 = vunpack.c.l.b16 %v98
  %v1260 = vunpack.c.h.b16 %v98
  %v1261 = vunpack.c.l.b16 %v99
  %v1262 = vunpack.c.h.b16 %v99
  %v1263 = vunpack.c.l.b16 %v100
  %v1264 = vunpack.c.h.b16 %v100
  %v1265 = vunpack.c.l.b16 %v101
  %v1266 = vunpack.c.h.b16 %v101
  %v1267 = vunpack.c.l.b16 %v102
  %v1268 = vunpack.c.h.b16 %v102
  %v1269 = vunpack.c.l.b16 %v103
  %v1270 = vunpack.c.h.b16 %v103
  %v1271 = vunpack.c.l.b16 %v104
  %v1272 = vunpack.c.h.b16 %v104
  %v1273 = vunpack.c.l.b16 %v105
  %v1274 = vunpack.c.h.b16 %v105
  %v1275 = vunpack.c.l.b16 %v106
  %v1276 = vunpack.c.h.b16 %v106
  %v1277 = vunpack.c.l.b16 %v107
  %v1278 = vunpack.c.h.b16 %v107
  %v1279 = vunpack.c.l.b16 %v108
  %v1280 = vunpack.c.h.b16 %v108
  %v1281 = vunpack.c.l.b16 %v109
  %v1282 = vunpack.c.h.b16 %v109
  %v1283 = vunpack.c.l.b16 %v110
  %v1284 = vunpack.c.h.b16 %v110
  %v1285 = vunpack.c.l.b16 %v111
  %v1286 = vunpack.c.h.b16 %v111
  %v1287 = vunpack.c.l.b16 %v112
  %v1288 = vunpack.c.h.b16 %v112
  %v1289 = vunpack.c.l.b16 %v113
  %v1290 = vunpack.c.h.b16 %v113
  %v1291 = vunpack.c.l.b16 %v114
  %v1292 = vunpack.c.h.b16 %v114
  %v1293 = vunpack.c.l.b16 %v115
  %v1294 = vunpack.c.h.b16 %v115
  %v1295 = vunpack.c.l.b16 %v116
  %v1296 = vunpack.c.h.b16 %v116
  %v1297 = vunpack.c.l.b16 %v117
  %v1298 = vunpack.c.h.b16 %v117
  %v1299 = vunpack.c.l.b16 %v118
  %v1300 = vunpack.c.h.b16 %v118
  %v1301 = vunpack.c.l.b16 %v119
  %v1302 = vunpack.c.h.b16 %v119
  %v1303 = vunpack.c.l.b16 %v120
  %v1304 = vunpack.c.h.b16 %v120
  %v1305 = vunpack.c.l.b16 %v121
  %v1306 = vunpack.c.h.b16 %v121
  %v1307 = vunpack.c.l.b16 %v122
  %v1308 = vunpack.c.h.b16 %v122
  %v1309 = vunpack.c.l.b16 %v123
  %v1310 = vunpack.c.h.b16 %v123
  %v1311 = vunpack.c.l.b16 %v124
  %v1312 = vunpack.c.h.b16 %v124
  %v1313 = vunpack.c.l.b16 %v125
  %v1314 = vunpack.c.h.b16 %v125
  %v1315 = vunpack.c.l.b16 %v126
  %v1316 = vunpack.c.h.b16 %v126
  %v1317 = vunpack.c.l.b16 %v127
  %v1318 = vunpack.c.h.b16 %v127
  %v1319 = vunpack.c.l.b16 %v128
  %v1320 = vunpack.c.h.b16 %v128
  %v1321 = vunpack.c.l.b16 %v129
  %v1322 = vunpack.c.h.b16 %v129
  %v1323 = vunpack.c.l.b16 %v130
  %v1324 = vunpack.c.h.b16 %v130
  %v1325 = vunpack.c.l.b16 %v131
  %v1326 = vunpack.c.h.b16 %v131
  %v1327 = vunpack.c.l.b16 %v132
  %v1328 = vunpack.c.h.b16 %v132
  %v1329 = vunpack.c.l.b16 %v133
  %v1330 = vunpack.c.h.b16 %v133
  %v1331 = vunpack.c.l.b16 %v134
  %v1332 = vunpack.c.h.b16 %v134
  %v1333 = vunpack.c.l.b16 %v135
  %v1334 = vunpack.c.h.b16 %v135
  %v1335 = vunpack.c.l.b16 %v136
  %v1336 = vunpack.c.h.b16 %v136
  %v1337 = vunpack.c.l.b16 %v137
  %v1338 = vunpack.c.h.b16 %v137
  %v1339 = vunpack.c.l.b16 %v138
  %v1340 = vunpack.c.h.b16 %v138
  %v1341 = vunpack.c.l.b16 %v139
  %v1342 = vunpack.c.h.b16 %v139
  %v1343 = vunpack.c.l.b16 %v140
  %v1344 = vunpack.c.h.b16 %v140
  %v1345 = vunpack.c.l.b16 %v141
  %v1346 = vunpack.c.h.b16 %v141
  %v1347 = vunpack.c.l.b16 %v142
  %v1348 = vunpack.c.h.b16 %v142
  %v1349 = vunpack.c.l.b16 %v143
  %v1350 = vunpack.c.h.b16 %v143
  %v1351 = vunpack.c.l.b16 %v144
  %v1352 = vunpack.c.h.b16 %v144
  %v1353 = vunpack.c.l.b16 %v145
  %v1354 = vunpack.c.h.b16 %v145
  %v1355 = vunpack.c.l.b16 %v146
  %v1356 = vunpack.c.h.b16 %v146
  %v1357 = vunpack.c.l.b16 %v147
  %v1358 = vunpack.c.h.b16 %v147
  %v1359 = vunpack.c.l.b16 %v148
  %v1360 = vunpack.c.h.b16 %v148
  %v1361 = vunpack.c.l.b16 %v149
  %v1362 = vunpack.c.h.b16 %v149
  %v1363 = vunpack.c.l.b16 %v150
  %v1364 = vunpack.c.h.b16 %v150
  %v1365 = vunpack.c.l.b16 %v151
  %v1366 = vunpack.c.h.b16 %v151
  %v1367 = vunpack.c.l.b16 %v152
  %v1368 = vunpack.c.h.b16 %v152
  %v1369 = vunpack.c.l.b16 %v153
  %v1370 = vunpack.c.h.b16 %v153
  %v1371 = vunpack.c.l.b16 %v154
  %v1372 = vunpack.c.h.b16 %v154
  %v1373 = vunpack.c.l.b16 %v155
  %v1374 = vunpack.c.h.b16 %v155
  %v1375 = vunpack.c.l.b16 %v156
  %v1376 = vunpack.c.h.b16 %v156
  %v1377 = vunpack.c.l.b16 %v157
  %v1378 = vunpack.c.h.b16 %v157
  %v1379 = vunpack.c.l.b16 %v158
  %v1380 = vunpack.c.h.b16 %v158
  %v1381 = vunpack.c.l.b16 %v159
  %v1382 = vunpack.c.h.b16 %v159
  %v1383 = vunpack.c.l.b16 %v160
  %v1384 = vunpack.c.h.b16 %v160
  %v1385 = vunpack.c.l.b16 %v161
  %v1386 = vunpack.c.h.b16 %v161
  %v1387 = vunpack.c.l.b16 %v162
  %v1388 = vunpack.c.h.b16 %v162
  %v1389 = vunpack.c.l.b16 %v163
  %v1390 = vunpack.c.h.b16 %v163
  %v1391 = vunpack.c.l.b16 %v164
  %v1392 = vunpack.c.h.b16 %v164
  %v1393 = vunpack.c.l.b16 %v165
  %v1394 = vunpack.c.h.b16 %v165
  %v1395 = vunpack.c.l.b16 %v166
  %v1396 = vunpack.c.h.b16 %v166
  %v1397 = vunpack.c.l.b16 %v167
  %v1398 = vunpack.c.h.b16 %v167
  %v1399 = vunpack.c.l.b16 %v168
  %v1400 = vunpack.c.h.b16 %v168
  %v1401 = vunpack.c.l.b16 %v169
  %v1402 = vunpack.c.h.b16 %v169
  %v1403 = vunpack.c.l.b16 %v170
  %v1404 = vunpack.c.h.b16 %v170
  %v1405 = vunpack.c.l.b16 %v171
  %v1406 = vunpack.c.h.b16 %v171
  %v1407 = vunpack.c.l.b16 %v172
  %v1408 = vunpack.c.h.b16 %v172
  %v1409 = vunpack.c.l.b16 %v173
  %v1410 = vunpack.c.h.b16 %v173
  %v1411 = vunpack.c.l.b16 %v174
  %v1412 = vunpack.c.h.b16 %v174
  %v1413 = vunpack.c.l.b16 %v175
  %v1414 = vunpack.c.h.b16 %v175
  %v1415 = vunpack.c.l.b16 %v176
  %v1416 = vunpack.c.h.b16 %v176
  %v1417 = vunpack.c.l.b16 %v177
  %v1418 = vunpack.c.h.b16 %v177
  %v1419 = vunpack.c.l.b16 %v178
  %v1420 = vunpack.c.h.b16 %v178
  %v1421 = vunpack.c.l.b16 %v179
  %v1422 = vunpack.c.h.b16 %v179
  %v1423 = vunpack.c.l.b16 %v180
  %v1424 = vunpack.c.h.b16 %v180
  %v1425 = vunpack.c.l.b16 %v181
  %v1426 = vunpack.c.h.b16 %v181
  %v1427 = vunpack.c.l.b16 %v182
  %v1428 = vunpack.c.h.b16 %v182
  %v1429 = vunpack.c.l.b16 %v183
  %v1430 = vunpack.c.h.b16 %v183
  %v1431 = vunpack.c.l.b16 %v184
  %v1432 = vunpack.c.h.b16 %v184
  %v1433 = vunpack.c.l.b16 %v185
  %v1434 = vunpack.c.h.b16 %v185
  %v1435 = vunpack.c.l.b16 %v186
  %v1436 = vunpack.c.h.b16 %v186
  %v1437 = vunpack.c.l.b16 %v187
  %v1438 = vunpack.c.h.b16 %v187
  %v1439 = vunpack.c.l.b16 %v188
  %v1440 = vunpack.c.h.b16 %v188
  %v1441 = vunpack.c.l.b16 %v189
  %v1442 = vunpack.c.h.b16 %v189
  %v1443 = vunpack.c.l.b16 %v190
  %v1444 = vunpack.c.h.b16 %v190
  %v1445 = vunpack.c.l.b16 %v191
  %v1446 = vunpack.c.h.b16 %v191
  %v1447 = vunpack.c.l.b16 %v192
  %v1448 = vunpack.c.h.b16 %v192
  %v1449 = vunpack.c.l.b16 %v193
  %v1450 = vunpack.c.h.b16 %v193
  %v1451 = vunpack.c.l.b16 %v194
  %v1452 = vunpack.c.h.b16 %v194
  %v1453 = vunpack.c.l.b16 %v195
  %v1454 = vunpack.c.h.b16 %v195
  %v1455 = vunpack.c.l.b16 %v196
  %v1456 = vunpack.c.h.b16 %v196
  %v1457 = vunpack.c.l.b16 %v197
  %v1458 = vunpack.c.h.b16 %v197
  %v1459 = vunpack.c.l.b16 %v198
  %v1460 = vunpack.c.h.b16 %v198
  %v1461 = vunpack.c.l.b16 %v199
  %v1462 = vunpack.c.h.b16 %v199
  %v1463 = vunpack.c.l.b16 %v200
  %v1464 = vunpack.c.h.b16 %v200
  %v1465 = vunpack.c.l.b16 %v201
  %v1466 = vunpack.c.h.b16 %v201
  %v1467 = vunpack.c.l.b16 %v202
  %v1468 = vunpack.c.h.b16 %v202
  %v1469 = vunpack.c.l.b16 %v203
  %v1470 = vunpack.c.h.b16 %v203
  %v1471 = vunpack.c.l.b16 %v204
  %v1472 = vunpack.c.h.b16 %v204
  %v1473 = vunpack.c.l.b16 %v205
  %v1474 = vunpack.c.h.b16 %v205
  %v1475 = vunpack.c.l.b16 %v206
  %v1476 = vunpack.c.h.b16 %v206
  %v1477 = vunpack.c.l.b16 %v207
  %v1478 = vunpack.c.h.b16 %v207
  %v1479 = vunpack.c.l.b16 %v208
  %v1480 = vunpack.c.h.b16 %v208
  %v1481 = vunpack.c.l.b16 %v209
  %v1482 = vunpack.c.h.b16 %v209
  %v1483 = vunpack.c.l.b16 %v210
  %v1484 = vunpack.c.h.b16 %v210
  %v1485 = vunpack.c.l.b16 %v211
  %v1486 = vunpack.c.h.b16 %v211
  %v1487 = vunpack.c.l.b16 %v212
  %v1488 = vunpack.c.h.b16 %v212
  %v1489 = vunpack.c.l.b16 %v213
  %v1490 = vunpack.c.h.b16 %v213
  %v1491 = vunpack.c.l.b16 %v214
  %v1492 = vunpack.c.h.b16 %v214
  %v1493 = vunpack.c.l.b16 %v215
  %v1494 = vunpack.c.h.b16 %v215
  %v1495 = vunpack.c.l.b16 %v216
  %v1496 = vunpack.c.h.b16 %v216
  %v1497 = vunpack.c.l.b16 %v217
  %v1498 = vunpack.c.h.b16 %v217
  %v1499 = vunpack.c.l.b16 %v218
  %v1500 = vunpack.c.h.b16 %v218
  %v1501 = vunpack.c.l.b16 %v219
  %v1502 = vunpack.c.h.b16 %v219
  %v1503 = vunpack.c.l.b16 %v220
  %v1504 = vunpack.c.h.b16 %v220
  %v1505 = vunpack.c.l.b16 %v221
  %v1506 = vunpack.c.h.b16 %v221
  %v1507 = vunpack.c.l.b16 %v222
  %v1508 = vunpack.c.h.b16 %v222
  %v1509 = vunpack.c.l.b16 %v223
  %v1510 = vunpack.c.h.b16 %v223
  %v1511 = vunpack.c.l.b16 %v224
  %v1512 = vunpack.c.h.b16 %v224
  %v1513 = vunpack.c.l.b16 %v225
  %v1514 = vunpack.c.h.b16 %v225
  %v1515 = vunpack.c.l.b16 %v226
  %v1516 = vunpack.c.h.b16 %v226
  %v1517 = vunpack.c.l.b16 %v227
  %v1518 = vunpack.c.h.b16 %v227
  %v1519 = vunpack.c.l.b16 %v228
  %v1520 = vunpack.c.h.b16 %v228
  %v1521 = vunpack.c.l.b16 %v229
  %v1522 = vunpack.c.h.b16 %v229
  %v1523 = vunpack.c.l.b16 %v230
  %v1524 = vunpack.c.h.b16 %v230
  %v1525 = vunpack.c.l.b16 %v231
  %v1526 = vunpack.c.h.b16 %v231
  %v1527 = vunpack.c.l.b16 %v232
  %v1528 = vunpack.c.h.b16 %v232
  %v1529 = vunpack.c.l.b16 %v233
  %v1530 = vunpack.c.h.b16 %v233
  %v1531 = vunpack.c.l.b16 %v234
  %v1532 = vunpack.c.h.b16 %v234
  %v1533 = vunpack.c.l.b16 %v235
  %v1534 = vunpack.c.h.b16 %v235
  %v1535 = vunpack.c.l.b16 %v236
  %v1536 = vunpack.c.h.b16 %v236
  %v1537 = vunpack.c.l.b16 %v237
  %v1538 = vunpack.c.h.b16 %v237
  %v1539 = vunpack.c.l.b16 %v238
  %v1540 = vunpack.c.h.b16 %v238
  %v1541 = vunpack.c.l.b16 %v239
  %v1542 = vunpack.c.h.b16 %v239
  %v1543 = vunpack.c.l.b16 %v240
  %v1544 = vunpack.c.h.b16 %v240
  %v1545 = vunpack.c.l.b16 %v241
  %v1546 = vunpack.c.h.b16 %v241
  %v1547 = vunpack.c.l.b16 %v242
  %v1548 = vunpack.c.h.b16 %v242
  %v1549 = vunpack.c.l.b16 %v243
  %v1550 = vunpack.c.h.b16 %v243
  %v1551 = vunpack.c.l.b16 %v244
  %v1552 = vunpack.c.h.b16 %v244
  %v1553 = vunpack.c.l.b16 %v245
  %v1554 = vunpack.c.h.b16 %v245
  %v1555 = vunpack.c.l.b16 %v246
  %v1556 = vunpack.c.h.b16 %v246
  %v1557 = vunpack.c.l.b16 %v247
  %v1558 = vunpack.c.h.b16 %v247
  %v1559 = vunpack.c.l.b16 %v248
  %v1560 = vunpack.c.h.b16 %v248
  %v1561 = vunpack.c.l.b16 %v249
  %v1562 = vunpack.c.h.b16 %v249
  %v1563 = vunpack.c.l.b16 %v250
  %v1564 = vunpack.c.h.b16 %v250
  %v1565 = vunpack.c.l.b16 %v251
  %v1566 = vunpack.c.h.b16 %v251
  %v1567 = vunpack.c.l.b16 %v252
  %v1568 = vunpack.c.h.b16 %v252
  %v1569 = vunpack.c.l.b16 %v253
  %v1570 = vunpack.c.h.b16 %v253
  %v1571 = vunpack.c.l.b16 %v254
  %v1572 = vunpack.c.h.b16 %v254
  %v1573 = vunpack.c.l.b16 %v255
  %v1574 = vunpack.c.h.b16 %v255
  %v1575 = vunpack.c.l.b16 %v256
  %v1576 = vunpack.c.h.b16 %v256
  %v1577 = vunpack.c.l.b16 %v257
  %v1578 = vunpack.c.h.b16 %v257
  %v1579 = vunpack.c.l.b16 %v258
  %v1580 = vunpack.c.h.b16 %v258
  %v1581 = vunpack.c.l.b16 %v259
  %v1582 = vunpack.c.h.b16 %v259
  %v1583 = vunpack.c.l.b16 %v260
  %v1584 = vunpack.c.h.b16 %v260
  %v1585 = vunpack.c.l.b16 %v261
  %v1586 = vunpack.c.h.b16 %v261
  %v1587 = vunpack.c.l.b16 %v262
  %v1588 = vunpack.c.h.b16 %v262
  %v1589 = vunpack.c.l.b16 %v263
  %v1590 = vunpack.c.h.b16 %v263
  %v1591 = vunpack.c.l.b16 %v264
  %v1592 = vunpack.c.h.b16 %v264
  %v1593 = vunpack.c.l.b16 %v265
  %v1594 = vunpack.c.h.b16 %v265
  %v1595 = vunpack.c.l.b16 %v266
  %v1596 = vunpack.c.h.b16 %v266
  %v1597 = vunpack.c.l.b16 %v267
  %v1598 = vunpack.c.h.b16 %v267
  %v1599 = vunpack.c.l.b16 %v268
  %v1600 = vunpack.c.h.b16 %v268
  %v1601 = vunpack.c.l.b16 %v269
  %v1602 = vunpack.c.h.b16 %v269
  %v1603 = vunpack.c.l.b16 %v270
  %v1604 = vunpack.c.h.b16 %v270
  %v1605 = vunpack.c.l.b16 %v271
  %v1606 = vunpack.c.h.b16 %v271
  %v1607 = vunpack.c.l.b16 %v272
  %v1608 = vunpack.c.h.b16 %v272
  %v1609 = vunpack.c.l.b16 %v273
  %v1610 = vunpack.c.h.b16 %v273
  %v1611 = vunpack.c.l.b16 %v274
  %v1612 = vunpack.c.h.b16 %v274
  %v1613 = vunpack.c.l.b16 %v275
  %v1614 = vunpack.c.h.b16 %v275
  %v1615 = vunpack.c.l.b16 %v276
  %v1616 = vunpack.c.h.b16 %v276
  %v1617 = vunpack.c.l.b16 %v277
  %v1618 = vunpack.c.h.b16 %v277
  %v1619 = vunpack.c.l.b16 %v278
  %v1620 = vunpack.c.h.b16 %v278
  %v1621 = vunpack.c.l.b16 %v279
  %v1622 = vunpack.c.h.b16 %v279
  %v1623 = vunpack.c.l.b16 %v280
  %v1624 = vunpack.c.h.b16 %v280
  %v1625 = vunpack.c.l.b16 %v281
  %v1626 = vunpack.c.h.b16 %v281
  %v1627 = vunpack.c.l.b16 %v282
  %v1628 = vunpack.c.h.b16 %v282
  %v1629 = vunpack.c.l.b16 %v283
  %v1630 = vunpack.c.h.b16 %v283
  %v1631 = vunpack.c.l.b16 %v284
  %v1632 = vunpack.c.h.b16 %v284
  %v1633 = vunpack.c.l.b16 %v285
  %v1634 = vunpack.c.h.b16 %v285
  %v1635 = vunpack.c.l.b16 %v286
  %v1636 = vunpack.c.h.b16 %v286
  %v1637 = vunpack.c.l.b16 %v287
  %v1638 = vunpack.c.h.b16 %v287
  %v1639 = vunpack.c.l.b16 %v288
  %v1640 = vunpack.c.h.b16 %v288
  %v1641 = vunpack.c.l.b16 %v289
  %v1642 = vunpack.c.h.b16 %v289
  %v1643 = vunpack.c.l.b16 %v290
  %v1644 = vunpack.c.h.b16 %v290
  %v1645 = vunpack.c.l.b16 %v291
  %v1646 = vunpack.c.h.b16 %v291
  %v1647 = vunpack.c.l.b16 %v292
  %v1648 = vunpack.c.h.b16 %v292
  %v1649 = vunpack.c.l.b16 %v293
  %v1650 = vunpack.c.h.b16 %v293
  %v1651 = vunpack.c.l.b16 %v294
  %v1652 = vunpack.c.h.b16 %v294
  %v1653 = vunpack.c.l.b16 %v295
  %v1654 = vunpack.c.h.b16 %v295
  %v1655 = vunpack.c.l.b16 %v296
  %v1656 = vunpack.c.h.b16 %v296
  %v1657 = vunpack.c.l.b16 %v297
  %v1658 = vunpack.c.h.b16 %v297
  %v1659 = vunpack.c.l.b16 %v298
  %v1660 = vunpack.c.h.b16 %v298
  %v1661 = vunpack.c.l.b16 %v299
  %v1662 = vunpack.c.h.b16 %v299
  %v1663 = vunpack.c.l.b16 %v300
  %v1664 = vunpack.c.h.b16 %v300
  %v1665 = vunpack.c.l.b16 %v301
  %v1666 = vunpack.c.h.b16 %v301
  %v1667 = vunpack.c.l.b16 %v302
  %v1668 = vunpack.c.h.b16 %v302
  %v1669 = vunpack.c.l.b16 %v303
  %v1670 = vunpack.c.h.b16 %v303
  %v1671 = vunpack.c.l.b16 %v304
  %v1672 = vunpack.c.h.b16 %v304
  %v1673 = vunpack.c.l.b16 %v305
  %v1674 = vunpack.c.h.b16 %v305
  %v1675 = vunpack.c.l.b16 %v306
  %v1676 = vunpack.c.h.b16 %v306
  %v1677 = vunpack.c.l.b16 %v307
  %v1678 = vunpack.c.h.b16 %v307
  %v1679 = vunpack.c.l.b16 %v308
  %v1680 = vunpack.c.h.b16 %v308
  %v1681 = vunpack.c.l.b16 %v309
  %v1682 = vunpack.c.h.b16 %v309
  %v1683 = vunpack.c.l.b16 %v310
  %v1684 = vunpack.c.h.b16 %v310
  %v1685 = vunpack.c.l.b16 %v311
  %v1686 = vunpack.c.h.b16 %v311
  %v1687 = vunpack.c.l.b16 %v312
  %v1688 = vunpack.c.h.b16 %v312
  %v1689 = vunpack.c.l.b16 %v313
  %v1690 = vunpack.c.h.b16 %v313
  %v1691 = vunpack.c.l.b16 %v314
  %v1692 = vunpack.c.h.b16 %v314
  %v1693 = vunpack.c.l.b16 %v315
  %v1694 = vunpack.c.h.b16 %v315
  %v1695 = vunpack.c.l.b16 %v316
  %v1696 = vunpack.c.h.b16 %v316
  %v1697 = vunpack.c.l.b16 %v317
  %v1698 = vunpack.c.h.b16 %v317
  %v1699 = vunpack.c.l.b16 %v318
  %v1700 = vunpack.c.h.b16 %v318
  %v1701 = vunpack.c.l.b16 %v319
  %v1702 = vunpack.c.h.b16 %v319
  %v1703 = vunpack.c.l.b16 %v320
  %v1704 = vunpack.c.h.b16 %v320
  %v1705 = vunpack.c.l.b16 %v321
  %v1706 = vunpack.c.h.b16 %v321
  %v1707 = vunpack.c.l.b16 %v322
  %v1708 = vunpack.c.h.b16 %v322
  %v1709 = vunpack.c.l.b16 %v323
  %v1710 = vunpack.c.h.b16 %v323
  %v1711 = vunpack.c.l.b16 %v324
  %v1712 = vunpack.c.h.b16 %v324
  %v1713 = vunpack.c.l.b16 %v325
  %v1714 = vunpack.c.h.b16 %v325
  %v1715 = vunpack.c.l.b16 %v326
  %v1716 = vunpack.c.h.b16 %v326
  %v1717 = vunpack.c.l.b16 %v327
  %v1718 = vunpack.c.h.b16 %v327
  %v1719 = vunpack.c.l.b16 %v328
  %v1720 = vunpack.c.h.b16 %v328
  %v1721 = vunpack.c.l.b16 %v329
  %v1722 = vunpack.c.h.b16 %v329
  %v1723 = vunpack.c.l.b16 %v330
  %v1724 = vunpack.c.h.b16 %v330
  %v1725 = vunpack.c.l.b16 %v331
  %v1726 = vunpack.c.h.b16 %v331
  %v1727 = vunpack.c.l.b16 %v332
  %v1728 = vunpack.c.h.b16 %v332
  %v1729 = vunpack.c.l.b16 %v333
  %v1730 = vunpack.c.h.b16 %v333
  %v1731 = vunpack.c.l.b16 %v334
  %v1732 = vunpack.c.h.b16 %v334
  %v1733 = vunpack.c.l.b16 %v335
  %v1734 = vunpack.c.h.b16 %v335
  %v1735 = vunpack.c.l.b16 %v336
  %v1736 = vunpack.c.h.b16 %v336
  %v1737 = vunpack.c.l.b16 %v337
  %v1738 = vunpack.c.h.b16 %v337
  %v1739 = vunpack.c.l.b16 %v338
  %v1740 = vunpack.c.h.b16 %v338
  %v1741 = vunpack.c.l.b16 %v339
  %v1742 = vunpack.c.h.b16 %v339
  %v1743 = vunpack.c.l.b16 %v340
  %v1744 = vunpack.c.h.b16 %v340
  %v1745 = vunpack.c.l.b16 %v341
  %v1746 = vunpack.c.h.b16 %v341
  %v1747 = vunpack.c.l.b16 %v342
  %v1748 = vunpack.c.h.b16 %v342
  %v1749 = vunpack.c.l.b16 %v343
  %v1750 = vunpack.c.h.b16 %v343
  %v1751 = vunpack.c.l.b16 %v344
  %v1752 = vunpack.c.h.b16 %v344
  %v1753 = vunpack.c.l.b16 %v345
  %v1754 = vunpack.c.h.b16 %v345
  %v1755 = vunpack.c.l.b16 %v346
  %v1756 = vunpack.c.h.b16 %v346
  %v1757 = vunpack.c.l.b16 %v347
  %v1758 = vunpack.c.h.b16 %v347
  %v1759 = vunpack.c.l.b16 %v348
  %v1760 = vunpack.c.h.b16 %v348
  %v1761 = vunpack.c.l.b16 %v349
  %v1762 = vunpack.c.h.b16 %v349
  %v1763 = vunpack.c.l.b16 %v350
  %v1764 = vunpack.c.h.b16 %v350
  %v1765 = vunpack.c.l.b16 %v351
  %v1766 = vunpack.c.h.b16 %v351
  %v1767 = vunpack.c.l.b16 %v352
  %v1768 = vunpack.c.h.b16 %v352
  %v1769 = vunpack.c.l.b16 %v353
  %v1770 = vunpack.c.h.b16 %v353
  %v1771 = vunpack.c.l.b16 %v354
  %v1772 = vunpack.c.h.b16 %v354
  %v1773 = vunpack.c.l.b16 %v355
  %v1774 = vunpack.c.h.b16 %v355
  %v1775 = vunpack.c.l.b16 %v356
  %v1776 = vunpack.c.h.b16 %v356
  %v1777 = vunpack.c.l.b16 %v357
  %v1778 = vunpack.c.h.b16 %v357
  %v1779 = vunpack.c.l.b16 %v358
  %v1780 = vunpack.c.h.b16 %v358
  %v1781 = vunpack.c.l.b16 %v359
  %v1782 = vunpack.c.h.b16 %v359
  %v1783 = vunpack.c.l.b16 %v360
  %v1784 = vunpack.c.h.b16 %v360
  %v1785 = vunpack.c.l.b16 %v361
  %v1786 = vunpack.c.h.b16 %v361
  %v1787 = vunpack.c.l.b16 %v362
  %v1788 = vunpack.c.h.b16 %v362
  %v1789 = vunpack.c.l.b16 %v363
  %v1790 = vunpack.c.h.b16 %v363
  %v1791 = vunpack.c.l.b16 %v364
  %v1792 = vunpack.c.h.b16 %v364
  %v1793 = vunpack.c.l.b16 %v365
  %v1794 = vunpack.c.h.b16 %v365
  %v1795 = vunpack.c.l.b16 %v366
  %v1796 = vunpack.c.h.b16 %v366
  %v1797 = vunpack.c.l.b16 %v367
  %v1798 = vunpack.c.h.b16 %v367
  %v1799 = vunpack.c.l.b16 %v368
  %v1800 = vunpack.c.h.b16 %v368
  %v1801 = vunpack.c.l.b16 %v369
  %v1802 = vunpack.c.h.b16 %v369
  %v1803 = vunpack.c.l.b16 %v370
  %v1804 = vunpack.c.h.b16 %v370
  %v1805 = vunpack.c.l.b16 %v371
  %v1806 = vunpack.c.h.b16 %v371
  %v1807 = vunpack.c.l.b16 %v372
  %v1808 = vunpack.c.h.b16 %v372
  %v1809 = vunpack.c.l.b16 %v373
  %v1810 = vunpack.c.h.b16 %v373
  %v1811 = vunpack.c.l.b16 %v374
  %v1812 = vunpack.c.h.b16 %v374
  %v1813 = vunpack.c.l.b16 %v375
  %v1814 = vunpack.c.h.b16 %v375
  %v1815 = vunpack.c.l.b16 %v376
  %v1816 = vunpack.c.h.b16 %v376
  %v1817 = vunpack.c.l.b16 %v377
  %v1818 = vunpack.c.h.b16 %v377
  %v1819 = vunpack.c.l.b16 %v378
  %v1820 = vunpack.c.h.b16 %v378
  %v1821 = vunpack.c.l.b16 %v379
  %v1822 = vunpack.c.h.b16 %v379
  %v1823 = vunpack.c.l.b16 %v380
  %v1824 = vunpack.c.h.b16 %v380
  %v1825 = vunpack.c.l.b16 %v381
  %v1826 = vunpack.c.h.b16 %v381
  %v1827 = vunpack.c.l.b16 %v382
  %v1828 = vunpack.c.h.b16 %v382
  %v1829 = vunpack.c.l.b16 %v383
  %v1830 = vunpack.c.h.b16 %v383
  %v1831 = vunpack.c.l.b16 %v384
  %v1832 = vunpack.c.h.b16 %v384
  %v1833 = vunpack.c.l.b16 %v385
  %v1834 = vunpack.c.h.b16 %v385
  %v1835 = vunpack.c.l.b16 %v386
  %v1836 = vunpack.c.h.b16 %v386
  %v1837 = vunpack.c.l.b16 %v387
  %v1838 = vunpack.c.h.b16 %v387
  %v1839 = vunpack.c.l.b16 %v388
  %v1840 = vunpack.c.h.b16 %v388
  %v1841 = vunpack.c.l.b16 %v389
  %v1842 = vunpack.c.h.b16 %v389
  %v1843 = vunpack.c.l.b16 %v390
  %v1844 = vunpack.c.h.b16 %v390
  %v1845 = vunpack.c.l.b16 %v391
  %v1846 = vunpack.c.h.b16 %v391
  %v1847 = vunpack.c.l.b16 %v392
  %v1848 = vunpack.c.h.b16 %v392
  %v1849 = vunpack.c.l.b16 %v393
  %v1850 = vunpack.c.h.b16 %v393
  %v1851 = vunpack.c.l.b16 %v394
  %v1852 = vunpack.c.h.b16 %v394
  %v1853 = vunpack.c.l.b16 %v395
  %v1854 = vunpack.c.h.b16 %v395
  %v1855 = vunpack.c.l.b16 %v396
  %v1856 = vunpack.c.h.b16 %v396
  %v1857 = vunpack.c.l.b16 %v397
  %v1858 = vunpack.c.h.b16 %v397
  %v1859 = vunpack.c.l.b16 %v398
  %v1860 = vunpack.c.h.b16 %v398
  %v1861 = vunpack.c.l.b16 %v399
  %v1862 = vunpack.c.h.b16 %v399
  %v1863 = vunpack.c.l.b16 %v400
  %v1864 = vunpack.c.h.b16 %v400
  %v1865 = vunpack.c.l.b16 %v401
  %v1866 = vunpack.c.h.b16 %v401
  %v1867 = vunpack.c.l.b16 %v402
  %v1868 = vunpack.c.h.b16 %v402
  %v1869 = vunpack.c.l.b16 %v403
  %v1870 = vunpack.c.h.b16 %v403
  %v1871 = vunpack.c.l.b16 %v404
  %v1872 = vunpack.c.h.b16 %v404
  %v1873 = vunpack.c.l.b16 %v405
  %v1874 = vunpack.c.h.b16 %v405
  %v1875 = vunpack.c.l.b16 %v406
  %v1876 = vunpack.c.h.b16 %v406
  %v1877 = vunpack.c.l.b16 %v407
  %v1878 = vunpack.c.h.b16 %v407
  %v1879 = vunpack.c.l.b16 %v408
  %v1880 = vunpack.c.h.b16 %v408
  %v1881 = vunpack.c.l.b16 %v409
  %v1882 = vunpack.c.h.b16 %v409
  %v1883 = vunpack.c.l.b16 %v410
  %v1884 = vunpack.c.h.b16 %v410
  %v1885 = vunpack.c.l.b16 %v411
  %v1886 = vunpack.c.h.b16 %v411
  %v1887 = vunpack.c.l.b16 %v412
  %v1888 = vunpack.c.h.b16 %v412
  %v1889 = vunpack.c.l.b16 %v413
  %v1890 = vunpack.c.h.b16 %v413
  %v1891 = vunpack.c.l.b16 %v414
  %v1892 = vunpack.c.h.b16 %v414
  %v1893 = vunpack.c.l.b16 %v415
  %v1894 = vunpack.c.h.b16 %v415
  %v1895 = vunpack.c.l.b16 %v416
  %v1896 = vunpack.c.h.b16 %v416
  %v1897 = vunpack.c.l.b16 %v417
  %v1898 = vunpack.c.h.b16 %v417
  %v1899 = vunpack.c.l.b16 %v418
  %v1900 = vunpack.c.h.b16 %v418
  %v1901 = vunpack.c.l.b16 %v419
  %v1902 = vunpack.c.h.b16 %v419
  %v1903 = vunpack.c.l.b16 %v420
  %v1904 = vunpack.c.h.b16 %v420
  %v1905 = vunpack.c.l.b16 %v421
  %v1906 = vunpack.c.h.b16 %v421
  %v1907 = vunpack.c.l.b16 %v422
  %v1908 = vunpack.c.h.b16 %v422
  %v1909 = vunpack.c.l.b16 %v423
  %v1910 = vunpack.c.h.b16 %v423
  %v1911 = vunpack.c.l.b16 %v424
  %v1912 = vunpack.c.h.b16 %v424
  %v1913 = vunpack.c.l.b16 %v425
  %v1914 = vunpack.c.h.b16 %v425
  %v1915 = vunpack.c.l.b16 %v426
  %v1916 = vunpack.c.h.b16 %v426
  %v1917 = vunpack.c.l.b16 %v427
  %v1918 = vunpack.c.h.b16 %v427
  %v1919 = vunpack.c.l.b16 %v428
  %v1920 = vunpack.c.h.b16 %v428
  %v1921 = vunpack.c.l.b16 %v429
  %v1922 = vunpack.c.h.b16 %v429
  %v1923 = vunpack.c.l.b16 %v430
  %v1924 = vunpack.c.h.b16 %v430
  %v1925 = vunpack.c.l.b16 %v431
  %v1926 = vunpack.c.h.b16 %v431
  %v1927 = vunpack.c.l.b16 %v432
  %v1928 = vunpack.c.h.b16 %v432
  %v1929 = vunpack.c.l.b16 %v433
  %v1930 = vunpack.c.h.b16 %v433
  %v1931 = vunpack.c.l.b16 %v434
  %v1932 = vunpack.c.h.b16 %v434
  %v1933 = vunpack.c.l.b16 %v435
  %v1934 = vunpack.c.h.b16 %v435
  %v1935 = vunpack.c.l.b16 %v436
  %v1936 = vunpack.c.h.b16 %v436
  %v1937 = vunpack.c.l.b16 %v437
  %v1938 = vunpack.c.h.b16 %v437
  %v1939 = vunpack.c.l.b16 %v438
  %v1940 = vunpack.c.h.b16 %v438
  %v1941 = vunpack.c.l.b16 %v439
  %v1942 = vunpack.c.h.b16 %v439
  %v1943 = vunpack.c.l.b16 %v440
  %v1944 = vunpack.c.h.b16 %v440
  %v1945 = vunpack.c.l.b16 %v441
  %v1946 = vunpack.c.h.b16 %v441
  %v1947 = vunpack.c.l.b16 %v442
  %v1948 = vunpack.c.h.b16 %v442
  %v1949 = vunpack.c.l.b16 %v443
  %v1950 = vunpack.c.h.b16 %v443
  %v1951 = vunpack.c.l.b16 %v444
  %v1952 = vunpack.c.h.b16 %v444
  %v1953 = vunpack.c.l.b16 %v445
  %v1954 = vunpack.c.h.b16 %v445
  %v1955 = vunpack.c.l.b16 %v446
  %v1956 = vunpack.c.h.b16 %v446
  %v1957 = vunpack.c.l.b16 %v447
  %v1958 = vunpack.c.h.b16 %v447
  %v1959 = vunpack.c.l.b16 %v448
  %v1960 = vunpack.c.h.b16 %v448
  %v1961 = vunpack.c.l.b16 %v449
  %v1962 = vunpack.c.h.b16 %v449
  %v1963 = vunpack.c.l.b16 %v450
  %v1964 = vunpack.c.h.b16 %v450
  %v1965 = vunpack.c.l.b16 %v451
  %v1966 = vunpack.c.h.b16 %v451
  %v1967 = vunpack.c.l.b16 %v452
  %v1968 = vunpack.c.h.b16 %v452
  %v1969 = vunpack.c.l.b16 %v453
  %v1970 = vunpack.c.h.b16 %v453
  %v1971 = vunpack.c.l.b16 %v454
  %v1972 = vunpack.c.h.b16 %v454
  %v1973 = vunpack.c.l.b16 %v455
  %v1974 = vunpack.c.h.b16 %v455
  %v1975 = vunpack.c.l.b16 %v456
  %v1976 = vunpack.c.h.b16 %v456
  %v1977 = vunpack.c.l.b16 %v457
  %v1978 = vunpack.c.h.b16 %v457
  %v1979 = vunpack.c.l.b16 %v458
  %v1980 = vunpack.c.h.b16 %v458
  %v1981 = vunpack.c.l.b16 %v459
  %v1982 = vunpack.c.h.b16 %v459
  %v1983 = vunpack.c.l.b16 %v460
  %v1984 = vunpack.c.h.b16 %v460
  %v1985 = vunpack.c.l.b16 %v461
  %v1986 = vunpack.c.h.b16 %v461
  %v1987 = vunpack.c.l.b16 %v462
  %v1988 = vunpack.c.h.b16 %v462
  %v1989 = vunpack.c.l.b16 %v463
  %v1990 = vunpack.c.h.b16 %v463
  %v1991 = vunpack.c.l.b16 %v464
  %v1992 = vunpack.c.h.b16 %v464
  %v1993 = vunpack.c.l.b16 %v465
  %v1994 = vunpack.c.h.b16 %v465
  %v1995 = vunpack.c.l.b16 %v466
  %v1996 = vunpack.c.h.b16 %v466
  %v1997 = vunpack.c.l.b16 %v467
  %v1998 = vunpack.c.h.b16 %v467
  %v1999 = vunpack.c.l.b16 %v468
  %v2000 = vunpack.c.h.b16 %v468
  %v2001 = vunpack.c.l.b16 %v469
  %v2002 = vunpack.c.h.b16 %v469
  %v2003 = vunpack.c.l.b16 %v470
  %v2004 = vunpack.c.h.b16 %v470
  %v2005 = vunpack.c.l.b16 %v471
  %v2006 = vunpack.c.h.b16 %v471
  %v2007 = vunpack.c.l.b16 %v472
  %v2008 = vunpack.c.h.b16 %v472
  %v2009 = vunpack.c.l.b16 %v473
  %v2010 = vunpack.c.h.b16 %v473
  %v2011 = vunpack.c.l.b16 %v474
  %v2012 = vunpack.c.h.b16 %v474
  %v2013 = vunpack.c.l.b16 %v475
  %v2014 = vunpack.c.h.b16 %v475
  %v2015 = vunpack.c.l.b16 %v476
  %v2016 = vunpack.c.h.b16 %v476
  %v2017 = vunpack.c.l.b16 %v477
  %v2018 = vunpack.c.h.b16 %v477
  %v2019 = vunpack.c.l.b16 %v478
  %v2020 = vunpack.c.h.b16 %v478
  %v2021 = vunpack.c.l.b16 %v479
  %v2022 = vunpack.c.h.b16 %v479
  %v2023 = vunpack.c.l.b16 %v480
  %v2024 = vunpack.c.h.b16 %v480
  %v2025 = vunpack.c.l.b16 %v481
  %v2026 = vunpack.c.h.b16 %v481
  %v2027 = vunpack.c.l.b16 %v482
  %v2028 = vunpack.c.h.b16 %v482
  %v2029 = vunpack.c.l.b16 %v483
  %v2030 = vunpack.c.h.b16 %v483
  %v2031 = vunpack.c.l.b16 %v484
  %v2032 = vunpack.c.h.b16 %v484
  %v2033 = vunpack.c.l.b16 %v485
  %v2034 = vunpack.c.h.b16 %v485
  %v2035 = vunpack.c.l.b16 %v486
  %v2036 = vunpack.c.h.b16 %v486
  %v2037 = vunpack.c.l.b16 %v487
  %v2038 = vunpack.c.h.b16 %v487
  %v2039 = vunpack.c.l.b16 %v488
  %v2040 = vunpack.c.h.b16 %v488
  %v2041 = vunpack.c.l.b16 %v489
  %v2042 = vunpack.c.h.b16 %v489
  %v2043 = vunpack.c.l.b16 %v490
  %v2044 = vunpack.c.h.b16 %v490
  %v2045 = vunpack.c.l.b16 %v491
  %v2046 = vunpack.c.h.b16 %v491
  %v2047 = vunpack.c.l.b16 %v492
  %v2048 = vunpack.c.h.b16 %v492
  %v2049 = vunpack.c.l.b16 %v493
  %v2050 = vunpack.c.h.b16 %v493
  %v2051 = vunpack.c.l.b16 %v494
  %v2052 = vunpack.c.h.b16 %v494
  %v2053 = vunpack.c.l.b16 %v495
  %v2054 = vunpack.c.h.b16 %v495
  %v2055 = vunpack.c.l.b16 %v496
  %v2056 = vunpack.c.h.b16 %v496
  %v2057 = vunpack.c.l.b16 %v497
  %v2058 = vunpack.c.h.b16 %v497
  %v2059 = vunpack.c.l.b16 %v498
  %v2060 = vunpack.c.h.b16 %v498
  %v2061 = vunpack.c.l.b16 %v499
  %v2062 = vunpack.c.h.b16 %v499
  %v2063 = vunpack.c.l.b16 %v500
  %v2064 = vunpack.c.h.b16 %v500
  %v2065 = vunpack.c.l.b16 %v501
  %v2066 = vunpack.c.h.b16 %v501
  %v2067 = vunpack.c.l.b16 %v502
  %v2068 = vunpack.c.h.b16 %v502
  %v2069 = vunpack.c.l.b16 %v503
  %v2070 = vunpack.c.h.b16 %v503
  %v2071 = vunpack.c.l.b16 %v504
  %v2072 = vunpack.c.h.b16 %v504
  %v2073 = vunpack.c.l.b16 %v505
  %v2074 = vunpack.c.h.b16 %v505
  %v2075 = vunpack.c.l.b16 %v506
  %v2076 = vunpack.c.h.b16 %v506
  %v2077 = vunpack.c.l.b16 %v507
  %v2078 = vunpack.c.h.b16 %v507
  %v2079 = vunpack.c.l.b16 %v508
  %v2080 = vunpack.c.h.b16 %v508
  %v2081 = vunpack.c.l.b16 %v509
  %v2082 = vunpack.c.h.b16 %v509
  %v2083 = vunpack.c.l.b16 %v510
  %v2084 = vunpack.c.h.b16 %v510
  %v2085 = vunpack.c.l.b16 %v511
  %v2086 = vunpack.c.h.b16 %v511
  %v2087 = vunpack.c.l.b16 %v512
  %v2088 = vunpack.c.h.b16 %v512
  %v2089 = vunpack.c.l.b16 %v513
  %v2090 = vunpack.c.h.b16 %v513
  %v2091 = vunpack.c.l.b16 %v514
  %v2092 = vunpack.c.h.b16 %v514
  %v2093 = vunpack.c.l.b16 %v515
  %v2094 = vunpack.c.h.b16 %v515
  %v2095 = vunpack.c.l.b16 %v516
  %v2096 = vunpack.c.h.b16 %v516
  %v2097 = vunpack.c.l.b16 %v517
  %v2098 = vunpack.c.h.b16 %v517
  %v2099 = vunpack.c.l.b16 %v518
  %v2100 = vunpack.c.h.b16 %v518
  %v2101 = vunpack.c.l.b16 %v519
  %v2102 = vunpack.c.h.b16 %v519
  %v2103 = vunpack.c.l.b16 %v520
  %v2104 = vunpack.c.h.b16 %v520
  %v2105 = vunpack.c.l.b16 %v521
  %v2106 = vunpack.c.h.b16 %v521
  %v2107 = vunpack.c.l.b16 %v522
  %v2108 = vunpack.c.h.b16 %v522
  %v2109 = vunpack.c.l.b16 %v523
  %v2110 = vunpack.c.h.b16 %v523
  %v2111 = vunpack.c.l.b16 %v524
  %v2112 = vunpack.c.h.b16 %v524
  %v2113 = vunpack.c.l.b16 %v525
  %v2114 = vunpack.c.h.b16 %v525
  %v2115 = vunpack.c.l.b16 %v526
  %v2116 = vunpack.c.h.b16 %v526
  %v2117 = vunpack.c.l.b16 %v527
  %v2118 = vunpack.c.h.b16 %v527
  %v2119 = vunpack.c.l.b16 %v528
  %v2120 = vunpack.c.h.b16 %v528
  %v2121 = vunpack.c.l.b16 %v529
  %v2122 = vunpack.c.h.b16 %v529
  %v2123 = vunpack.c.l.b16 %v530
  %v2124 = vunpack.c.h.b16 %v530
  %v2125 = vunpack.c.l.b16 %v531
  %v2126 = vunpack.c.h.b16 %v531
  %v2127 = vunpack.c.l.b16 %v532
  %v2128 = vunpack.c.h.b16 %v532
  %v2129 = vunpack.c.l.b16 %v533
  %v2130 = vunpack.c.h.b16 %v533
  %v2131 = vunpack.c.l.b16 %v534
  %v2132 = vunpack.c.h.b16 %v534
  %v2133 = vunpack.c.l.b16 %v535
  %v2134 = vunpack.c.h.b16 %v535
  %v2135 = vunpack.c.l.b16 %v536
  %v2136 = vunpack.c.h.b16 %v536
  %v2137 = vunpack.c.l.b16 %v537
  %v2138 = vunpack.c.h.b16 %v537
  %v2139 = vunpack.c.l.b16 %v538
  %v2140 = vunpack.c.h.b16 %v538
  %v2141 = vunpack.c.l.b16 %v539
  %v2142 = vunpack.c.h.b16 %v539
  %v2143 = vunpack.c.l.b16 %v540
  %v2144 = vunpack.c.h.b16 %v540
  %v2145 = vunpack.c.l.b16 %v541
  %v2146 = vunpack.c.h.b16 %v541
  %v2147 = vunpack.c.l.b16 %v542
  %v2148 = vunpack.c.h.b16 %v542
  %v2149 = vpack.c.b16 %v1133, %v1125
  %v2150 = vpack.c.b16 %v1134, %v1126
  %v2151 = vpack.c.b16 %v1135, %v1127
  %v2152 = vpack.c.b16 %v1136, %v1128
  %v2153 = vpack.c.b16 %v1137, %v1129
  %v2154 = vpack.c.b16 %v1138, %v1130
  %v2155 = vpack.c.b16 %v1139, %v1131
  %v2156 = vpack.c.b16 %v1140, %v1132
  %v2157 = vpack.c.b16 %v1149, %v1141
  %v2158 = vpack.c.b16 %v1150, %v1142
  %v2159 = vpack.c.b16 %v1151, %v1143
  %v2160 = vpack.c.b16 %v1152, %v1144
  %v2161 = vpack.c.b16 %v1153, %v1145
  %v2162 = vpack.c.b16 %v1154, %v1146
  %v2163 = vpack.c.b16 %v1155, %v1147
  %v2164 = vpack.c.b16 %v1156, %v1148
  %v2165 = vpack.c.b16 %v1165, %v1157
  %v2166 = vpack.c.b16 %v1166, %v1158
  %v2167 = vpack.c.b16 %v1167, %v1159
  %v2168 = vpack.c.b16 %v1168, %v1160
  %v2169 = vpack.c.b16 %v1169, %v1161
  %v2170 = vpack.c.b16 %v1170, %v1162
  %v2171 = vpack.c.b16 %v1171, %v1163
  %v2172 = vpack.c.b16 %v1172, %v1164
  %v2173 = vpack.c.b16 %v1181, %v1173
  %v2174 = vpack.c.b16 %v1182, %v1174
  %v2175 = vpack.c.b16 %v1183, %v1175
  %v2176 = vpack.c.b16 %v1184, %v1176
  %v2177 = vpack.c.b16 %v1185, %v1177
  %v2178 = vpack.c.b16 %v1186, %v1178
  %v2179 = vpack.c.b16 %v1187, %v1179
  %v2180 = vpack.c.b16 %v1188, %v1180
  %v2181 = vpack.c.b16 %v1197, %v1189
  %v2182 = vpack.c.b16 %v1198, %v1190
  %v2183 = vpack.c.b16 %v1199, %v1191
  %v2184 = vpack.c.b16 %v1200, %v1192
  %v2185 = vpack.c.b16 %v1201, %v1193
  %v2186 = vpack.c.b16 %v1202, %v1194
  %v2187 = vpack.c.b16 %v1203, %v1195
  %v2188 = vpack.c.b16 %v1204, %v1196
  %v2189 = vpack.c.b16 %v1213, %v1205
  %v2190 = vpack.c.b16 %v1214, %v1206
  %v2191 = vpack.c.b16 %v1215, %v1207
  %v2192 = vpack.c.b16 %v1216, %v1208
  %v2193 = vpack.c.b16 %v1217, %v1209
  %v2194 = vpack.c.b16 %v1218, %v1210
  %v2195 = vpack.c.b16 %v1219, %v1211
  %v2196 = vpack.c.b16 %v1220, %v1212
  %v2197 = vpack.c.b16 %v1229, %v1221
  %v2198 = vpack.c.b16 %v1230, %v1222
  %v2199 = vpack.c.b16 %v1231, %v1223
  %v2200 = vpack.c.b16 %v1232, %v1224
  %v2201 = vpack.c.b16 %v1233, %v1225
  %v2202 = vpack.c.b16 %v1234, %v1226
  %v2203 = vpack.c.b16 %v1235, %v1227
  %v2204 = vpack.c.b16 %v1236, %v1228
  %v2205 = vpack.c.b16 %v1245, %v1237
  %v2206 = vpack.c.b16 %v1246, %v1238
  %v2207 = vpack.c.b16 %v1247, %v1239
  %v2208 = vpack.c.b16 %v1248, %v1240
  %v2209 = vpack.c.b16 %v1249, %v1241
  %v2210 = vpack.c.b16 %v1250, %v1242
  %v2211 = vpack.c.b16 %v1251, %v1243
  %v2212 = vpack.c.b16 %v1252, %v1244
  %v2213 = vpack.c.b16 %v1261, %v1253
  %v2214 = vpack.c.b16 %v1262, %v1254
  %v2215 = vpack.c.b16 %v1263, %v1255
  %v2216 = vpack.c.b16 %v1264, %v1256
  %v2217 = vpack.c.b16 %v1265, %v1257
  %v2218 = vpack.c.b16 %v1266, %v1258
  %v2219 = vpack.c.b16 %v1267, %v1259
  %v2220 = vpack.c.b16 %v1268, %v1260
  %v2221 = vpack.c.b16 %v1277, %v1269
  %v2222 = vpack.c.b16 %v1278, %v1270
  %v2223 = vpack.c.b16 %v1279, %v1271
  %v2224 = vpack.c.b16 %v1280, %v1272
  %v2225 = vpack.c.b16 %v1281, %v1273
  %v2226 = vpack.c.b16 %v1282, %v1274
  %v2227 = vpack.c.b16 %v1283, %v1275
  %v2228 = vpack.c.b16 %v1284, %v1276
  %v2229 = vpack.c.b16 %v1293, %v1285
  %v2230 = vpack.c.b16 %v1294, %v1286
  %v2231 = vpack.c.b16 %v1295, %v1287
  %v2232 = vpack.c.b16 %v1296, %v1288
  %v2233 = vpack.c.b16 %v1297, %v1289
  %v2234 = vpack.c.b16 %v1298, %v1290
  %v2235 = vpack.c.b16 %v1299, %v1291
  %v2236 = vpack.c.b16 %v1300, %v1292
  %v2237 = vpack.c.b16 %v1309, %v1301
  %v2238 = vpack.c.b16 %v1310, %v1302
  %v2239 = vpack.c.b16 %v1311, %v1303
  %v2240 = vpack.c.b16 %v1312, %v1304
  %v2241 = vpack.c.b16 %v1313, %v1305
  %v2242 = vpack.c.b16 %v1314, %v1306
  %v2243 = vpack.c.b16 %v1315, %v1307
  %v2244 = vpack.c.b16 %v1316, %v1308
  %v2245 = vpack.c.b16 %v1325, %v1317
  %v2246 = vpack.c.b16 %v1326, %v1318
  %v2247 = vpack.c.b16 %v1327, %v1319
  %v2248 = vpack.c.b16 %v1328, %v1320
  %v2249 = vpack.c.b16 %v1329, %v1321
  %v2250 = vpack.c.b16 %v1330, %v1322
  %v2251 = vpack.c.b16 %v1331, %v1323
  %v2252 = vpack.c.b16 %v1332, %v1324
  %v2253 = vpack.c.b16 %v1341, %v1333
  %v2254 = vpack.c.b16 %v1342, %v1334
  %v2255 = vpack.c.b16 %v1343, %v1335
  %v2256 = vpack.c.b16 %v1344, %v1336
  %v2257 = vpack.c.b16 %v1345, %v1337
  %v2258 = vpack.c.b16 %v1346, %v1338
  %v2259 = vpack.c.b16 %v1347, %v1339
  %v2260 = vpack.c.b16 %v1348, %v1340
  %v2261 = vpack.c.b16 %v1357, %v1349
  %v2262 = vpack.c.b16 %v1358, %v1350
  %v2263 = vpack.c.b16 %v1359, %v1351
  %v2264 = vpack.c.b16 %v1360, %v1352
  %v2265 = vpack.c.b16 %v1361, %v1353
  %v2266 = vpack.c.b16 %v1362, %v1354
  %v2267 = vpack.c.b16 %v1363, %v1355
  %v2268 = vpack.c.b16 %v1364, %v1356
  %v2269 = vpack.c.b16 %v1373, %v1365
  %v2270 = vpack.c.b16 %v1374, %v1366
  %v2271 = vpack.c.b16 %v1375, %v1367
  %v2272 = vpack.c.b16 %v1376, %v1368
  %v2273 = vpack.c.b16 %v1377, %v1369
  %v2274 = vpack.c.b16 %v1378, %v1370
  %v2275 = vpack.c.b16 %v1379, %v1371
  %v2276 = vpack.c.b16 %v1380, %v1372
  %v2277 = vpack.c.b16 %v1389, %v1381
  %v2278 = vpack.c.b16 %v1390, %v1382
  %v2279 = vpack.c.b16 %v1391, %v1383
  %v2280 = vpack.c.b16 %v1392, %v1384
  %v2281 = vpack.c.b16 %v1393, %v1385
  %v2282 = vpack.c.b16 %v1394, %v1386
  %v2283 = vpack.c.b16 %v1395, %v1387
  %v2284 = vpack.c.b16 %v1396, %v1388
  %v2285 = vpack.c.b16 %v1405, %v1397
  %v2286 = vpack.c.b16 %v1406, %v1398
  %v2287 = vpack.c.b16 %v1407, %v1399
  %v2288 = vpack.c.b16 %v1408, %v1400
  %v2289 = vpack.c.b16 %v1409, %v1401
  %v2290 = vpack.c.b16 %v1410, %v1402
  %v2291 = vpack.c.b16 %v1411, %v1403
  %v2292 = vpack.c.b16 %v1412, %v1404
  %v2293 = vpack.c.b16 %v1421, %v1413
  %v2294 = vpack.c.b16 %v1422, %v1414
  %v2295 = vpack.c.b16 %v1423, %v1415
  %v2296 = vpack.c.b16 %v1424, %v1416
  %v2297 = vpack.c.b16 %v1425, %v1417
  %v2298 = vpack.c.b16 %v1426, %v1418
  %v2299 = vpack.c.b16 %v1427, %v1419
  %v2300 = vpack.c.b16 %v1428, %v1420
  %v2301 = vpack.c.b16 %v1437, %v1429
  %v2302 = vpack.c.b16 %v1438, %v1430
  %v2303 = vpack.c.b16 %v1439, %v1431
  %v2304 = vpack.c.b16 %v1440, %v1432
  %v2305 = vpack.c.b16 %v1441, %v1433
  %v2306 = vpack.c.b16 %v1442, %v1434
  %v2307 = vpack.c.b16 %v1443, %v1435
  %v2308 = vpack.c.b16 %v1444, %v1436
  %v2309 = vpack.c.b16 %v1453, %v1445
  %v2310 = vpack.c.b16 %v1454, %v1446
  %v2311 = vpack.c.b16 %v1455, %v1447
  %v2312 = vpack.c.b16 %v1456, %v1448
  %v2313 = vpack.c.b16 %v1457, %v1449
  %v2314 = vpack.c.b16 %v1458, %v1450
  %v2315 = vpack.c.b16 %v1459, %v1451
  %v2316 = vpack.c.b16 %v1460, %v1452
  %v2317 = vpack.c.b16 %v1469, %v1461
  %v2318 = vpack.c.b16 %v1470, %v1462
  %v2319 = vpack.c.b16 %v1471, %v1463
  %v2320 = vpack.c.b16 %v1472, %v1464
  %v2321 = vpack.c.b16 %v1473, %v1465
  %v2322 = vpack.c.b16 %v1474, %v1466
  %v2323 = vpack.c.b16 %v1475, %v1467
  %v2324 = vpack.c.b16 %v1476, %v1468
  %v2325 = vpack.c.b16 %v1485, %v1477
  %v2326 = vpack.c.b16 %v1486, %v1478
  %v2327 = vpack.c.b16 %v1487, %v1479
  %v2328 = vpack.c.b16 %v1488, %v1480
  %v2329 = vpack.c.b16 %v1489, %v1481
  %v2330 = vpack.c.b16 %v1490, %v1482
  %v2331 = vpack.c.b16 %v1491, %v1483
  %v2332 = vpack.c.b16 %v1492, %v1484
  %v2333 = vpack.c.b16 %v1501, %v1493
  %v2334 = vpack.c.b16 %v1502, %v1494
  %v2335 = vpack.c.b16 %v1503, %v1495
  %v2336 = vpack.c.b16 %v1504, %v1496
  %v2337 = vpack.c.b16 %v1505, %v1497
  %v2338 = vpack.c.b16 %v1506, %v1498
  %v2339 = vpack.c.b16 %v1507, %v1499
  %v2340 = vpack.c.b16 %v1508, %v1500
  %v2341 = vpack.c.b16 %v1517, %v1509
  %v2342 = vpack.c.b16 %v1518, %v1510
  %v2343 = vpack.c.b16 %v1519, %v1511
  %v2344 = vpack.c.b16 %v1520, %v1512
  %v2345 = vpack.c.b16 %v1521, %v1513
  %v2346 = vpack.c.b16 %v1522, %v1514
  %v2347 = vpack.c.b16 %v1523, %v1515
  %v2348 = vpack.c.b16 %v1524, %v1516
  %v2349 = vpack.c.b16 %v1533, %v1525
  %v2350 = vpack.c.b16 %v1534, %v1526
  %v2351 = vpack.c.b16 %v1535, %v1527
  %v2352 = vpack.c.b16 %v1536, %v1528
  %v2353 = vpack.c.b16 %v1537, %v1529
  %v2354 = vpack.c.b16 %v1538, %v1530
  %v2355 = vpack.c.b16 %v1539, %v1531
  %v2356 = vpack.c.b16 %v1540, %v1532
  %v2357 = vpack.c.b16 %v1549, %v1541
  %v2358 = vpack.c.b16 %v1550, %v1542
  %v2359 = vpack.c.b16 %v1551, %v1543
  %v2360 = vpack.c.b16 %v1552, %v1544
  %v2361 = vpack.c.b16 %v1553, %v1545
  %v2362 = vpack.c.b16 %v1554, %v1546
  %v2363 = vpack.c.b16 %v1555, %v1547
  %v2364 = vpack.c.b16 %v1556, %v1548
  %v2365 = vpack.c.b16 %v1565, %v1557
  %v2366 = vpack.c.b16 %v1566, %v1558
  %v2367 = vpack.c.b16 %v1567, %v1559
  %v2368 = vpack.c.b16 %v1568, %v1560
  %v2369 = vpack.c.b16 %v1569, %v1561
  %v2370 = vpack.c.b16 %v1570, %v1562
  %v2371 = vpack.c.b16 %v1571, %v1563
  %v2372 = vpack.c.b16 %v1572, %v1564
  %v2373 = vpack.c.b16 %v1581, %v1573
  %v2374 = vpack.c.b16 %v1582, %v1574
  %v2375 = vpack.c.b16 %v1583, %v1575
  %v2376 = vpack.c.b16 %v1584, %v1576
  %v2377 = vpack.c.b16 %v1585, %v1577
  %v2378 = vpack.c.b16 %v1586, %v1578
  %v2379 = vpack.c.b16 %v1587, %v1579
  %v2380 = vpack.c.b16 %v1588, %v1580
  %v2381 = vpack.c.b16 %v1597, %v1589
  %v2382 = vpack.c.b16 %v1598, %v1590
  %v2383 = vpack.c.b16 %v1599, %v1591
  %v2384 = vpack.c.b16 %v1600, %v1592
  %v2385 = vpack.c.b16 %v1601, %v1593
  %v2386 = vpack.c.b16 %v1602, %v1594
  %v2387 = vpack.c.b16 %v1603, %v1595
  %v2388 = vpack.c.b16 %v1604, %v1596
  %v2389 = vpack.c.b16 %v1613, %v1605
  %v2390 = vpack.c.b16 %v1614, %v1606
  %v2391 = vpack.c.b16 %v1615, %v1607
  %v2392 = vpack.c.b16 %v1616, %v1608
  %v2393 = vpack.c.b16 %v1617, %v1609
  %v2394 = vpack.c.b16 %v1618, %v1610
  %v2395 = vpack.c.b16 %v1619, %v1611
  %v2396 = vpack.c.b16 %v1620, %v1612
  %v2397 = vpack.c.b16 %v1629, %v1621
  %v2398 = vpack.c.b16 %v1630, %v1622
  %v2399 = vpack.c.b16 %v1631, %v1623
  %v2400 = vpack.c.b16 %v1632, %v1624
  %v2401 = vpack.c.b16 %v1633, %v1625
  %v2402 = vpack.c.b16 %v1634, %v1626
  %v2403 = vpack.c.b16 %v1635, %v1627
  %v2404 = vpack.c.b16 %v1636, %v1628
  %v2405 = vpack.c.b16 %v1645, %v1637
  %v2406 = vpack.c.b16 %v1646, %v1638
  %v2407 = vpack.c.b16 %v1647, %v1639
  %v2408 = vpack.c.b16 %v1648, %v1640
  %v2409 = vpack.c.b16 %v1649, %v1641
  %v2410 = vpack.c.b16 %v1650, %v1642
  %v2411 = vpack.c.b16 %v1651, %v1643
  %v2412 = vpack.c.b16 %v1652, %v1644
  %v2413 = vpack.c.b16 %v1661, %v1653
  %v2414 = vpack.c.b16 %v1662, %v1654
  %v2415 = vpack.c.b16 %v1663, %v1655
  %v2416 = vpack.c.b16 %v1664, %v1656
  %v2417 = vpack.c.b16 %v1665, %v1657
  %v2418 = vpack.c.b16 %v1666, %v1658
  %v2419 = vpack.c.b16 %v1667, %v1659
  %v2420 = vpack.c.b16 %v1668, %v1660
  %v2421 = vpack.c.b16 %v1677, %v1669
  %v2422 = vpack.c.b16 %v1678, %v1670
  %v2423 = vpack.c.b16 %v1679, %v1671
  %v2424 = vpack.c.b16 %v1680, %v1672
  %v2425 = vpack.c.b16 %v1681, %v1673
  %v2426 = vpack.c.b16 %v1682, %v1674
  %v2427 = vpack.c.b16 %v1683, %v1675
  %v2428 = vpack.c.b16 %v1684, %v1676
  %v2429 = vpack.c.b16 %v1693, %v1685
  %v2430 = vpack.c.b16 %v1694, %v1686
  %v2431 = vpack.c.b16 %v1695, %v1687
  %v2432 = vpack.c.b16 %v1696, %v1688
  %v2433 = vpack.c.b16 %v1697, %v1689
  %v2434 = vpack.c.b16 %v1698, %v1690
  %v2435 = vpack.c.b16 %v1699, %v1691
  %v2436 = vpack.c.b16 %v1700, %v1692
  %v2437 = vpack.c.b16 %v1709, %v1701
  %v2438 = vpack.c.b16 %v1710, %v1702
  %v2439 = vpack.c.b16 %v1711, %v1703
  %v2440 = vpack.c.b16 %v1712, %v1704
  %v2441 = vpack.c.b16 %v1713, %v1705
  %v2442 = vpack.c.b16 %v1714, %v1706
  %v2443 = vpack.c.b16 %v1715, %v1707
  %v2444 = vpack.c.b16 %v1716, %v1708
  %v2445 = vpack.c.b16 %v1725, %v1717
  %v2446 = vpack.c.b16 %v1726, %v1718
  %v2447 = vpack.c.b16 %v1727, %v1719
  %v2448 = vpack.c.b16 %v1728, %v1720
  %v2449 = vpack.c.b16 %v1729, %v1721
  %v2450 = vpack.c.b16 %v1730, %v1722
  %v2451 = vpack.c.b16 %v1731, %v1723
  %v2452 = vpack.c.b16 %v1732, %v1724
  %v2453 = vpack.c.b16 %v1741, %v1733
  %v2454 = vpack.c.b16 %v1742, %v1734
  %v2455 = vpack.c.b16 %v1743, %v1735
  %v2456 = vpack.c.b16 %v1744, %v1736
  %v2457 = vpack.c.b16 %v1745, %v1737
  %v2458 = vpack.c.b16 %v1746, %v1738
  %v2459 = vpack.c.b16 %v1747, %v1739
  %v2460 = vpack.c.b16 %v1748, %v1740
  %v2461 = vpack.c.b16 %v1757, %v1749
  %v2462 = vpack.c.b16 %v1758, %v1750
  %v2463 = vpack.c.b16 %v1759, %v1751
  %v2464 = vpack.c.b16 %v1760, %v1752
  %v2465 = vpack.c.b16 %v1761, %v1753
  %v2466 = vpack.c.b16 %v1762, %v1754
  %v2467 = vpack.c.b16 %v1763, %v1755
  %v2468 = vpack.c.b16 %v1764, %v1756
  %v2469 = vpack.c.b16 %v1773, %v1765
  %v2470 = vpack.c.b16 %v1774, %v1766
  %v2471 = vpack.c.b16 %v1775, %v1767
  %v2472 = vpack.c.b16 %v1776, %v1768
  %v2473 = vpack.c.b16 %v1777, %v1769
  %v2474 = vpack.c.b16 %v1778, %v1770
  %v2475 = vpack.c.b16 %v1779, %v1771
  %v2476 = vpack.c.b16 %v1780, %v1772
  %v2477 = vpack.c.b16 %v1789, %v1781
  %v2478 = vpack.c.b16 %v1790, %v1782
  %v2479 = vpack.c.b16 %v1791, %v1783
  %v2480 = vpack.c.b16 %v1792, %v1784
  %v2481 = vpack.c.b16 %v1793, %v1785
  %v2482 = vpack.c.b16 %v1794, %v1786
  %v2483 = vpack.c.b16 %v1795, %v1787
  %v2484 = vpack.c.b16 %v1796, %v1788
  %v2485 = vpack.c.b16 %v1805, %v1797
  %v2486 = vpack.c.b16 %v1806, %v1798
  %v2487 = vpack.c.b16 %v1807, %v1799
  %v2488 = vpack.c.b16 %v1808, %v1800
  %v2489 = vpack.c.b16 %v1809, %v1801
  %v2490 = vpack.c.b16 %v1810, %v1802
  %v2491 = vpack.c.b16 %v1811, %v1803
  %v2492 = vpack.c.b16 %v1812, %v1804
  %v2493 = vpack.c.b16 %v1821, %v1813
  %v2494 = vpack.c.b16 %v1822, %v1814
  %v2495 = vpack.c.b16 %v1823, %v1815
  %v2496 = vpack.c.b16 %v1824, %v1816
  %v2497 = vpack.c.b16 %v1825, %v1817
  %v2498 = vpack.c.b16 %v1826, %v1818
  %v2499 = vpack.c.b16 %v1827, %v1819
  %v2500 = vpack.c.b16 %v1828, %v1820
  %v2501 = vpack.c.b16 %v1837, %v1829
  %v2502 = vpack.c.b16 %v1838, %v1830
  %v2503 = vpack.c.b16 %v1839, %v1831
  %v2504 = vpack.c.b16 %v1840, %v1832
  %v2505 = vpack.c.b16 %v1841, %v1833
  %v2506 = vpack.c.b16 %v1842, %v1834
  %v2507 = vpack.c.b16 %v1843, %v1835
  %v2508 = vpack.c.b16 %v1844, %v1836
  %v2509 = vpack.c.b16 %v1853, %v1845
  %v2510 = vpack.c.b16 %v1854, %v1846
  %v2511 = vpack.c.b16 %v1855, %v1847
  %v2512 = vpack.c.b16 %v1856, %v1848
  %v2513 = vpack.c.b16 %v1857, %v1849
  %v2514 = vpack.c.b16 %v1858, %v1850
  %v2515 = vpack.c.b16 %v1859, %v1851
  %v2516 = vpack.c.b16 %v1860, %v1852
  %v2517 = vpack.c.b16 %v1869, %v1861
  %v2518 = vpack.c.b16 %v1870, %v1862
  %v2519 = vpack.c.b16 %v1871, %v1863
  %v2520 = vpack.c.b16 %v1872, %v1864
  %v2521 = vpack.c.b16 %v1873, %v1865
  %v2522 = vpack.c.b16 %v1874, %v1866
  %v2523 = vpack.c.b16 %v1875, %v1867
  %v2524 = vpack.c.b16 %v1876, %v1868
  %v2525 = vpack.c.b16 %v1885, %v1877
  %v2526 = vpack.c.b16 %v1886, %v1878
  %v2527 = vpack.c.b16 %v1887, %v1879
  %v2528 = vpack.c.b16 %v1888, %v1880
  %v2529 = vpack.c.b16 %v1889, %v1881
  %v2530 = vpack.c.b16 %v1890, %v1882
  %v2531 = vpack.c.b16 %v1891, %v1883
  %v2532 = vpack.c.b16 %v1892, %v1884
  %v2533 = vpack.c.b16 %v1901, %v1893
  %v2534 = vpack.c.b16 %v1902, %v1894
  %v2535 = vpack.c.b16 %v1903, %v1895
  %v2536 = vpack.c.b16 %v1904, %v1896
  %v2537 = vpack.c.b16 %v1905, %v1897
  %v2538 = vpack.c.b16 %v1906, %v1898
  %v2539 = vpack.c.b16 %v1907, %v1899
  %v2540 = vpack.c.b16 %v1908, %v1900
  %v2541 = vpack.c.b16 %v1917, %v1909
  %v2542 = vpack.c.b16 %v1918, %v1910
  %v2543 = vpack.c.b16 %v1919, %v1911
  %v2544 = vpack.c.b16 %v1920, %v1912
  %v2545 = vpack.c.b16 %v1921, %v1913
  %v2546 = vpack.c.b16 %v1922, %v1914
  %v2547 = vpack.c.b16 %v1923, %v1915
  %v2548 = vpack.c.b16 %v1924, %v1916
  %v2549 = vpack.c.b16 %v1933, %v1925
  %v2550 = vpack.c.b16 %v1934, %v1926
  %v2551 = vpack.c.b16 %v1935, %v1927
  %v2552 = vpack.c.b16 %v1936, %v1928
  %v2553 = vpack.c.b16 %v1937, %v1929
  %v2554 = vpack.c.b16 %v1938, %v1930
  %v2555 = vpack.c.b16 %v1939, %v1931
  %v2556 = vpack.c.b16 %v1940, %v1932
  %v2557 = vpack.c.b16 %v1949, %v1941
  %v2558 = vpack.c.b16 %v1950, %v1942
  %v2559 = vpack.c.b16 %v1951, %v1943
  %v2560 = vpack.c.b16 %v1952, %v1944
  %v2561 = vpack.c.b16 %v1953, %v1945
  %v2562 = vpack.c.b16 %v1954, %v1946
  %v2563 = vpack.c.b16 %v1955, %v1947
  %v2564 = vpack.c.b16 %v1956, %v1948
  %v2565 = vpack.c.b16 %v1965, %v1957
  %v2566 = vpack.c.b16 %v1966, %v1958
  %v2567 = vpack.c.b16 %v1967, %v1959
  %v2568 = vpack.c.b16 %v1968, %v1960
  %v2569 = vpack.c.b16 %v1969, %v1961
  %v2570 = vpack.c.b16 %v1970, %v1962
  %v2571 = vpack.c.b16 %v1971, %v1963
  %v2572 = vpack.c.b16 %v1972, %v1964
  %v2573 = vpack.c.b16 %v1981, %v1973
  %v2574 = vpack.c.b16 %v1982, %v1974
  %v2575 = vpack.c.b16 %v1983, %v1975
  %v2576 = vpack.c.b16 %v1984, %v1976
  %v2577 = vpack.c.b16 %v1985, %v1977
  %v2578 = vpack.c.b16 %v1986, %v1978
  %v2579 = vpack.c.b16 %v1987, %v1979
  %v2580 = vpack.c.b16 %v1988, %v1980
  %v2581 = vpack.c.b16 %v1997, %v1989
  %v2582 = vpack.c.b16 %v1998, %v1990
  %v2583 = vpack.c.b16 %v1999, %v1991
  %v2584 = vpack.c.b16 %v2000, %v1992
  %v2585 = vpack.c.b16 %v2001, %v1993
  %v2586 = vpack.c.b16 %v2002, %v1994
  %v2587 = vpack.c.b16 %v2003, %v1995
  %v2588 = vpack.c.b16 %v2004, %v1996
  %v2589 = vpack.c.b16 %v2013, %v2005
  %v2590 = vpack.c.b16 %v2014, %v2006
  %v2591 = vpack.c.b16 %v2015, %v2007
  %v2592 = vpack.c.b16 %v2016, %v2008
  %v2593 = vpack.c.b16 %v2017, %v2009
  %v2594 = vpack.c.b16 %v2018, %v2010
  %v2595 = vpack.c.b16 %v2019, %v2011
  %v2596 = vpack.c.b16 %v2020, %v2012
  %v2597 = vpack.c.b16 %v2029, %v2021
  %v2598 = vpack.c.b16 %v2030, %v2022
  %v2599 = vpack.c.b16 %v2031, %v2023
  %v2600 = vpack.c.b16 %v2032, %v2024
  %v2601 = vpack.c.b16 %v2033, %v2025
  %v2602 = vpack.c.b16 %v2034, %v2026
  %v2603 = vpack.c.b16 %v2035, %v2027
  %v2604 = vpack.c.b16 %v2036, %v2028
  %v2605 = vpack.c.b16 %v2045, %v2037
  %v2606 = vpack.c.b16 %v2046, %v2038
  %v2607 = vpack.c.b16 %v2047, %v2039
  %v2608 = vpack.c.b16 %v2048, %v2040
  %v2609 = vpack.c.b16 %v2049, %v2041
  %v2610 = vpack.c.b16 %v2050, %v2042
  %v2611 = vpack.c.b16 %v2051, %v2043
  %v2612 = vpack.c.b16 %v2052, %v2044
  %v2613 = vpack.c.b16 %v2061, %v2053
  %v2614 = vpack.c.b16 %v2062, %v2054
  %v2615 = vpack.c.b16 %v2063, %v2055
  %v2616 = vpack.c.b16 %v2064, %v2056
  %v2617 = vpack.c.b16 %v2065, %v2057
  %v2618 = vpack.c.b16 %v2066, %v2058
  %v2619 = vpack.c.b16 %v2067, %v2059
  %v2620 = vpack.c.b16 %v2068, %v2060
  %v2621 = vpack.c.b16 %v2077, %v2069
  %v2622 = vpack.c.b16 %v2078, %v2070
  %v2623 = vpack.c.b16 %v2079, %v2071
  %v2624 = vpack.c.b16 %v2080, %v2072
  %v2625 = vpack.c.b16 %v2081, %v2073
  %v2626 = vpack.c.b16 %v2082, %v2074
  %v2627 = vpack.c.b16 %v2083, %v2075
  %v2628 = vpack.c.b16 %v2084, %v2076
  %v2629 = vpack.c.b16 %v2093, %v2085
  %v2630 = vpack.c.b16 %v2094, %v2086
  %v2631 = vpack.c.b16 %v2095, %v2087
  %v2632 = vpack.c.b16 %v2096, %v2088
  %v2633 = vpack.c.b16 %v2097, %v2089
  %v2634 = vpack.c.b16 %v2098, %v2090
  %v2635 = vpack.c.b16 %v2099, %v2091
  %v2636 = vpack.c.b16 %v2100, %v2092
  %v2637 = vpack.c.b16 %v2109, %v2101
  %v2638 = vpack.c.b16 %v2110, %v2102
  %v2639 = vpack.c.b16 %v2111, %v2103
  %v2640 = vpack.c.b16 %v2112, %v2104
  %v2641 = vpack.c.b16 %v2113, %v2105
  %v2642 = vpack.c.b16 %v2114, %v2106
  %v2643 = vpack.c.b16 %v2115, %v2107
  %v2644 = vpack.c.b16 %v2116, %v2108
  %v2645 = vpack.c.b16 %v2125, %v2117
  %v2646 = vpack.c.b16 %v2126, %v2118
  %v2647 = vpack.c.b16 %v2127, %v2119
  %v2648 = vpack.c.b16 %v2128, %v2120
  %v2649 = vpack.c.b16 %v2129, %v2121
  %v2650 = vpack.c.b16 %v2130, %v2122
  %v2651 = vpack.c.b16 %v2131, %v2123
  %v2652 = vpack.c.b16 %v2132, %v2124
  %v2653 = vpack.c.b16 %v2141, %v2133
  %v2654 = vpack.c.b16 %v2142, %v2134
  %v2655 = vpack.c.b16 %v2143, %v2135
  %v2656 = vpack.c.b16 %v2144, %v2136
  %v2657 = vpack.c.b16 %v2145, %v2137
  %v2658 = vpack.c.b16 %v2146, %v2138
  %v2659 = vpack.c.b16 %v2147, %v2139
  %v2660 = vpack.c.b16 %v2148, %v2140
  %3173 = vmatprep.subr.bf16.mxu0 %v2150
  %3174 = vmatpush1.bf16.msra.mxu0 %v2149
  %3175 = vmatprep.subr.bf16.mxu0 %v2158
  %3176 = vmatpush1.bf16.msra.mxu0 %v2157
  %3177 = vmatprep.subr.bf16.mxu0 %v2166
  %3178 = vmatpush1.bf16.msra.mxu0 %v2165
  %3179 = vmatprep.subr.bf16.mxu0 %v2174
  %3180 = vmatpush1.bf16.msra.mxu0 %v2173
  %3181 = vmatprep.subr.bf16.mxu0 %v2182
  %3182 = vmatpush1.bf16.msra.mxu0 %v2181
  %3183 = vmatprep.subr.bf16.mxu0 %v2190
  %3184 = vmatpush1.bf16.msra.mxu0 %v2189
  %3185 = vmatprep.subr.bf16.mxu0 %v2198
  %3186 = vmatpush1.bf16.msra.mxu0 %v2197
  %3187 = vmatprep.subr.bf16.mxu0 %v2206
  %3188 = vmatpush1.bf16.msra.mxu0 %v2205
  %3189 = vmatprep.subr.bf16.mxu0 %v2214
  %3190 = vmatpush1.bf16.msra.mxu0 %v2213
  %3191 = vmatprep.subr.bf16.mxu0 %v2222
  %3192 = vmatpush1.bf16.msra.mxu0 %v2221
  %3193 = vmatprep.subr.bf16.mxu0 %v2230
  %3194 = vmatpush1.bf16.msra.mxu0 %v2229
  %3195 = vmatprep.subr.bf16.mxu0 %v2238
  %3196 = vmatpush1.bf16.msra.mxu0 %v2237
  %3197 = vmatprep.subr.bf16.mxu0 %v2246
  %3198 = vmatpush1.bf16.msra.mxu0 %v2245
  %3199 = vmatprep.subr.bf16.mxu0 %v2254
  %3200 = vmatpush1.bf16.msra.mxu0 %v2253
  %3201 = vmatprep.subr.bf16.mxu0 %v2262
  %3202 = vmatpush1.bf16.msra.mxu0 %v2261
  %3203 = vmatprep.subr.bf16.mxu0 %v2270
  %3204 = vmatpush1.bf16.msra.mxu0 %v2269
  %3205 = vmatprep.mubr.bf16.mxu0 %v598
  %3206 = vmatmul.mubr.bf16.gmra.mrb[0].mxu0 %v597
  %v3207 = vpop.f32.mrb[0].mxu0
  %v3208 = vadd.f32 %v548, %v3207
  %v3209 = vpop.f32.mrb[0].mxu0
  %v3210 = vadd.f32 %v552, %v3209
  %v3211 = vpop.f32.mrb[0].mxu0
  %v3212 = vpop.f32.mrb[0].mxu0
  %3213 = vdwg.mxu0
  %3214 = vmatprep.subr.bf16.mxu0 %v2278
  %3215 = vmatpush1.bf16.msra.mxu0 %v2277
  %3216 = vmatprep.subr.bf16.mxu0 %v2286
  %3217 = vmatpush1.bf16.msra.mxu0 %v2285
  %3218 = vmatprep.subr.bf16.mxu0 %v2294
  %3219 = vmatpush1.bf16.msra.mxu0 %v2293
  %3220 = vmatprep.subr.bf16.mxu0 %v2302
  %3221 = vmatpush1.bf16.msra.mxu0 %v2301
  %3222 = vmatprep.subr.bf16.mxu0 %v2310
  %3223 = vmatpush1.bf16.msra.mxu0 %v2309
  %3224 = vmatprep.subr.bf16.mxu0 %v2318
  %3225 = vmatpush1.bf16.msra.mxu0 %v2317
  %3226 = vmatprep.subr.bf16.mxu0 %v2326
  %3227 = vmatpush1.bf16.msra.mxu0 %v2325
  %3228 = vmatprep.subr.bf16.mxu0 %v2334
  %3229 = vmatpush1.bf16.msra.mxu0 %v2333
  %3230 = vmatprep.subr.bf16.mxu0 %v2342
  %3231 = vmatpush1.bf16.msra.mxu0 %v2341
  %3232 = vmatprep.subr.bf16.mxu0 %v2350
  %3233 = vmatpush1.bf16.msra.mxu0 %v2349
  %3234 = vmatprep.subr.bf16.mxu0 %v2358
  %3235 = vmatpush1.bf16.msra.mxu0 %v2357
  %3236 = vmatprep.subr.bf16.mxu0 %v2366
  %3237 = vmatpush1.bf16.msra.mxu0 %v2365
  %3238 = vmatprep.subr.bf16.mxu0 %v2374
  %3239 = vmatpush1.bf16.msra.mxu0 %v2373
  %3240 = vmatprep.subr.bf16.mxu0 %v2382
  %3241 = vmatpush1.bf16.msra.mxu0 %v2381
  %3242 = vmatprep.subr.bf16.mxu0 %v2390
  %3243 = vmatpush1.bf16.msra.mxu0 %v2389
  %3244 = vmatprep.subr.bf16.mxu0 %v2398
  %3245 = vmatpush1.bf16.msra.mxu0 %v2397
  %3246 = vmatprep.mubr.bf16.mxu0 %v600
  %3247 = vmatmul.mubr.bf16.gmra.mrb[0].mxu0 %v599
  %v3248 = vpop.f32.mrb[0].mxu0
  %v3249 = vadd.f32 %v3208, %v3248
  %v3250 = vpop.f32.mrb[0].mxu0
  %v3251 = vadd.f32 %v3210, %v3250
  %v3252 = vpop.f32.mrb[0].mxu0
  %v3253 = vpop.f32.mrb[0].mxu0
  %3254 = vdwg.mxu0
  %3255 = vmatprep.subr.bf16.mxu0 %v2406
  %3256 = vmatpush1.bf16.msra.mxu0 %v2405
  %3257 = vmatprep.subr.bf16.mxu0 %v2414
  %3258 = vmatpush1.bf16.msra.mxu0 %v2413
  %3259 = vmatprep.subr.bf16.mxu0 %v2422
  %3260 = vmatpush1.bf16.msra.mxu0 %v2421
  %3261 = vmatprep.subr.bf16.mxu0 %v2430
  %3262 = vmatpush1.bf16.msra.mxu0 %v2429
  %3263 = vmatprep.subr.bf16.mxu0 %v2438
  %3264 = vmatpush1.bf16.msra.mxu0 %v2437
  %3265 = vmatprep.subr.bf16.mxu0 %v2446
  %3266 = vmatpush1.bf16.msra.mxu0 %v2445
  %3267 = vmatprep.subr.bf16.mxu0 %v2454
  %3268 = vmatpush1.bf16.msra.mxu0 %v2453
  %3269 = vmatprep.subr.bf16.mxu0 %v2462
  %3270 = vmatpush1.bf16.msra.mxu0 %v2461
  %3271 = vmatprep.subr.bf16.mxu0 %v2470
  %3272 = vmatpush1.bf16.msra.mxu0 %v2469
  %3273 = vmatprep.subr.bf16.mxu0 %v2478
  %3274 = vmatpush1.bf16.msra.mxu0 %v2477
  %3275 = vmatprep.subr.bf16.mxu0 %v2486
  %3276 = vmatpush1.bf16.msra.mxu0 %v2485
  %3277 = vmatprep.subr.bf16.mxu0 %v2494
  %3278 = vmatpush1.bf16.msra.mxu0 %v2493
  %3279 = vmatprep.subr.bf16.mxu0 %v2502
  %3280 = vmatpush1.bf16.msra.mxu0 %v2501
  %3281 = vmatprep.subr.bf16.mxu0 %v2510
  %3282 = vmatpush1.bf16.msra.mxu0 %v2509
  %3283 = vmatprep.subr.bf16.mxu0 %v2518
  %3284 = vmatpush1.bf16.msra.mxu0 %v2517
  %3285 = vmatprep.subr.bf16.mxu0 %v2526
  %3286 = vmatpush1.bf16.msra.mxu0 %v2525
  %3287 = vmatprep.mubr.bf16.mxu0 %v602
  %3288 = vmatmul.mubr.bf16.gmra.mrb[0].mxu0 %v601
  %v3289 = vpop.f32.mrb[0].mxu0
  %v3290 = vadd.f32 %v3249, %v3289
  %v3291 = vpop.f32.mrb[0].mxu0
  %v3292 = vadd.f32 %v3251, %v3291
  %v3293 = vpop.f32.mrb[0].mxu0
  %v3294 = vpop.f32.mrb[0].mxu0
  %3295 = vdwg.mxu0
  %3296 = vmatprep.subr.bf16.mxu0 %v2534
  %3297 = vmatpush1.bf16.msra.mxu0 %v2533
  %3298 = vmatprep.subr.bf16.mxu0 %v2542
  %3299 = vmatpush1.bf16.msra.mxu0 %v2541
  %3300 = vmatprep.subr.bf16.mxu0 %v2550
  %3301 = vmatpush1.bf16.msra.mxu0 %v2549
  %3302 = vmatprep.subr.bf16.mxu0 %v2558
  %3303 = vmatpush1.bf16.msra.mxu0 %v2557
  %3304 = vmatprep.subr.bf16.mxu0 %v2566
  %3305 = vmatpush1.bf16.msra.mxu0 %v2565
  %3306 = vmatprep.subr.bf16.mxu0 %v2574
  %3307 = vmatpush1.bf16.msra.mxu0 %v2573
  %3308 = vmatprep.subr.bf16.mxu0 %v2582
  %3309 = vmatpush1.bf16.msra.mxu0 %v2581
  %3310 = vmatprep.subr.bf16.mxu0 %v2590
  %3311 = vmatpush1.bf16.msra.mxu0 %v2589
  %3312 = vmatprep.subr.bf16.mxu0 %v2598
  %3313 = vmatpush1.bf16.msra.mxu0 %v2597
  %3314 = vmatprep.subr.bf16.mxu0 %v2606
  %3315 = vmatpush1.bf16.msra.mxu0 %v2605
  %3316 = vmatprep.subr.bf16.mxu0 %v2614
  %3317 = vmatpush1.bf16.msra.mxu0 %v2613
  %3318 = vmatprep.subr.bf16.mxu0 %v2622
  %3319 = vmatpush1.bf16.msra.mxu0 %v2621
  %3320 = vmatprep.subr.bf16.mxu0 %v2630
  %3321 = vmatpush1.bf16.msra.mxu0 %v2629
  %3322 = vmatprep.subr.bf16.mxu0 %v2638
  %3323 = vmatpush1.bf16.msra.mxu0 %v2637
  %3324 = vmatprep.subr.bf16.mxu0 %v2646
  %3325 = vmatpush1.bf16.msra.mxu0 %v2645
  %3326 = vmatprep.subr.bf16.mxu0 %v2654
  %3327 = vmatpush1.bf16.msra.mxu0 %v2653
  %3328 = vmatprep.mubr.bf16.mxu0 %v604
  %3329 = vmatmul.mubr.bf16.gmra.mrb[0].mxu0 %v603
  %v3330 = vpop.f32.mrb[0].mxu0
  %v3331 = vadd.f32 %v3290, %v3330
  %v3332 = vpop.f32.mrb[0].mxu0
  %v3333 = vadd.f32 %v3292, %v3332
  %v3334 = vpop.f32.mrb[0].mxu0
  %v3335 = vpop.f32.mrb[0].mxu0
  %3336 = vdwg.mxu0
  %3337 = vmatprep.subr.bf16.mxu0 %v2152
  %3338 = vmatpush1.bf16.msra.mxu0 %v2151
  %3339 = vmatprep.subr.bf16.mxu0 %v2160
  %3340 = vmatpush1.bf16.msra.mxu0 %v2159
  %3341 = vmatprep.subr.bf16.mxu0 %v2168
  %3342 = vmatpush1.bf16.msra.mxu0 %v2167
  %3343 = vmatprep.subr.bf16.mxu0 %v2176
  %3344 = vmatpush1.bf16.msra.mxu0 %v2175
  %3345 = vmatprep.subr.bf16.mxu0 %v2184
  %3346 = vmatpush1.bf16.msra.mxu0 %v2183
  %3347 = vmatprep.subr.bf16.mxu0 %v2192
  %3348 = vmatpush1.bf16.msra.mxu0 %v2191
  %3349 = vmatprep.subr.bf16.mxu0 %v2200
  %3350 = vmatpush1.bf16.msra.mxu0 %v2199
  %3351 = vmatprep.subr.bf16.mxu0 %v2208
  %3352 = vmatpush1.bf16.msra.mxu0 %v2207
  %3353 = vmatprep.subr.bf16.mxu0 %v2216
  %3354 = vmatpush1.bf16.msra.mxu0 %v2215
  %3355 = vmatprep.subr.bf16.mxu0 %v2224
  %3356 = vmatpush1.bf16.msra.mxu0 %v2223
  %3357 = vmatprep.subr.bf16.mxu0 %v2232
  %3358 = vmatpush1.bf16.msra.mxu0 %v2231
  %3359 = vmatprep.subr.bf16.mxu0 %v2240
  %3360 = vmatpush1.bf16.msra.mxu0 %v2239
  %3361 = vmatprep.subr.bf16.mxu0 %v2248
  %3362 = vmatpush1.bf16.msra.mxu0 %v2247
  %3363 = vmatprep.subr.bf16.mxu0 %v2256
  %3364 = vmatpush1.bf16.msra.mxu0 %v2255
  %3365 = vmatprep.subr.bf16.mxu0 %v2264
  %3366 = vmatpush1.bf16.msra.mxu0 %v2263
  %3367 = vmatprep.subr.bf16.mxu0 %v2272
  %3368 = vmatpush1.bf16.msra.mxu0 %v2271
  %3369 = vmatprep.mubr.bf16.mxu0 %v598
  %3370 = vmatmul.mubr.bf16.gmra.mrb[0].mxu0 %v597
  %v3371 = vpop.f32.mrb[0].mxu0
  %v3372 = vadd.f32 %v556, %v3371
  %v3373 = vpop.f32.mrb[0].mxu0
  %v3374 = vadd.f32 %v560, %v3373
  %v3375 = vpop.f32.mrb[0].mxu0
  %v3376 = vpop.f32.mrb[0].mxu0
  %3377 = vdwg.mxu0
  %3378 = vmatprep.subr.bf16.mxu0 %v2280
  %3379 = vmatpush1.bf16.msra.mxu0 %v2279
  %3380 = vmatprep.subr.bf16.mxu0 %v2288
  %3381 = vmatpush1.bf16.msra.mxu0 %v2287
  %3382 = vmatprep.subr.bf16.mxu0 %v2296
  %3383 = vmatpush1.bf16.msra.mxu0 %v2295
  %3384 = vmatprep.subr.bf16.mxu0 %v2304
  %3385 = vmatpush1.bf16.msra.mxu0 %v2303
  %3386 = vmatprep.subr.bf16.mxu0 %v2312
  %3387 = vmatpush1.bf16.msra.mxu0 %v2311
  %3388 = vmatprep.subr.bf16.mxu0 %v2320
  %3389 = vmatpush1.bf16.msra.mxu0 %v2319
  %3390 = vmatprep.subr.bf16.mxu0 %v2328
  %3391 = vmatpush1.bf16.msra.mxu0 %v2327
  %3392 = vmatprep.subr.bf16.mxu0 %v2336
  %3393 = vmatpush1.bf16.msra.mxu0 %v2335
  %3394 = vmatprep.subr.bf16.mxu0 %v2344
  %3395 = vmatpush1.bf16.msra.mxu0 %v2343
  %3396 = vmatprep.subr.bf16.mxu0 %v2352
  %3397 = vmatpush1.bf16.msra.mxu0 %v2351
  %3398 = vmatprep.subr.bf16.mxu0 %v2360
  %3399 = vmatpush1.bf16.msra.mxu0 %v2359
  %3400 = vmatprep.subr.bf16.mxu0 %v2368
  %3401 = vmatpush1.bf16.msra.mxu0 %v2367
  %3402 = vmatprep.subr.bf16.mxu0 %v2376
  %3403 = vmatpush1.bf16.msra.mxu0 %v2375
  %3404 = vmatprep.subr.bf16.mxu0 %v2384
  %3405 = vmatpush1.bf16.msra.mxu0 %v2383
  %3406 = vmatprep.subr.bf16.mxu0 %v2392
  %3407 = vmatpush1.bf16.msra.mxu0 %v2391
  %3408 = vmatprep.subr.bf16.mxu0 %v2400
  %3409 = vmatpush1.bf16.msra.mxu0 %v2399
  %3410 = vmatprep.mubr.bf16.mxu0 %v600
  %3411 = vmatmul.mubr.bf16.gmra.mrb[0].mxu0 %v599
  %v3412 = vpop.f32.mrb[0].mxu0
  %v3413 = vadd.f32 %v3372, %v3412
  %v3414 = vpop.f32.mrb[0].mxu0
  %v3415 = vadd.f32 %v3374, %v3414
  %v3416 = vpop.f32.mrb[0].mxu0
  %v3417 = vpop.f32.mrb[0].mxu0
  %3418 = vdwg.mxu0
  %3419 = vmatprep.subr.bf16.mxu0 %v2408
  %3420 = vmatpush1.bf16.msra.mxu0 %v2407
  %3421 = vmatprep.subr.bf16.mxu0 %v2416
  %3422 = vmatpush1.bf16.msra.mxu0 %v2415
  %3423 = vmatprep.subr.bf16.mxu0 %v2424
  %3424 = vmatpush1.bf16.msra.mxu0 %v2423
  %3425 = vmatprep.subr.bf16.mxu0 %v2432
  %3426 = vmatpush1.bf16.msra.mxu0 %v2431
  %3427 = vmatprep.subr.bf16.mxu0 %v2440
  %3428 = vmatpush1.bf16.msra.mxu0 %v2439
  %3429 = vmatprep.subr.bf16.mxu0 %v2448
  %3430 = vmatpush1.bf16.msra.mxu0 %v2447
  %3431 = vmatprep.subr.bf16.mxu0 %v2456
  %3432 = vmatpush1.bf16.msra.mxu0 %v2455
  %3433 = vmatprep.subr.bf16.mxu0 %v2464
  %3434 = vmatpush1.bf16.msra.mxu0 %v2463
  %3435 = vmatprep.subr.bf16.mxu0 %v2472
  %3436 = vmatpush1.bf16.msra.mxu0 %v2471
  %3437 = vmatprep.subr.bf16.mxu0 %v2480
  %3438 = vmatpush1.bf16.msra.mxu0 %v2479
  %3439 = vmatprep.subr.bf16.mxu0 %v2488
  %3440 = vmatpush1.bf16.msra.mxu0 %v2487
  %3441 = vmatprep.subr.bf16.mxu0 %v2496
  %3442 = vmatpush1.bf16.msra.mxu0 %v2495
  %3443 = vmatprep.subr.bf16.mxu0 %v2504
  %3444 = vmatpush1.bf16.msra.mxu0 %v2503
  %3445 = vmatprep.subr.bf16.mxu0 %v2512
  %3446 = vmatpush1.bf16.msra.mxu0 %v2511
  %3447 = vmatprep.subr.bf16.mxu0 %v2520
  %3448 = vmatpush1.bf16.msra.mxu0 %v2519
  %3449 = vmatprep.subr.bf16.mxu0 %v2528
  %3450 = vmatpush1.bf16.msra.mxu0 %v2527
  %3451 = vmatprep.mubr.bf16.mxu0 %v602
  %3452 = vmatmul.mubr.bf16.gmra.mrb[0].mxu0 %v601
  %v3453 = vpop.f32.mrb[0].mxu0
  %v3454 = vadd.f32 %v3413, %v3453
  %v3455 = vpop.f32.mrb[0].mxu0
  %v3456 = vadd.f32 %v3415, %v3455
  %v3457 = vpop.f32.mrb[0].mxu0
  %v3458 = vpop.f32.mrb[0].mxu0
  %3459 = vdwg.mxu0
  %3460 = vmatprep.subr.bf16.mxu0 %v2536
  %3461 = vmatpush1.bf16.msra.mxu0 %v2535
  %3462 = vmatprep.subr.bf16.mxu0 %v2544
  %3463 = vmatpush1.bf16.msra.mxu0 %v2543
  %3464 = vmatprep.subr.bf16.mxu0 %v2552
  %3465 = vmatpush1.bf16.msra.mxu0 %v2551
  %3466 = vmatprep.subr.bf16.mxu0 %v2560
  %3467 = vmatpush1.bf16.msra.mxu0 %v2559
  %3468 = vmatprep.subr.bf16.mxu0 %v2568
  %3469 = vmatpush1.bf16.msra.mxu0 %v2567
  %3470 = vmatprep.subr.bf16.mxu0 %v2576
  %3471 = vmatpush1.bf16.msra.mxu0 %v2575
  %3472 = vmatprep.subr.bf16.mxu0 %v2584
  %3473 = vmatpush1.bf16.msra.mxu0 %v2583
  %3474 = vmatprep.subr.bf16.mxu0 %v2592
  %3475 = vmatpush1.bf16.msra.mxu0 %v2591
  %3476 = vmatprep.subr.bf16.mxu0 %v2600
  %3477 = vmatpush1.bf16.msra.mxu0 %v2599
  %3478 = vmatprep.subr.bf16.mxu0 %v2608
  %3479 = vmatpush1.bf16.msra.mxu0 %v2607
  %3480 = vmatprep.subr.bf16.mxu0 %v2616
  %3481 = vmatpush1.bf16.msra.mxu0 %v2615
  %3482 = vmatprep.subr.bf16.mxu0 %v2624
  %3483 = vmatpush1.bf16.msra.mxu0 %v2623
  %3484 = vmatprep.subr.bf16.mxu0 %v2632
  %3485 = vmatpush1.bf16.msra.mxu0 %v2631
  %3486 = vmatprep.subr.bf16.mxu0 %v2640
  %3487 = vmatpush1.bf16.msra.mxu0 %v2639
  %3488 = vmatprep.subr.bf16.mxu0 %v2648
  %3489 = vmatpush1.bf16.msra.mxu0 %v2647
  %3490 = vmatprep.subr.bf16.mxu0 %v2656
  %3491 = vmatpush1.bf16.msra.mxu0 %v2655
  %3492 = vmatprep.mubr.bf16.mxu0 %v604
  %3493 = vmatmul.mubr.bf16.gmra.mrb[0].mxu0 %v603
  %v3494 = vpop.f32.mrb[0].mxu0
  %v3495 = vadd.f32 %v3454, %v3494
  %v3496 = vpop.f32.mrb[0].mxu0
  %v3497 = vadd.f32 %v3456, %v3496
  %v3498 = vpop.f32.mrb[0].mxu0
  %v3499 = vpop.f32.mrb[0].mxu0
  %3500 = vdwg.mxu0
  %3501 = vmatprep.subr.bf16.mxu0 %v2154
  %3502 = vmatpush1.bf16.msra.mxu0 %v2153
  %3503 = vmatprep.subr.bf16.mxu0 %v2162
  %3504 = vmatpush1.bf16.msra.mxu0 %v2161
  %3505 = vmatprep.subr.bf16.mxu0 %v2170
  %3506 = vmatpush1.bf16.msra.mxu0 %v2169
  %3507 = vmatprep.subr.bf16.mxu0 %v2178
  %3508 = vmatpush1.bf16.msra.mxu0 %v2177
  %3509 = vmatprep.subr.bf16.mxu0 %v2186
  %3510 = vmatpush1.bf16.msra.mxu0 %v2185
  %3511 = vmatprep.subr.bf16.mxu0 %v2194
  %3512 = vmatpush1.bf16.msra.mxu0 %v2193
  %3513 = vmatprep.subr.bf16.mxu0 %v2202
  %3514 = vmatpush1.bf16.msra.mxu0 %v2201
  %3515 = vmatprep.subr.bf16.mxu0 %v2210
  %3516 = vmatpush1.bf16.msra.mxu0 %v2209
  %3517 = vmatprep.subr.bf16.mxu0 %v2218
  %3518 = vmatpush1.bf16.msra.mxu0 %v2217
  %3519 = vmatprep.subr.bf16.mxu0 %v2226
  %3520 = vmatpush1.bf16.msra.mxu0 %v2225
  %3521 = vmatprep.subr.bf16.mxu0 %v2234
  %3522 = vmatpush1.bf16.msra.mxu0 %v2233
  %3523 = vmatprep.subr.bf16.mxu0 %v2242
  %3524 = vmatpush1.bf16.msra.mxu0 %v2241
  %3525 = vmatprep.subr.bf16.mxu0 %v2250
  %3526 = vmatpush1.bf16.msra.mxu0 %v2249
  %3527 = vmatprep.subr.bf16.mxu0 %v2258
  %3528 = vmatpush1.bf16.msra.mxu0 %v2257
  %3529 = vmatprep.subr.bf16.mxu0 %v2266
  %3530 = vmatpush1.bf16.msra.mxu0 %v2265
  %3531 = vmatprep.subr.bf16.mxu0 %v2274
  %3532 = vmatpush1.bf16.msra.mxu0 %v2273
  %3533 = vmatprep.mubr.bf16.mxu0 %v598
  %3534 = vmatmul.mubr.bf16.gmra.mrb[0].mxu0 %v597
  %v3535 = vpop.f32.mrb[0].mxu0
  %v3536 = vadd.f32 %v564, %v3535
  %v3537 = vpop.f32.mrb[0].mxu0
  %v3538 = vadd.f32 %v568, %v3537
  %v3539 = vpop.f32.mrb[0].mxu0
  %v3540 = vpop.f32.mrb[0].mxu0
  %3541 = vdwg.mxu0
  %3542 = vmatprep.subr.bf16.mxu0 %v2282
  %3543 = vmatpush1.bf16.msra.mxu0 %v2281
  %3544 = vmatprep.subr.bf16.mxu0 %v2290
  %3545 = vmatpush1.bf16.msra.mxu0 %v2289
  %3546 = vmatprep.subr.bf16.mxu0 %v2298
  %3547 = vmatpush1.bf16.msra.mxu0 %v2297
  %3548 = vmatprep.subr.bf16.mxu0 %v2306
  %3549 = vmatpush1.bf16.msra.mxu0 %v2305
  %3550 = vmatprep.subr.bf16.mxu0 %v2314
  %3551 = vmatpush1.bf16.msra.mxu0 %v2313
  %3552 = vmatprep.subr.bf16.mxu0 %v2322
  %3553 = vmatpush1.bf16.msra.mxu0 %v2321
  %3554 = vmatprep.subr.bf16.mxu0 %v2330
  %3555 = vmatpush1.bf16.msra.mxu0 %v2329
  %3556 = vmatprep.subr.bf16.mxu0 %v2338
  %3557 = vmatpush1.bf16.msra.mxu0 %v2337
  %3558 = vmatprep.subr.bf16.mxu0 %v2346
  %3559 = vmatpush1.bf16.msra.mxu0 %v2345
  %3560 = vmatprep.subr.bf16.mxu0 %v2354
  %3561 = vmatpush1.bf16.msra.mxu0 %v2353
  %3562 = vmatprep.subr.bf16.mxu0 %v2362
  %3563 = vmatpush1.bf16.msra.mxu0 %v2361
  %3564 = vmatprep.subr.bf16.mxu0 %v2370
  %3565 = vmatpush1.bf16.msra.mxu0 %v2369
  %3566 = vmatprep.subr.bf16.mxu0 %v2378
  %3567 = vmatpush1.bf16.msra.mxu0 %v2377
  %3568 = vmatprep.subr.bf16.mxu0 %v2386
  %3569 = vmatpush1.bf16.msra.mxu0 %v2385
  %3570 = vmatprep.subr.bf16.mxu0 %v2394
  %3571 = vmatpush1.bf16.msra.mxu0 %v2393
  %3572 = vmatprep.subr.bf16.mxu0 %v2402
  %3573 = vmatpush1.bf16.msra.mxu0 %v2401
  %3574 = vmatprep.mubr.bf16.mxu0 %v600
  %3575 = vmatmul.mubr.bf16.gmra.mrb[0].mxu0 %v599
  %v3576 = vpop.f32.mrb[0].mxu0
  %v3577 = vadd.f32 %v3536, %v3576
  %v3578 = vpop.f32.mrb[0].mxu0
  %v3579 = vadd.f32 %v3538, %v3578
  %v3580 = vpop.f32.mrb[0].mxu0
  %v3581 = vpop.f32.mrb[0].mxu0
  %3582 = vdwg.mxu0
  %3583 = vmatprep.subr.bf16.mxu0 %v2410
  %3584 = vmatpush1.bf16.msra.mxu0 %v2409
  %3585 = vmatprep.subr.bf16.mxu0 %v2418
  %3586 = vmatpush1.bf16.msra.mxu0 %v2417
  %3587 = vmatprep.subr.bf16.mxu0 %v2426
  %3588 = vmatpush1.bf16.msra.mxu0 %v2425
  %3589 = vmatprep.subr.bf16.mxu0 %v2434
  %3590 = vmatpush1.bf16.msra.mxu0 %v2433
  %3591 = vmatprep.subr.bf16.mxu0 %v2442
  %3592 = vmatpush1.bf16.msra.mxu0 %v2441
  %3593 = vmatprep.subr.bf16.mxu0 %v2450
  %3594 = vmatpush1.bf16.msra.mxu0 %v2449
  %3595 = vmatprep.subr.bf16.mxu0 %v2458
  %3596 = vmatpush1.bf16.msra.mxu0 %v2457
  %3597 = vmatprep.subr.bf16.mxu0 %v2466
  %3598 = vmatpush1.bf16.msra.mxu0 %v2465
  %3599 = vmatprep.subr.bf16.mxu0 %v2474
  %3600 = vmatpush1.bf16.msra.mxu0 %v2473
  %3601 = vmatprep.subr.bf16.mxu0 %v2482
  %3602 = vmatpush1.bf16.msra.mxu0 %v2481
  %3603 = vmatprep.subr.bf16.mxu0 %v2490
  %3604 = vmatpush1.bf16.msra.mxu0 %v2489
  %3605 = vmatprep.subr.bf16.mxu0 %v2498
  %3606 = vmatpush1.bf16.msra.mxu0 %v2497
  %3607 = vmatprep.subr.bf16.mxu0 %v2506
  %3608 = vmatpush1.bf16.msra.mxu0 %v2505
  %3609 = vmatprep.subr.bf16.mxu0 %v2514
  %3610 = vmatpush1.bf16.msra.mxu0 %v2513
  %3611 = vmatprep.subr.bf16.mxu0 %v2522
  %3612 = vmatpush1.bf16.msra.mxu0 %v2521
  %3613 = vmatprep.subr.bf16.mxu0 %v2530
  %3614 = vmatpush1.bf16.msra.mxu0 %v2529
  %3615 = vmatprep.mubr.bf16.mxu0 %v602
  %3616 = vmatmul.mubr.bf16.gmra.mrb[0].mxu0 %v601
  %v3617 = vpop.f32.mrb[0].mxu0
  %v3618 = vadd.f32 %v3577, %v3617
  %v3619 = vpop.f32.mrb[0].mxu0
  %v3620 = vadd.f32 %v3579, %v3619
  %v3621 = vpop.f32.mrb[0].mxu0
  %v3622 = vpop.f32.mrb[0].mxu0
  %3623 = vdwg.mxu0
  %3624 = vmatprep.subr.bf16.mxu0 %v2538
  %3625 = vmatpush1.bf16.msra.mxu0 %v2537
  %3626 = vmatprep.subr.bf16.mxu0 %v2546
  %3627 = vmatpush1.bf16.msra.mxu0 %v2545
  %3628 = vmatprep.subr.bf16.mxu0 %v2554
  %3629 = vmatpush1.bf16.msra.mxu0 %v2553
  %3630 = vmatprep.subr.bf16.mxu0 %v2562
  %3631 = vmatpush1.bf16.msra.mxu0 %v2561
  %3632 = vmatprep.subr.bf16.mxu0 %v2570
  %3633 = vmatpush1.bf16.msra.mxu0 %v2569
  %3634 = vmatprep.subr.bf16.mxu0 %v2578
  %3635 = vmatpush1.bf16.msra.mxu0 %v2577
  %3636 = vmatprep.subr.bf16.mxu0 %v2586
  %3637 = vmatpush1.bf16.msra.mxu0 %v2585
  %3638 = vmatprep.subr.bf16.mxu0 %v2594
  %3639 = vmatpush1.bf16.msra.mxu0 %v2593
  %3640 = vmatprep.subr.bf16.mxu0 %v2602
  %3641 = vmatpush1.bf16.msra.mxu0 %v2601
  %3642 = vmatprep.subr.bf16.mxu0 %v2610
  %3643 = vmatpush1.bf16.msra.mxu0 %v2609
  %3644 = vmatprep.subr.bf16.mxu0 %v2618
  %3645 = vmatpush1.bf16.msra.mxu0 %v2617
  %3646 = vmatprep.subr.bf16.mxu0 %v2626
  %3647 = vmatpush1.bf16.msra.mxu0 %v2625
  %3648 = vmatprep.subr.bf16.mxu0 %v2634
  %3649 = vmatpush1.bf16.msra.mxu0 %v2633
  %3650 = vmatprep.subr.bf16.mxu0 %v2642
  %3651 = vmatpush1.bf16.msra.mxu0 %v2641
  %3652 = vmatprep.subr.bf16.mxu0 %v2650
  %3653 = vmatpush1.bf16.msra.mxu0 %v2649
  %3654 = vmatprep.subr.bf16.mxu0 %v2658
  %3655 = vmatpush1.bf16.msra.mxu0 %v2657
  %3656 = vmatprep.mubr.bf16.mxu0 %v604
  %3657 = vmatmul.mubr.bf16.gmra.mrb[0].mxu0 %v603
  %v3658 = vpop.f32.mrb[0].mxu0
  %v3659 = vadd.f32 %v3618, %v3658
  %v3660 = vpop.f32.mrb[0].mxu0
  %v3661 = vadd.f32 %v3620, %v3660
  %v3662 = vpop.f32.mrb[0].mxu0
  %v3663 = vpop.f32.mrb[0].mxu0
  %3664 = vdwg.mxu0
  %3665 = vmatprep.subr.bf16.mxu0 %v2156
  %3666 = vmatpush1.bf16.msra.mxu0 %v2155
  %3667 = vmatprep.subr.bf16.mxu0 %v2164
  %3668 = vmatpush1.bf16.msra.mxu0 %v2163
  %3669 = vmatprep.subr.bf16.mxu0 %v2172
  %3670 = vmatpush1.bf16.msra.mxu0 %v2171
  %3671 = vmatprep.subr.bf16.mxu0 %v2180
  %3672 = vmatpush1.bf16.msra.mxu0 %v2179
  %3673 = vmatprep.subr.bf16.mxu0 %v2188
  %3674 = vmatpush1.bf16.msra.mxu0 %v2187
  %3675 = vmatprep.subr.bf16.mxu0 %v2196
  %3676 = vmatpush1.bf16.msra.mxu0 %v2195
  %3677 = vmatprep.subr.bf16.mxu0 %v2204
  %3678 = vmatpush1.bf16.msra.mxu0 %v2203
  %3679 = vmatprep.subr.bf16.mxu0 %v2212
  %3680 = vmatpush1.bf16.msra.mxu0 %v2211
  %3681 = vmatprep.subr.bf16.mxu0 %v2220
  %3682 = vmatpush1.bf16.msra.mxu0 %v2219
  %3683 = vmatprep.subr.bf16.mxu0 %v2228
  %3684 = vmatpush1.bf16.msra.mxu0 %v2227
  %3685 = vmatprep.subr.bf16.mxu0 %v2236
  %3686 = vmatpush1.bf16.msra.mxu0 %v2235
  %3687 = vmatprep.subr.bf16.mxu0 %v2244
  %3688 = vmatpush1.bf16.msra.mxu0 %v2243
  %3689 = vmatprep.subr.bf16.mxu0 %v2252
  %3690 = vmatpush1.bf16.msra.mxu0 %v2251
  %3691 = vmatprep.subr.bf16.mxu0 %v2260
  %3692 = vmatpush1.bf16.msra.mxu0 %v2259
  %3693 = vmatprep.subr.bf16.mxu0 %v2268
  %3694 = vmatpush1.bf16.msra.mxu0 %v2267
  %3695 = vmatprep.subr.bf16.mxu0 %v2276
  %3696 = vmatpush1.bf16.msra.mxu0 %v2275
  %3697 = vmatprep.mubr.bf16.mxu0 %v598
  %3698 = vmatmul.mubr.bf16.gmra.mrb[0].mxu0 %v597
  %v3699 = vpop.f32.mrb[0].mxu0
  %v3700 = vadd.f32 %v572, %v3699
  %v3701 = vpop.f32.mrb[0].mxu0
  %v3702 = vadd.f32 %v576, %v3701
  %v3703 = vpop.f32.mrb[0].mxu0
  %v3704 = vpop.f32.mrb[0].mxu0
  %3705 = vdwg.mxu0
  %3706 = vmatprep.subr.bf16.mxu0 %v2284
  %3707 = vmatpush1.bf16.msra.mxu0 %v2283
  %3708 = vmatprep.subr.bf16.mxu0 %v2292
  %3709 = vmatpush1.bf16.msra.mxu0 %v2291
  %3710 = vmatprep.subr.bf16.mxu0 %v2300
  %3711 = vmatpush1.bf16.msra.mxu0 %v2299
  %3712 = vmatprep.subr.bf16.mxu0 %v2308
  %3713 = vmatpush1.bf16.msra.mxu0 %v2307
  %3714 = vmatprep.subr.bf16.mxu0 %v2316
  %3715 = vmatpush1.bf16.msra.mxu0 %v2315
  %3716 = vmatprep.subr.bf16.mxu0 %v2324
  %3717 = vmatpush1.bf16.msra.mxu0 %v2323
  %3718 = vmatprep.subr.bf16.mxu0 %v2332
  %3719 = vmatpush1.bf16.msra.mxu0 %v2331
  %3720 = vmatprep.subr.bf16.mxu0 %v2340
  %3721 = vmatpush1.bf16.msra.mxu0 %v2339
  %3722 = vmatprep.subr.bf16.mxu0 %v2348
  %3723 = vmatpush1.bf16.msra.mxu0 %v2347
  %3724 = vmatprep.subr.bf16.mxu0 %v2356
  %3725 = vmatpush1.bf16.msra.mxu0 %v2355
  %3726 = vmatprep.subr.bf16.mxu0 %v2364
  %3727 = vmatpush1.bf16.msra.mxu0 %v2363
  %3728 = vmatprep.subr.bf16.mxu0 %v2372
  %3729 = vmatpush1.bf16.msra.mxu0 %v2371
  %3730 = vmatprep.subr.bf16.mxu0 %v2380
  %3731 = vmatpush1.bf16.msra.mxu0 %v2379
  %3732 = vmatprep.subr.bf16.mxu0 %v2388
  %3733 = vmatpush1.bf16.msra.mxu0 %v2387
  %3734 = vmatprep.subr.bf16.mxu0 %v2396
  %3735 = vmatpush1.bf16.msra.mxu0 %v2395
  %3736 = vmatprep.subr.bf16.mxu0 %v2404
  %3737 = vmatpush1.bf16.msra.mxu0 %v2403
  %3738 = vmatprep.mubr.bf16.mxu0 %v600
  %3739 = vmatmul.mubr.bf16.gmra.mrb[0].mxu0 %v599
  %v3740 = vpop.f32.mrb[0].mxu0
  %v3741 = vadd.f32 %v3700, %v3740
  %v3742 = vpop.f32.mrb[0].mxu0
  %v3743 = vadd.f32 %v3702, %v3742
  %v3744 = vpop.f32.mrb[0].mxu0
  %v3745 = vpop.f32.mrb[0].mxu0
  %3746 = vdwg.mxu0
  %3747 = vmatprep.subr.bf16.mxu0 %v2412
  %3748 = vmatpush1.bf16.msra.mxu0 %v2411
  %3749 = vmatprep.subr.bf16.mxu0 %v2420
  %3750 = vmatpush1.bf16.msra.mxu0 %v2419
  %3751 = vmatprep.subr.bf16.mxu0 %v2428
  %3752 = vmatpush1.bf16.msra.mxu0 %v2427
  %3753 = vmatprep.subr.bf16.mxu0 %v2436
  %3754 = vmatpush1.bf16.msra.mxu0 %v2435
  %3755 = vmatprep.subr.bf16.mxu0 %v2444
  %3756 = vmatpush1.bf16.msra.mxu0 %v2443
  %3757 = vmatprep.subr.bf16.mxu0 %v2452
  %3758 = vmatpush1.bf16.msra.mxu0 %v2451
  %3759 = vmatprep.subr.bf16.mxu0 %v2460
  %3760 = vmatpush1.bf16.msra.mxu0 %v2459
  %3761 = vmatprep.subr.bf16.mxu0 %v2468
  %3762 = vmatpush1.bf16.msra.mxu0 %v2467
  %3763 = vmatprep.subr.bf16.mxu0 %v2476
  %3764 = vmatpush1.bf16.msra.mxu0 %v2475
  %3765 = vmatprep.subr.bf16.mxu0 %v2484
  %3766 = vmatpush1.bf16.msra.mxu0 %v2483
  %3767 = vmatprep.subr.bf16.mxu0 %v2492
  %3768 = vmatpush1.bf16.msra.mxu0 %v2491
  %3769 = vmatprep.subr.bf16.mxu0 %v2500
  %3770 = vmatpush1.bf16.msra.mxu0 %v2499
  %3771 = vmatprep.subr.bf16.mxu0 %v2508
  %3772 = vmatpush1.bf16.msra.mxu0 %v2507
  %3773 = vmatprep.subr.bf16.mxu0 %v2516
  %3774 = vmatpush1.bf16.msra.mxu0 %v2515
  %3775 = vmatprep.subr.bf16.mxu0 %v2524
  %3776 = vmatpush1.bf16.msra.mxu0 %v2523
  %3777 = vmatprep.subr.bf16.mxu0 %v2532
  %3778 = vmatpush1.bf16.msra.mxu0 %v2531
  %3779 = vmatprep.mubr.bf16.mxu0 %v602
  %3780 = vmatmul.mubr.bf16.gmra.mrb[0].mxu0 %v601
  %v3781 = vpop.f32.mrb[0].mxu0
  %v3782 = vadd.f32 %v3741, %v3781
  %v3783 = vpop.f32.mrb[0].mxu0
  %v3784 = vadd.f32 %v3743, %v3783
  %v3785 = vpop.f32.mrb[0].mxu0
  %v3786 = vpop.f32.mrb[0].mxu0
  %3787 = vdwg.mxu0
  %3788 = vmatprep.subr.bf16.mxu0 %v2540
  %3789 = vmatpush1.bf16.msra.mxu0 %v2539
  %3790 = vmatprep.subr.bf16.mxu0 %v2548
  %3791 = vmatpush1.bf16.msra.mxu0 %v2547
  %3792 = vmatprep.subr.bf16.mxu0 %v2556
  %3793 = vmatpush1.bf16.msra.mxu0 %v2555
  %3794 = vmatprep.subr.bf16.mxu0 %v2564
  %3795 = vmatpush1.bf16.msra.mxu0 %v2563
  %3796 = vmatprep.subr.bf16.mxu0 %v2572
  %3797 = vmatpush1.bf16.msra.mxu0 %v2571
  %3798 = vmatprep.subr.bf16.mxu0 %v2580
  %3799 = vmatpush1.bf16.msra.mxu0 %v2579
  %3800 = vmatprep.subr.bf16.mxu0 %v2588
  %3801 = vmatpush1.bf16.msra.mxu0 %v2587
  %3802 = vmatprep.subr.bf16.mxu0 %v2596
  %3803 = vmatpush1.bf16.msra.mxu0 %v2595
  %3804 = vmatprep.subr.bf16.mxu0 %v2604
  %3805 = vmatpush1.bf16.msra.mxu0 %v2603
  %3806 = vmatprep.subr.bf16.mxu0 %v2612
  %3807 = vmatpush1.bf16.msra.mxu0 %v2611
  %3808 = vmatprep.subr.bf16.mxu0 %v2620
  %3809 = vmatpush1.bf16.msra.mxu0 %v2619
  %3810 = vmatprep.subr.bf16.mxu0 %v2628
  %3811 = vmatpush1.bf16.msra.mxu0 %v2627
  %3812 = vmatprep.subr.bf16.mxu0 %v2636
  %3813 = vmatpush1.bf16.msra.mxu0 %v2635
  %3814 = vmatprep.subr.bf16.mxu0 %v2644
  %3815 = vmatpush1.bf16.msra.mxu0 %v2643
  %3816 = vmatprep.subr.bf16.mxu0 %v2652
  %3817 = vmatpush1.bf16.msra.mxu0 %v2651
  %3818 = vmatprep.subr.bf16.mxu0 %v2660
  %3819 = vmatpush1.bf16.msra.mxu0 %v2659
  %3820 = vmatprep.mubr.bf16.mxu0 %v604
  %3821 = vmatmul.mubr.bf16.gmra.mrb[0].mxu0 %v603
  %v3822 = vpop.f32.mrb[0].mxu0
  %v3823 = vadd.f32 %v3782, %v3822
  %v3824 = vpop.f32.mrb[0].mxu0
  %v3825 = vadd.f32 %v3784, %v3824
  %v3826 = vpop.f32.mrb[0].mxu0
  %v3827 = vpop.f32.mrb[0].mxu0
  %3828 = vdwg.mxu0
  %v3829 = vpack.c.bf16 %v3331, %v3331
  %v3830 = vpack.c.bf16 %v3333, %v3333
  %v3831 = vpack.c.bf16 %v3495, %v3495
  %v3832 = vpack.c.bf16 %v3497, %v3497
  %v3833 = vpack.c.bf16 %v3659, %v3659
  %v3834 = vpack.c.bf16 %v3661, %v3661
  %v3835 = vpack.c.bf16 %v3823, %v3823
  %v3836 = vpack.c.bf16 %v3825, %v3825
  %v3837 = vld [vmem:[%s3] sm:$0xf]
  %v3838 = vld [vmem:[%s3 + $0x4] sm:$0xf]
  %v3839 = vld [vmem:[%s3 + $0x8] sm:$0xf]
  %v3840 = vld [vmem:[%s3 + $0xc] sm:$0xf]
  %v3841 = vld [vmem:[%s3 + $0x10] sm:$0xf]
  %v3842 = vld [vmem:[%s3 + $0x14] sm:$0xf]
  %v3843 = vld [vmem:[%s3 + $0x18] sm:$0xf]
  %v3844 = vld [vmem:[%s3 + $0x1c] sm:$0xf]
  %v3845 = vld [vmem:[%s3 + $0x20] sm:$0xf]
  %v3846 = vld [vmem:[%s3 + $0x24] sm:$0xf]
  %v3847 = vld [vmem:[%s3 + $0x28] sm:$0xf]
  %v3848 = vld [vmem:[%s3 + $0x2c] sm:$0xf]
  %v3849 = vld [vmem:[%s3 + $0x30] sm:$0xf]
  %v3850 = vld [vmem:[%s3 + $0x34] sm:$0xf]
  %v3851 = vld [vmem:[%s3 + $0x38] sm:$0xf]
  %v3852 = vld [vmem:[%s3 + $0x3c] sm:$0xf]
  %v3853 = vld [vmem:[%s3 + $0x40] sm:$0xf]
  %v3854 = vld [vmem:[%s3 + $0x44] sm:$0xf]
  %v3855 = vld [vmem:[%s3 + $0x48] sm:$0xf]
  %v3856 = vld [vmem:[%s3 + $0x4c] sm:$0xf]
  %v3857 = vld [vmem:[%s3 + $0x50] sm:$0xf]
  %v3858 = vld [vmem:[%s3 + $0x54] sm:$0xf]
  %v3859 = vld [vmem:[%s3 + $0x58] sm:$0xf]
  %v3860 = vld [vmem:[%s3 + $0x5c] sm:$0xf]
  %v3861 = vld [vmem:[%s3 + $0x60] sm:$0xf]
  %v3862 = vld [vmem:[%s3 + $0x64] sm:$0xf]
  %v3863 = vld [vmem:[%s3 + $0x68] sm:$0xf]
  %v3864 = vld [vmem:[%s3 + $0x6c] sm:$0xf]
  %v3865 = vld [vmem:[%s3 + $0x70] sm:$0xf]
  %v3866 = vld [vmem:[%s3 + $0x74] sm:$0xf]
  %v3867 = vld [vmem:[%s3 + $0x78] sm:$0xf]
  %v3868 = vld [vmem:[%s3 + $0x7c] sm:$0xf]
  %v3869 = vld [vmem:[%s3 + $0x80] sm:$0xf]
  %v3870 = vld [vmem:[%s3 + $0x84] sm:$0xf]
  %v3871 = vld [vmem:[%s3 + $0x88] sm:$0xf]
  %v3872 = vld [vmem:[%s3 + $0x8c] sm:$0xf]
  %v3873 = vld [vmem:[%s3 + $0x90] sm:$0xf]
  %v3874 = vld [vmem:[%s3 + $0x94] sm:$0xf]
  %v3875 = vld [vmem:[%s3 + $0x98] sm:$0xf]
  %v3876 = vld [vmem:[%s3 + $0x9c] sm:$0xf]
  %v3877 = vld [vmem:[%s3 + $0xa0] sm:$0xf]
  %v3878 = vld [vmem:[%s3 + $0xa4] sm:$0xf]
  %v3879 = vld [vmem:[%s3 + $0xa8] sm:$0xf]
  %v3880 = vld [vmem:[%s3 + $0xac] sm:$0xf]
  %v3881 = vld [vmem:[%s3 + $0xb0] sm:$0xf]
  %v3882 = vld [vmem:[%s3 + $0xb4] sm:$0xf]
  %v3883 = vld [vmem:[%s3 + $0xb8] sm:$0xf]
  %v3884 = vld [vmem:[%s3 + $0xbc] sm:$0xf]
  %v3885 = vld [vmem:[%s3 + $0xc0] sm:$0xf]
  %v3886 = vld [vmem:[%s3 + $0xc4] sm:$0xf]
  %v3887 = vld [vmem:[%s3 + $0xc8] sm:$0xf]
  %v3888 = vld [vmem:[%s3 + $0xcc] sm:$0xf]
  %v3889 = vld [vmem:[%s3 + $0xd0] sm:$0xf]
  %v3890 = vld [vmem:[%s3 + $0xd4] sm:$0xf]
  %v3891 = vld [vmem:[%s3 + $0xd8] sm:$0xf]
  %v3892 = vld [vmem:[%s3 + $0xdc] sm:$0xf]
  %v3893 = vld [vmem:[%s3 + $0xe0] sm:$0xf]
  %v3894 = vld [vmem:[%s3 + $0xe4] sm:$0xf]
  %v3895 = vld [vmem:[%s3 + $0xe8] sm:$0xf]
  %v3896 = vld [vmem:[%s3 + $0xec] sm:$0xf]
  %v3897 = vld [vmem:[%s3 + $0xf0] sm:$0xf]
  %v3898 = vld [vmem:[%s3 + $0xf4] sm:$0xf]
  %v3899 = vld [vmem:[%s3 + $0xf8] sm:$0xf]
  %v3900 = vld [vmem:[%s3 + $0xfc] sm:$0xf]
  %v3901 = vld [vmem:[%s3 + $0x100] sm:$0xf]
  %v3902 = vld [vmem:[%s3 + $0x104] sm:$0xf]
  %v3903 = vld [vmem:[%s3 + $0x108] sm:$0xf]
  %v3904 = vld [vmem:[%s3 + $0x10c] sm:$0xf]
  %v3905 = vld [vmem:[%s3 + $0x110] sm:$0xf]
  %v3906 = vld [vmem:[%s3 + $0x114] sm:$0xf]
  %v3907 = vld [vmem:[%s3 + $0x118] sm:$0xf]
  %v3908 = vld [vmem:[%s3 + $0x11c] sm:$0xf]
  %v3909 = vld [vmem:[%s3 + $0x120] sm:$0xf]
  %v3910 = vld [vmem:[%s3 + $0x124] sm:$0xf]
  %v3911 = vld [vmem:[%s3 + $0x128] sm:$0xf]
  %v3912 = vld [vmem:[%s3 + $0x12c] sm:$0xf]
  %v3913 = vld [vmem:[%s3 + $0x130] sm:$0xf]
  %v3914 = vld [vmem:[%s3 + $0x134] sm:$0xf]
  %v3915 = vld [vmem:[%s3 + $0x138] sm:$0xf]
  %v3916 = vld [vmem:[%s3 + $0x13c] sm:$0xf]
  %v3917 = vld [vmem:[%s3 + $0x140] sm:$0xf]
  %v3918 = vld [vmem:[%s3 + $0x144] sm:$0xf]
  %v3919 = vld [vmem:[%s3 + $0x148] sm:$0xf]
  %v3920 = vld [vmem:[%s3 + $0x14c] sm:$0xf]
  %v3921 = vld [vmem:[%s3 + $0x150] sm:$0xf]
  %v3922 = vld [vmem:[%s3 + $0x154] sm:$0xf]
  %v3923 = vld [vmem:[%s3 + $0x158] sm:$0xf]
  %v3924 = vld [vmem:[%s3 + $0x15c] sm:$0xf]
  %v3925 = vld [vmem:[%s3 + $0x160] sm:$0xf]
  %v3926 = vld [vmem:[%s3 + $0x164] sm:$0xf]
  %v3927 = vld [vmem:[%s3 + $0x168] sm:$0xf]
  %v3928 = vld [vmem:[%s3 + $0x16c] sm:$0xf]
  %v3929 = vld [vmem:[%s3 + $0x170] sm:$0xf]
  %v3930 = vld [vmem:[%s3 + $0x174] sm:$0xf]
  %v3931 = vld [vmem:[%s3 + $0x178] sm:$0xf]
  %v3932 = vld [vmem:[%s3 + $0x17c] sm:$0xf]
  %v3933 = vld [vmem:[%s3 + $0x180] sm:$0xf]
  %v3934 = vld [vmem:[%s3 + $0x184] sm:$0xf]
  %v3935 = vld [vmem:[%s3 + $0x188] sm:$0xf]
  %v3936 = vld [vmem:[%s3 + $0x18c] sm:$0xf]
  %v3937 = vld [vmem:[%s3 + $0x190] sm:$0xf]
  %v3938 = vld [vmem:[%s3 + $0x194] sm:$0xf]
  %v3939 = vld [vmem:[%s3 + $0x198] sm:$0xf]
  %v3940 = vld [vmem:[%s3 + $0x19c] sm:$0xf]
  %v3941 = vld [vmem:[%s3 + $0x1a0] sm:$0xf]
  %v3942 = vld [vmem:[%s3 + $0x1a4] sm:$0xf]
  %v3943 = vld [vmem:[%s3 + $0x1a8] sm:$0xf]
  %v3944 = vld [vmem:[%s3 + $0x1ac] sm:$0xf]
  %v3945 = vld [vmem:[%s3 + $0x1b0] sm:$0xf]
  %v3946 = vld [vmem:[%s3 + $0x1b4] sm:$0xf]
  %v3947 = vld [vmem:[%s3 + $0x1b8] sm:$0xf]
  %v3948 = vld [vmem:[%s3 + $0x1bc] sm:$0xf]
  %v3949 = vld [vmem:[%s3 + $0x1c0] sm:$0xf]
  %v3950 = vld [vmem:[%s3 + $0x1c4] sm:$0xf]
  %v3951 = vld [vmem:[%s3 + $0x1c8] sm:$0xf]
  %v3952 = vld [vmem:[%s3 + $0x1cc] sm:$0xf]
  %v3953 = vld [vmem:[%s3 + $0x1d0] sm:$0xf]
  %v3954 = vld [vmem:[%s3 + $0x1d4] sm:$0xf]
  %v3955 = vld [vmem:[%s3 + $0x1d8] sm:$0xf]
  %v3956 = vld [vmem:[%s3 + $0x1dc] sm:$0xf]
  %v3957 = vld [vmem:[%s3 + $0x1e0] sm:$0xf]
  %v3958 = vld [vmem:[%s3 + $0x1e4] sm:$0xf]
  %v3959 = vld [vmem:[%s3 + $0x1e8] sm:$0xf]
  %v3960 = vld [vmem:[%s3 + $0x1ec] sm:$0xf]
  %v3961 = vld [vmem:[%s3 + $0x1f0] sm:$0xf]
  %v3962 = vld [vmem:[%s3 + $0x1f4] sm:$0xf]
  %v3963 = vld [vmem:[%s3 + $0x1f8] sm:$0xf]
  %v3964 = vld [vmem:[%s3 + $0x1fc] sm:$0xf]
  %v3965 = vld [vmem:[%s4] sm:$0x1]
  %v3967 = vlaneseq
  %v3968 = vshrl.u32 %v3967, 7
  %v3969 = vsub.s32 0, %v3968
  %v3970 = vrot.slane %v3965, %v3969
  %v4100 = vunpack.c.l.b16 %v3837
  %v4101 = vunpack.c.l.b16 %v3838
  %v4102 = vunpack.c.l.b16 %v3839
  %v4103 = vunpack.c.l.b16 %v3840
  %v4104 = vunpack.c.l.b16 %v3841
  %v4105 = vunpack.c.l.b16 %v3842
  %v4106 = vunpack.c.l.b16 %v3843
  %v4107 = vunpack.c.l.b16 %v3844
  %v4108 = vunpack.c.l.b16 %v3845
  %v4109 = vunpack.c.l.b16 %v3846
  %v4110 = vunpack.c.l.b16 %v3847
  %v4111 = vunpack.c.l.b16 %v3848
  %v4112 = vunpack.c.l.b16 %v3849
  %v4113 = vunpack.c.l.b16 %v3850
  %v4114 = vunpack.c.l.b16 %v3851
  %v4115 = vunpack.c.l.b16 %v3852
  %v4116 = vunpack.c.l.b16 %v3853
  %v4117 = vunpack.c.l.b16 %v3854
  %v4118 = vunpack.c.l.b16 %v3855
  %v4119 = vunpack.c.l.b16 %v3856
  %v4120 = vunpack.c.l.b16 %v3857
  %v4121 = vunpack.c.l.b16 %v3858
  %v4122 = vunpack.c.l.b16 %v3859
  %v4123 = vunpack.c.l.b16 %v3860
  %v4124 = vunpack.c.l.b16 %v3861
  %v4125 = vunpack.c.l.b16 %v3862
  %v4126 = vunpack.c.l.b16 %v3863
  %v4127 = vunpack.c.l.b16 %v3864
  %v4128 = vunpack.c.l.b16 %v3865
  %v4129 = vunpack.c.l.b16 %v3866
  %v4130 = vunpack.c.l.b16 %v3867
  %v4131 = vunpack.c.l.b16 %v3868
  %v4132 = vunpack.c.l.b16 %v3869
  %v4133 = vunpack.c.l.b16 %v3870
  %v4134 = vunpack.c.l.b16 %v3871
  %v4135 = vunpack.c.l.b16 %v3872
  %v4136 = vunpack.c.l.b16 %v3873
  %v4137 = vunpack.c.l.b16 %v3874
  %v4138 = vunpack.c.l.b16 %v3875
  %v4139 = vunpack.c.l.b16 %v3876
  %v4140 = vunpack.c.l.b16 %v3877
  %v4141 = vunpack.c.l.b16 %v3878
  %v4142 = vunpack.c.l.b16 %v3879
  %v4143 = vunpack.c.l.b16 %v3880
  %v4144 = vunpack.c.l.b16 %v3881
  %v4145 = vunpack.c.l.b16 %v3882
  %v4146 = vunpack.c.l.b16 %v3883
  %v4147 = vunpack.c.l.b16 %v3884
  %v4148 = vunpack.c.l.b16 %v3885
  %v4149 = vunpack.c.l.b16 %v3886
  %v4150 = vunpack.c.l.b16 %v3887
  %v4151 = vunpack.c.l.b16 %v3888
  %v4152 = vunpack.c.l.b16 %v3889
  %v4153 = vunpack.c.l.b16 %v3890
  %v4154 = vunpack.c.l.b16 %v3891
  %v4155 = vunpack.c.l.b16 %v3892
  %v4156 = vunpack.c.l.b16 %v3893
  %v4157 = vunpack.c.l.b16 %v3894
  %v4158 = vunpack.c.l.b16 %v3895
  %v4159 = vunpack.c.l.b16 %v3896
  %v4160 = vunpack.c.l.b16 %v3897
  %v4161 = vunpack.c.l.b16 %v3898
  %v4162 = vunpack.c.l.b16 %v3899
  %v4163 = vunpack.c.l.b16 %v3900
  %v4164 = vunpack.c.l.b16 %v3901
  %v4165 = vunpack.c.l.b16 %v3902
  %v4166 = vunpack.c.l.b16 %v3903
  %v4167 = vunpack.c.l.b16 %v3904
  %v4168 = vunpack.c.l.b16 %v3905
  %v4169 = vunpack.c.l.b16 %v3906
  %v4170 = vunpack.c.l.b16 %v3907
  %v4171 = vunpack.c.l.b16 %v3908
  %v4172 = vunpack.c.l.b16 %v3909
  %v4173 = vunpack.c.l.b16 %v3910
  %v4174 = vunpack.c.l.b16 %v3911
  %v4175 = vunpack.c.l.b16 %v3912
  %v4176 = vunpack.c.l.b16 %v3913
  %v4177 = vunpack.c.l.b16 %v3914
  %v4178 = vunpack.c.l.b16 %v3915
  %v4179 = vunpack.c.l.b16 %v3916
  %v4180 = vunpack.c.l.b16 %v3917
  %v4181 = vunpack.c.l.b16 %v3918
  %v4182 = vunpack.c.l.b16 %v3919
  %v4183 = vunpack.c.l.b16 %v3920
  %v4184 = vunpack.c.l.b16 %v3921
  %v4185 = vunpack.c.l.b16 %v3922
  %v4186 = vunpack.c.l.b16 %v3923
  %v4187 = vunpack.c.l.b16 %v3924
  %v4188 = vunpack.c.l.b16 %v3925
  %v4189 = vunpack.c.l.b16 %v3926
  %v4190 = vunpack.c.l.b16 %v3927
  %v4191 = vunpack.c.l.b16 %v3928
  %v4192 = vunpack.c.l.b16 %v3929
  %v4193 = vunpack.c.l.b16 %v3930
  %v4194 = vunpack.c.l.b16 %v3931
  %v4195 = vunpack.c.l.b16 %v3932
  %v4196 = vunpack.c.l.b16 %v3933
  %v4197 = vunpack.c.l.b16 %v3934
  %v4198 = vunpack.c.l.b16 %v3935
  %v4199 = vunpack.c.l.b16 %v3936
  %v4200 = vunpack.c.l.b16 %v3937
  %v4201 = vunpack.c.l.b16 %v3938
  %v4202 = vunpack.c.l.b16 %v3939
  %v4203 = vunpack.c.l.b16 %v3940
  %v4204 = vunpack.c.l.b16 %v3941
  %v4205 = vunpack.c.l.b16 %v3942
  %v4206 = vunpack.c.l.b16 %v3943
  %v4207 = vunpack.c.l.b16 %v3944
  %v4208 = vunpack.c.l.b16 %v3945
  %v4209 = vunpack.c.l.b16 %v3946
  %v4210 = vunpack.c.l.b16 %v3947
  %v4211 = vunpack.c.l.b16 %v3948
  %v4212 = vunpack.c.l.b16 %v3949
  %v4213 = vunpack.c.l.b16 %v3950
  %v4214 = vunpack.c.l.b16 %v3951
  %v4215 = vunpack.c.l.b16 %v3952
  %v4216 = vunpack.c.l.b16 %v3953
  %v4217 = vunpack.c.l.b16 %v3954
  %v4218 = vunpack.c.l.b16 %v3955
  %v4219 = vunpack.c.l.b16 %v3956
  %v4220 = vunpack.c.l.b16 %v3957
  %v4221 = vunpack.c.l.b16 %v3958
  %v4222 = vunpack.c.l.b16 %v3959
  %v4223 = vunpack.c.l.b16 %v3960
  %v4224 = vunpack.c.l.b16 %v3961
  %v4225 = vunpack.c.l.b16 %v3962
  %v4226 = vunpack.c.l.b16 %v3963
  %v4227 = vunpack.c.l.b16 %v3964
  %v4228 = vpack.c.b16 %v4101, %v4100
  %v4229 = vpack.c.b16 %v4103, %v4102
  %v4230 = vpack.c.b16 %v4105, %v4104
  %v4231 = vpack.c.b16 %v4107, %v4106
  %v4232 = vpack.c.b16 %v4109, %v4108
  %v4233 = vpack.c.b16 %v4111, %v4110
  %v4234 = vpack.c.b16 %v4113, %v4112
  %v4235 = vpack.c.b16 %v4115, %v4114
  %v4236 = vpack.c.b16 %v4117, %v4116
  %v4237 = vpack.c.b16 %v4119, %v4118
  %v4238 = vpack.c.b16 %v4121, %v4120
  %v4239 = vpack.c.b16 %v4123, %v4122
  %v4240 = vpack.c.b16 %v4125, %v4124
  %v4241 = vpack.c.b16 %v4127, %v4126
  %v4242 = vpack.c.b16 %v4129, %v4128
  %v4243 = vpack.c.b16 %v4131, %v4130
  %v4244 = vpack.c.b16 %v4133, %v4132
  %v4245 = vpack.c.b16 %v4135, %v4134
  %v4246 = vpack.c.b16 %v4137, %v4136
  %v4247 = vpack.c.b16 %v4139, %v4138
  %v4248 = vpack.c.b16 %v4141, %v4140
  %v4249 = vpack.c.b16 %v4143, %v4142
  %v4250 = vpack.c.b16 %v4145, %v4144
  %v4251 = vpack.c.b16 %v4147, %v4146
  %v4252 = vpack.c.b16 %v4149, %v4148
  %v4253 = vpack.c.b16 %v4151, %v4150
  %v4254 = vpack.c.b16 %v4153, %v4152
  %v4255 = vpack.c.b16 %v4155, %v4154
  %v4256 = vpack.c.b16 %v4157, %v4156
  %v4257 = vpack.c.b16 %v4159, %v4158
  %v4258 = vpack.c.b16 %v4161, %v4160
  %v4259 = vpack.c.b16 %v4163, %v4162
  %v4260 = vpack.c.b16 %v4165, %v4164
  %v4261 = vpack.c.b16 %v4167, %v4166
  %v4262 = vpack.c.b16 %v4169, %v4168
  %v4263 = vpack.c.b16 %v4171, %v4170
  %v4264 = vpack.c.b16 %v4173, %v4172
  %v4265 = vpack.c.b16 %v4175, %v4174
  %v4266 = vpack.c.b16 %v4177, %v4176
  %v4267 = vpack.c.b16 %v4179, %v4178
  %v4268 = vpack.c.b16 %v4181, %v4180
  %v4269 = vpack.c.b16 %v4183, %v4182
  %v4270 = vpack.c.b16 %v4185, %v4184
  %v4271 = vpack.c.b16 %v4187, %v4186
  %v4272 = vpack.c.b16 %v4189, %v4188
  %v4273 = vpack.c.b16 %v4191, %v4190
  %v4274 = vpack.c.b16 %v4193, %v4192
  %v4275 = vpack.c.b16 %v4195, %v4194
  %v4276 = vpack.c.b16 %v4197, %v4196
  %v4277 = vpack.c.b16 %v4199, %v4198
  %v4278 = vpack.c.b16 %v4201, %v4200
  %v4279 = vpack.c.b16 %v4203, %v4202
  %v4280 = vpack.c.b16 %v4205, %v4204
  %v4281 = vpack.c.b16 %v4207, %v4206
  %v4282 = vpack.c.b16 %v4209, %v4208
  %v4283 = vpack.c.b16 %v4211, %v4210
  %v4284 = vpack.c.b16 %v4213, %v4212
  %v4285 = vpack.c.b16 %v4215, %v4214
  %v4286 = vpack.c.b16 %v4217, %v4216
  %v4287 = vpack.c.b16 %v4219, %v4218
  %v4288 = vpack.c.b16 %v4221, %v4220
  %v4289 = vpack.c.b16 %v4223, %v4222
  %v4290 = vpack.c.b16 %v4225, %v4224
  %v4291 = vpack.c.b16 %v4227, %v4226
  %4356 = vmatprep.subr.bf16.mxu0 0
  %4357 = vmatpush1.bf16.msra.mxu0 %v4228
  %4358 = vmatprep.subr.bf16.mxu0 0
  %4359 = vmatpush1.bf16.msra.mxu0 %v4229
  %4360 = vmatprep.subr.bf16.mxu0 0
  %4361 = vmatpush1.bf16.msra.mxu0 %v4230
  %4362 = vmatprep.subr.bf16.mxu0 0
  %4363 = vmatpush1.bf16.msra.mxu0 %v4231
  %4364 = vmatprep.subr.bf16.mxu0 0
  %4365 = vmatpush1.bf16.msra.mxu0 %v4232
  %4366 = vmatprep.subr.bf16.mxu0 0
  %4367 = vmatpush1.bf16.msra.mxu0 %v4233
  %4368 = vmatprep.subr.bf16.mxu0 0
  %4369 = vmatpush1.bf16.msra.mxu0 %v4234
  %4370 = vmatprep.subr.bf16.mxu0 0
  %4371 = vmatpush1.bf16.msra.mxu0 %v4235
  %4372 = vmatprep.subr.bf16.mxu0 0
  %4373 = vmatpush1.bf16.msra.mxu0 %v4236
  %4374 = vmatprep.subr.bf16.mxu0 0
  %4375 = vmatpush1.bf16.msra.mxu0 %v4237
  %4376 = vmatprep.subr.bf16.mxu0 0
  %4377 = vmatpush1.bf16.msra.mxu0 %v4238
  %4378 = vmatprep.subr.bf16.mxu0 0
  %4379 = vmatpush1.bf16.msra.mxu0 %v4239
  %4380 = vmatprep.subr.bf16.mxu0 0
  %4381 = vmatpush1.bf16.msra.mxu0 %v4240
  %4382 = vmatprep.subr.bf16.mxu0 0
  %4383 = vmatpush1.bf16.msra.mxu0 %v4241
  %4384 = vmatprep.subr.bf16.mxu0 0
  %4385 = vmatpush1.bf16.msra.mxu0 %v4242
  %4386 = vmatprep.subr.bf16.mxu0 0
  %4387 = vmatpush1.bf16.msra.mxu0 %v4243
  %4388 = vmatprep.mubr.bf16.mxu0 %v3830
  %4389 = vmatmul.mubr.bf16.gmra.mrb[0].mxu0 %v3829
  %v4390 = vpop.f32.mrb[0].mxu0
  %v4391 = vadd.f32 %v3970, %v4390
  %v4392 = vpop.f32.mrb[0].mxu0
  %v4393 = vpop.f32.mrb[0].mxu0
  %v4394 = vpop.f32.mrb[0].mxu0
  %4395 = vdwg.mxu0
  %4396 = vmatprep.subr.bf16.mxu0 0
  %4397 = vmatpush1.bf16.msra.mxu0 %v4244
  %4398 = vmatprep.subr.bf16.mxu0 0
  %4399 = vmatpush1.bf16.msra.mxu0 %v4245
  %4400 = vmatprep.subr.bf16.mxu0 0
  %4401 = vmatpush1.bf16.msra.mxu0 %v4246
  %4402 = vmatprep.subr.bf16.mxu0 0
  %4403 = vmatpush1.bf16.msra.mxu0 %v4247
  %4404 = vmatprep.subr.bf16.mxu0 0
  %4405 = vmatpush1.bf16.msra.mxu0 %v4248
  %4406 = vmatprep.subr.bf16.mxu0 0
  %4407 = vmatpush1.bf16.msra.mxu0 %v4249
  %4408 = vmatprep.subr.bf16.mxu0 0
  %4409 = vmatpush1.bf16.msra.mxu0 %v4250
  %4410 = vmatprep.subr.bf16.mxu0 0
  %4411 = vmatpush1.bf16.msra.mxu0 %v4251
  %4412 = vmatprep.subr.bf16.mxu0 0
  %4413 = vmatpush1.bf16.msra.mxu0 %v4252
  %4414 = vmatprep.subr.bf16.mxu0 0
  %4415 = vmatpush1.bf16.msra.mxu0 %v4253
  %4416 = vmatprep.subr.bf16.mxu0 0
  %4417 = vmatpush1.bf16.msra.mxu0 %v4254
  %4418 = vmatprep.subr.bf16.mxu0 0
  %4419 = vmatpush1.bf16.msra.mxu0 %v4255
  %4420 = vmatprep.subr.bf16.mxu0 0
  %4421 = vmatpush1.bf16.msra.mxu0 %v4256
  %4422 = vmatprep.subr.bf16.mxu0 0
  %4423 = vmatpush1.bf16.msra.mxu0 %v4257
  %4424 = vmatprep.subr.bf16.mxu0 0
  %4425 = vmatpush1.bf16.msra.mxu0 %v4258
  %4426 = vmatprep.subr.bf16.mxu0 0
  %4427 = vmatpush1.bf16.msra.mxu0 %v4259
  %4428 = vmatprep.mubr.bf16.mxu0 %v3832
  %4429 = vmatmul.mubr.bf16.gmra.mrb[0].mxu0 %v3831
  %v4430 = vpop.f32.mrb[0].mxu0
  %v4431 = vadd.f32 %v4391, %v4430
  %v4432 = vpop.f32.mrb[0].mxu0
  %v4433 = vpop.f32.mrb[0].mxu0
  %v4434 = vpop.f32.mrb[0].mxu0
  %4435 = vdwg.mxu0
  %4436 = vmatprep.subr.bf16.mxu0 0
  %4437 = vmatpush1.bf16.msra.mxu0 %v4260
  %4438 = vmatprep.subr.bf16.mxu0 0
  %4439 = vmatpush1.bf16.msra.mxu0 %v4261
  %4440 = vmatprep.subr.bf16.mxu0 0
  %4441 = vmatpush1.bf16.msra.mxu0 %v4262
  %4442 = vmatprep.subr.bf16.mxu0 0
  %4443 = vmatpush1.bf16.msra.mxu0 %v4263
  %4444 = vmatprep.subr.bf16.mxu0 0
  %4445 = vmatpush1.bf16.msra.mxu0 %v4264
  %4446 = vmatprep.subr.bf16.mxu0 0
  %4447 = vmatpush1.bf16.msra.mxu0 %v4265
  %4448 = vmatprep.subr.bf16.mxu0 0
  %4449 = vmatpush1.bf16.msra.mxu0 %v4266
  %4450 = vmatprep.subr.bf16.mxu0 0
  %4451 = vmatpush1.bf16.msra.mxu0 %v4267
  %4452 = vmatprep.subr.bf16.mxu0 0
  %4453 = vmatpush1.bf16.msra.mxu0 %v4268
  %4454 = vmatprep.subr.bf16.mxu0 0
  %4455 = vmatpush1.bf16.msra.mxu0 %v4269
  %4456 = vmatprep.subr.bf16.mxu0 0
  %4457 = vmatpush1.bf16.msra.mxu0 %v4270
  %4458 = vmatprep.subr.bf16.mxu0 0
  %4459 = vmatpush1.bf16.msra.mxu0 %v4271
  %4460 = vmatprep.subr.bf16.mxu0 0
  %4461 = vmatpush1.bf16.msra.mxu0 %v4272
  %4462 = vmatprep.subr.bf16.mxu0 0
  %4463 = vmatpush1.bf16.msra.mxu0 %v4273
  %4464 = vmatprep.subr.bf16.mxu0 0
  %4465 = vmatpush1.bf16.msra.mxu0 %v4274
  %4466 = vmatprep.subr.bf16.mxu0 0
  %4467 = vmatpush1.bf16.msra.mxu0 %v4275
  %4468 = vmatprep.mubr.bf16.mxu0 %v3834
  %4469 = vmatmul.mubr.bf16.gmra.mrb[0].mxu0 %v3833
  %v4470 = vpop.f32.mrb[0].mxu0
  %v4471 = vadd.f32 %v4431, %v4470
  %v4472 = vpop.f32.mrb[0].mxu0
  %v4473 = vpop.f32.mrb[0].mxu0
  %v4474 = vpop.f32.mrb[0].mxu0
  %4475 = vdwg.mxu0
  %4476 = vmatprep.subr.bf16.mxu0 0
  %4477 = vmatpush1.bf16.msra.mxu0 %v4276
  %4478 = vmatprep.subr.bf16.mxu0 0
  %4479 = vmatpush1.bf16.msra.mxu0 %v4277
  %4480 = vmatprep.subr.bf16.mxu0 0
  %4481 = vmatpush1.bf16.msra.mxu0 %v4278
  %4482 = vmatprep.subr.bf16.mxu0 0
  %4483 = vmatpush1.bf16.msra.mxu0 %v4279
  %4484 = vmatprep.subr.bf16.mxu0 0
  %4485 = vmatpush1.bf16.msra.mxu0 %v4280
  %4486 = vmatprep.subr.bf16.mxu0 0
  %4487 = vmatpush1.bf16.msra.mxu0 %v4281
  %4488 = vmatprep.subr.bf16.mxu0 0
  %4489 = vmatpush1.bf16.msra.mxu0 %v4282
  %4490 = vmatprep.subr.bf16.mxu0 0
  %4491 = vmatpush1.bf16.msra.mxu0 %v4283
  %4492 = vmatprep.subr.bf16.mxu0 0
  %4493 = vmatpush1.bf16.msra.mxu0 %v4284
  %4494 = vmatprep.subr.bf16.mxu0 0
  %4495 = vmatpush1.bf16.msra.mxu0 %v4285
  %4496 = vmatprep.subr.bf16.mxu0 0
  %4497 = vmatpush1.bf16.msra.mxu0 %v4286
  %4498 = vmatprep.subr.bf16.mxu0 0
  %4499 = vmatpush1.bf16.msra.mxu0 %v4287
  %4500 = vmatprep.subr.bf16.mxu0 0
  %4501 = vmatpush1.bf16.msra.mxu0 %v4288
  %4502 = vmatprep.subr.bf16.mxu0 0
  %4503 = vmatpush1.bf16.msra.mxu0 %v4289
  %4504 = vmatprep.subr.bf16.mxu0 0
  %4505 = vmatpush1.bf16.msra.mxu0 %v4290
  %4506 = vmatprep.subr.bf16.mxu0 0
  %4507 = vmatpush1.bf16.msra.mxu0 %v4291
  %4508 = vmatprep.mubr.bf16.mxu0 %v3836
  %4509 = vmatmul.mubr.bf16.gmra.mrb[0].mxu0 %v3835
  %v4510 = vpop.f32.mrb[0].mxu0
  %v4511 = vadd.f32 %v4471, %v4510
  %v4512 = vpop.f32.mrb[0].mxu0
  %v4513 = vpop.f32.mrb[0].mxu0
  %v4514 = vpop.f32.mrb[0].mxu0
  %4515 = vdwg.mxu0
  %v4516 = vmax.f32 %v4511, 0.0
  %v4517 = vpack.c.bf16 %v4516, %v4516
  %v4518 = vld [vmem:[%s5] sm:$0xf]
  %v4519 = vld [vmem:[%s5 + $0x4] sm:$0xf]
  %v4520 = vld [vmem:[%s5 + $0x8] sm:$0xf]
  %v4521 = vld [vmem:[%s5 + $0xc] sm:$0xf]
  %v4522 = vld [vmem:[%s5 + $0x10] sm:$0xf]
  %v4523 = vld [vmem:[%s5 + $0x14] sm:$0xf]
  %v4524 = vld [vmem:[%s5 + $0x18] sm:$0xf]
  %v4525 = vld [vmem:[%s5 + $0x1c] sm:$0xf]
  %v4526 = vld [vmem:[%s5 + $0x20] sm:$0xf]
  %v4527 = vld [vmem:[%s5 + $0x24] sm:$0xf]
  %v4528 = vld [vmem:[%s5 + $0x28] sm:$0xf]
  %v4529 = vld [vmem:[%s5 + $0x2c] sm:$0xf]
  %v4530 = vld [vmem:[%s5 + $0x30] sm:$0xf]
  %v4531 = vld [vmem:[%s5 + $0x34] sm:$0xf]
  %v4532 = vld [vmem:[%s5 + $0x38] sm:$0xf]
  %v4533 = vld [vmem:[%s5 + $0x3c] sm:$0xf]
  %v4534 = vld [vmem:[%s6] sm:$0x1]
  %v4536 = vlaneseq
  %v4537 = vshrl.u32 %v4536, 7
  %v4538 = vsub.s32 0, %v4537
  %v4539 = vrot.slane %v4534, %v4538
  %v4557 = vunpack.c.l.b16 %v4518
  %v4558 = vunpack.c.l.b16 %v4519
  %v4559 = vunpack.c.l.b16 %v4520
  %v4560 = vunpack.c.l.b16 %v4521
  %v4561 = vunpack.c.l.b16 %v4522
  %v4562 = vunpack.c.l.b16 %v4523
  %v4563 = vunpack.c.l.b16 %v4524
  %v4564 = vunpack.c.l.b16 %v4525
  %v4565 = vunpack.c.l.b16 %v4526
  %v4566 = vunpack.c.l.b16 %v4527
  %v4567 = vunpack.c.l.b16 %v4528
  %v4568 = vunpack.c.l.b16 %v4529
  %v4569 = vunpack.c.l.b16 %v4530
  %v4570 = vunpack.c.l.b16 %v4531
  %v4571 = vunpack.c.l.b16 %v4532
  %v4572 = vunpack.c.l.b16 %v4533
  %v4573 = vpack.c.b16 %v4558, %v4557
  %v4574 = vpack.c.b16 %v4560, %v4559
  %v4575 = vpack.c.b16 %v4562, %v4561
  %v4576 = vpack.c.b16 %v4564, %v4563
  %v4577 = vpack.c.b16 %v4566, %v4565
  %v4578 = vpack.c.b16 %v4568, %v4567
  %v4579 = vpack.c.b16 %v4570, %v4569
  %v4580 = vpack.c.b16 %v4572, %v4571
  %4589 = vmatprep.subr.bf16.mxu0 0
  %4590 = vmatpush1.bf16.msra.mxu0 %v4573
  %4591 = vmatprep.subr.bf16.mxu0 0
  %4592 = vmatpush1.bf16.msra.mxu0 %v4574
  %4593 = vmatprep.subr.bf16.mxu0 0
  %4594 = vmatpush1.bf16.msra.mxu0 %v4575
  %4595 = vmatprep.subr.bf16.mxu0 0
  %4596 = vmatpush1.bf16.msra.mxu0 %v4576
  %4597 = vmatprep.subr.bf16.mxu0 0
  %4598 = vmatpush1.bf16.msra.mxu0 %v4577
  %4599 = vmatprep.subr.bf16.mxu0 0
  %4600 = vmatpush1.bf16.msra.mxu0 %v4578
  %4601 = vmatprep.subr.bf16.mxu0 0
  %4602 = vmatpush1.bf16.msra.mxu0 %v4579
  %4603 = vmatprep.subr.bf16.mxu0 0
  %4604 = vmatpush1.bf16.msra.mxu0 %v4580
  %4605 = vmatprep.subr.bf16.mxu0 0
  %4606 = vmatpush1.bf16.msra.mxu0 0
  %4607 = vmatprep.subr.bf16.mxu0 0
  %4608 = vmatpush1.bf16.msra.mxu0 0
  %4609 = vmatprep.subr.bf16.mxu0 0
  %4610 = vmatpush1.bf16.msra.mxu0 0
  %4611 = vmatprep.subr.bf16.mxu0 0
  %4612 = vmatpush1.bf16.msra.mxu0 0
  %4613 = vmatprep.subr.bf16.mxu0 0
  %4614 = vmatpush1.bf16.msra.mxu0 0
  %4615 = vmatprep.subr.bf16.mxu0 0
  %4616 = vmatpush1.bf16.msra.mxu0 0
  %4617 = vmatprep.subr.bf16.mxu0 0
  %4618 = vmatpush1.bf16.msra.mxu0 0
  %4619 = vmatprep.subr.bf16.mxu0 0
  %4620 = vmatpush1.bf16.msra.mxu0 0
  %4621 = vmatprep.mubr.bf16.mxu0 0
  %4622 = vmatmul.mubr.bf16.gmra.mrb[0].mxu0 %v4517
  %v4623 = vpop.f32.mrb[0].mxu0
  %v4624 = vadd.f32 %v4539, %v4623
  %v4625 = vpop.f32.mrb[0].mxu0
  %v4626 = vpop.f32.mrb[0].mxu0
  %v4627 = vpop.f32.mrb[0].mxu0
  %4628 = vdwg.mxu0
  %v4629 = vand.u32 2147483647, %v4624
  %v4630 = vsub.f32 0.0, %v4629
  %v4631 = vmul.f32 %v4630, 1.442695
  %v4632 = vpow.pop %v4631
  %v4633 = vadd.f32 %v4632, 1.0
  %v4634 = vrcp.pop %v4633
  %vm4635 = vcmp.ge.f32.partialorder %v4624, 0.0
  %v4636 = vsub.f32 1.0, %v4634
  %v4637 = vsel %vm4635, %v4634, %v4636
  %4638 = vst [vmem:[%s7] sm:$0xff] %v4637
  // Predicated region
  $region30: #{my_resnext50_forward.1} parent=0 // pred_check
    _
  $region31: #{my_resnext50_forward.1} parent=0 // pred_check_branch
    %4640 = sbr.rel (0) target = $region33
  $region32: #{my_resnext50_forward.1} parent=0 // pred_region
    _
  $region33: #{my_resnext50_forward.1} parent=0 // pred_fallthru
    _
  // Predicated region
  $region34: #{my_resnext50_forward.1} parent=0 // pred_check
    _
  $region35: #{my_resnext50_forward.1} parent=0 // pred_check_branch
    %4642 = sbr.rel (0) target = $region37
  $region36: #{my_resnext50_forward.1} parent=0 // pred_region
    _
  $region37: #{my_resnext50_forward.1} parent=0 // pred_fallthru
    _

</llo_original>
